<compile_context>
chip_gen: v6e
topology: v6e:2x2x1
jax: 0.10.0
libtpu: 0.0.40
codegen_flags: <defaults>
</compile_context>

<pallas_src>
import functools
import math

import jax
import jax.numpy as jnp
from jax.experimental import pallas as pl
from jax.experimental.pallas import tpu as pltpu

EPS = 1e-5        # PyTorch BatchNorm2d default.
ROW_BLOCK = 512   # rows per tile for the elementwise / stats kernels.


# ----------------------------------------------------------------------------
# Pallas kernels
# ----------------------------------------------------------------------------
def _conv_kernel(x_ref, w_ref, o_ref, *, oh, ow, hq, stride):
    """Direct conv for one image: accumulate KH*KW tap matmuls on the MXU.

    x_ref: stride==1 -> (1, HP, WP, C) padded image.
           stride==2 -> (1, 4*HQ, WQ, C) parity-plane relayout of the padded
                        image: row (pi*2+pj)*HQ + h holds xp[2*h+pi, 2*w+pj].
    w_ref: (KH, KW, C, O) bf16.   o_ref: (1, oh*ow, O) f32.
    """
    KH, KW, C, O = w_ref.shape
    acc = jnp.zeros((oh * ow, O), jnp.float32)
    for kh in range(KH):
        for kw in range(KW):
            if stride == 1:
                h0, w0 = kh, kw
            else:  # stride == 2, via parity planes -> unit-stride slices only
                h0 = ((kh % 2) * 2 + (kw % 2)) * hq + kh // 2
                w0 = kw // 2
            patch = x_ref[0, pl.ds(h0, oh), pl.ds(w0, ow), :]        # (oh, ow, C)
            lhs = patch.reshape(oh * ow, C).astype(jnp.bfloat16)     # bf16 MXU input
            acc = acc + jnp.dot(lhs, w_ref[kh, kw, :, :],
                                preferred_element_type=jnp.float32)  # f32 accum
    o_ref[0, :, :] = acc


def _stats_kernel(x_ref, sum_ref, ssq_ref, *, m_total):
    """Single-pass per-channel sum & sum-of-squares, accumulated over the grid."""
    i = pl.program_id(0)

    @pl.when(i == 0)
    def _():
        sum_ref[...] = jnp.zeros_like(sum_ref)
        ssq_ref[...] = jnp.zeros_like(ssq_ref)

    bm = x_ref.shape[0]
    rows = jax.lax.broadcasted_iota(jnp.int32, x_ref.shape, 0) + i * bm
    x = jnp.where(rows < m_total, x_ref[...], 0.0)   # mask OOB rows of last block
    sum_ref[...] += jnp.sum(x, axis=0, keepdims=True)
    ssq_ref[...] += jnp.sum(x * x, axis=0, keepdims=True)


def _bn_act_kernel(x_ref, scale_ref, shift_ref, o_ref, *, relu):
    y = x_ref[...] * scale_ref[...] + shift_ref[...]
    if relu:
        y = jnp.maximum(y, 0.0)
    o_ref[...] = y


def _bn_add_act_kernel(x_ref, scale_ref, shift_ref, res_ref, o_ref, *, relu):
    y = x_ref[...] * scale_ref[...] + shift_ref[...] + res_ref[...]
    if relu:
        y = jnp.maximum(y, 0.0)
    o_ref[...] = y


# ----------------------------------------------------------------------------
# Convolution wrapper (direct conv, no im2col)
# ----------------------------------------------------------------------------
def conv2d(x_nhwc, w_khkwio, *, stride, padding):
    """Returns (y2d of shape (N*OH*OW, O) f32, (N, OH, OW, O))."""
    N, H, W, C = x_nhwc.shape
    KH, KW, Cw, O = w_khkwio.shape
    assert Cw == C

    # 1x1 convs with stride: subsample once, then it is a pure channel matmul.
    if KH == 1 and KW == 1 and stride > 1:
        x_nhwc = x_nhwc[:, ::stride, ::stride, :]
        N, H, W, C = x_nhwc.shape
        stride = 1

    OH = (H + 2 * padding - KH) // stride + 1
    OW = (W + 2 * padding - KW) // stride + 1

    xp = x_nhwc
    if padding > 0:
        xp = jnp.pad(xp, ((0, 0), (padding, padding), (padding, padding), (0, 0)))
    HP, WP = xp.shape[1], xp.shape[2]

    if stride == 1:
        x_in, hq = xp, HP
        h_blk, w_blk = HP, WP
    elif stride == 2:
        # Parity-plane relayout (one 1x HBM copy) so taps become unit-stride slices.
        HQ, WQ = (HP + 1) // 2, (WP + 1) // 2
        assert HQ >= OH + (KH - 1) // 2 and WQ >= OW + (KW - 1) // 2
        xp = jnp.pad(xp, ((0, 0), (0, 2 * HQ - HP), (0, 2 * WQ - WP), (0, 0)))
        x_in = (xp.reshape(N, HQ, 2, WQ, 2, C)
                  .transpose(0, 2, 4, 1, 3, 5)
                  .reshape(N, 4 * HQ, WQ, C))
        hq = HQ
        h_blk, w_blk = 4 * HQ, WQ
    else:
        raise NotImplementedError("SimpleBlock only needs stride 1 or 2")

    kernel = functools.partial(_conv_kernel, oh=OH, ow=OW, hq=hq, stride=stride)
    out = pl.pallas_call(
        kernel,
        out_shape=jax.ShapeDtypeStruct((N, OH * OW, O), jnp.float32),
        grid=(N,),
        in_specs=[pl.BlockSpec((1, h_blk, w_blk, C), lambda n: (n, 0, 0, 0)),
                  pl.BlockSpec((KH, KW, C, O), lambda n: (0, 0, 0, 0))],
        out_specs=pl.BlockSpec((1, OH * OW, O), lambda n: (n, 0, 0)),
        compiler_params=pltpu.CompilerParams(dimension_semantics=("parallel",)),
    )(x_in, w_khkwio)
    return out.reshape(N * OH * OW, O), (N, OH, OW, O)


# ----------------------------------------------------------------------------
# BatchNorm (training-mode batch stats) + optional residual + ReLU
# ----------------------------------------------------------------------------
def _bn_stats(y2d, row_block):
    M, C = y2d.shape
    bm = min(M, row_block)
    s, ss = pl.pallas_call(
        functools.partial(_stats_kernel, m_total=M),
        out_shape=(jax.ShapeDtypeStruct((1, C), jnp.float32),
                   jax.ShapeDtypeStruct((1, C), jnp.float32)),
        grid=(pl.cdiv(M, bm),),
        in_specs=[pl.BlockSpec((bm, C), lambda i: (i, 0))],
        out_specs=(pl.BlockSpec((1, C), lambda i: (0, 0)),
                   pl.BlockSpec((1, C), lambda i: (0, 0))),
        compiler_params=pltpu.CompilerParams(dimension_semantics=("arbitrary",)),
    )(y2d)
    return s[0], ss[0]


def batchnorm_act(y2d, gamma, beta, *, relu, residual=None):
    M, C = y2d.shape

    # Fold rows so the lane (last) dim is a multiple of 128 -> full vst stores.
    f = 1
    if C % 128 != 0 and 128 % C == 0 and M % (128 // C) == 0:
        f = 128 // C
    Mf, Cf = M // f, C * f
    yf = y2d.reshape(Mf, Cf)

    # Single fused pass for per-channel sum / sum-of-squares.
    s, ss = _bn_stats(yf, ROW_BLOCK)
    if f > 1:
        s = s.reshape(f, C).sum(axis=0)
        ss = ss.reshape(f, C).sum(axis=0)
    mean = s / M
    var = jnp.maximum(ss / M - mean * mean, 0.0)   # biased var, PyTorch training mode
    inv = gamma / jnp.sqrt(var + EPS)
    scale = inv
    shift = beta - mean * inv
    if f > 1:
        scale = jnp.tile(scale, f)
        shift = jnp.tile(shift, f)
    scale = scale.reshape(1, Cf).astype(jnp.float32)
    shift = shift.reshape(1, Cf).astype(jnp.float32)

    bm = min(Mf, ROW_BLOCK)
    grid = (pl.cdiv(Mf, bm),)
    cparams = pltpu.CompilerParams(dimension_semantics=("parallel",))
    row_spec = pl.BlockSpec((bm, Cf), lambda i: (i, 0))
    vec_spec = pl.BlockSpec((1, Cf), lambda i: (0, 0))

    if residual is None:
        out = pl.pallas_call(
            functools.partial(_bn_act_kernel, relu=relu),
            out_shape=jax.ShapeDtypeStruct((Mf, Cf), jnp.float32),
            grid=grid,
            in_specs=[row_spec, vec_spec, vec_spec],
            out_specs=row_spec,
            compiler_params=cparams,
        )(yf, scale, shift)
    else:
        out = pl.pallas_call(
            functools.partial(_bn_add_act_kernel, relu=relu),
            out_shape=jax.ShapeDtypeStruct((Mf, Cf), jnp.float32),
            grid=grid,
            in_specs=[row_spec, vec_spec, vec_spec, row_spec],
            out_specs=row_spec,
            compiler_params=cparams,
        )(yf, scale, shift, residual.reshape(Mf, Cf))
    return out.reshape(M, C)


# ----------------------------------------------------------------------------
# SimpleBlock forward (NCHW in / NCHW out, training-mode BN)
# ----------------------------------------------------------------------------
@functools.partial(jax.jit, static_argnames=("half_res",))
def simple_block_forward(params, x_nchw, *, half_res):
    x = jnp.transpose(x_nchw, (0, 2, 3, 1)).astype(jnp.float32)   # NCHW -> NHWC
    stride = 2 if half_res else 1

    y1, (n, oh, ow, oc) = conv2d(x, params["c1_w"], stride=stride, padding=1)
    y1 = batchnorm_act(y1, params["bn1_g"], params["bn1_b"], relu=True)
    y1 = y1.reshape(n, oh, ow, oc)

    y2, _ = conv2d(y1, params["c2_w"], stride=1, padding=1)

    if params["sc_w"] is None:
        # Identity shortcut: only shape-compatible when stride == 1 and
        # indim == outdim (same restriction as the PyTorch module).
        assert (not half_res) and x.shape[-1] == oc
        short = x.reshape(n * oh * ow, oc)
    else:
        ys, _ = conv2d(x, params["sc_w"], stride=stride, padding=0)
        short = batchnorm_act(ys, params["sc_bn_g"], params["sc_bn_b"], relu=False)

    out = batchnorm_act(y2, params["bn2_g"], params["bn2_b"], relu=True,
                        residual=short)
    out = out.reshape(n, oh, ow, oc)
    return jnp.transpose(out, (0, 3, 1, 2))                        # back to NCHW


# ----------------------------------------------------------------------------
# Parameters: PyTorch-style init (init_layer) + one-time Pallas weight prep
# ----------------------------------------------------------------------------
def _init_conv(key, out_c, in_c, k):
    std = math.sqrt(2.0 / float(k * k * out_c))
    return std * jax.random.normal(key, (out_c, in_c, k, k), jnp.float32)


def build_block_params(key, indim, outdim):
    """Raw PyTorch-layout (OIHW f32) parameters, matching init_layer()."""
    k1, k2, k3 = jax.random.split(key, 3)
    p = {
        "c1_w": _init_conv(k1, outdim, indim, 3),
        "bn1_g": jnp.ones((outdim,), jnp.float32),
        "bn1_b": jnp.zeros((outdim,), jnp.float32),
        "c2_w": _init_conv(k2, outdim, outdim, 3),
        "bn2_g": jnp.ones((outdim,), jnp.float32),
        "bn2_b": jnp.zeros((outdim,), jnp.float32),
        "sc_w": None,
    }
    if indim != outdim:
        p["sc_w"] = _init_conv(k3, outdim, indim, 1)
        p["sc_bn_g"] = jnp.ones((outdim,), jnp.float32)
        p["sc_bn_b"] = jnp.zeros((outdim,), jnp.float32)
    return p


def _prep_w(w_oihw):
    # OIHW -> (KH, KW, I, O) bf16, baked once outside the forward pass.
    return jnp.transpose(w_oihw, (2, 3, 1, 0)).astype(jnp.bfloat16)


def prepare_block_params(raw):
    p = dict(raw)
    p["c1_w"] = _prep_w(raw["c1_w"])
    p["c2_w"] = _prep_w(raw["c2_w"])
    if raw["sc_w"] is not None:
        p["sc_w"] = _prep_w(raw["sc_w"])
    return p


# ----------------------------------------------------------------------------
# Pure-JAX reference (training-mode BN) for validation
# ----------------------------------------------------------------------------
def _ref_conv(x, w, stride, pad):
    return jax.lax.conv_general_dilated(
        x, w, window_strides=(stride, stride),
        padding=((pad, pad), (pad, pad)),
        dimension_numbers=("NCHW", "OIHW", "NCHW"))


def _ref_bn(x, g, b):
    mean = jnp.mean(x, axis=(0, 2, 3), keepdims=True)
    var = jnp.mean((x - mean) ** 2, axis=(0, 2, 3), keepdims=True)
    xhat = (x - mean) / jnp.sqrt(var + EPS)
    return xhat * g.reshape(1, -1, 1, 1) + b.reshape(1, -1, 1, 1)


def ref_simple_block(raw, x, *, half_res):
    s = 2 if half_res else 1
    out = jax.nn.relu(_ref_bn(_ref_conv(x, raw["c1_w"], s, 1),
                              raw["bn1_g"], raw["bn1_b"]))
    out = _ref_bn(_ref_conv(out, raw["c2_w"], 1, 1), raw["bn2_g"], raw["bn2_b"])
    if raw["sc_w"] is None:
        short = x
    else:
        short = _ref_bn(_ref_conv(x, raw["sc_w"], s, 0),
                        raw["sc_bn_g"], raw["sc_bn_b"])
    return jax.nn.relu(out + short)


# ----------------------------------------------------------------------------
if __name__ == "__main__":
    key = jax.random.PRNGKey(0)
    kp1, kx1, kp2, kx2 = jax.random.split(key, 4)

    # Case 1: indim != outdim, half_res=True  -> stride-2 convs + 1x1-conv/BN shortcut.
    raw1 = build_block_params(kp1, 64, 128)
    x1 = jax.random.normal(kx1, (2, 64, 16, 16), jnp.float32)
    out1 = jax.block_until_ready(
        simple_block_forward(prepare_block_params(raw1), x1, half_res=True))
    ref1 = ref_simple_block(raw1, x1, half_res=True)
    assert out1.shape == (2, 128, 8, 8), out1.shape
    assert bool(jnp.all(jnp.isfinite(out1)))
    assert float(jnp.max(jnp.abs(out1 - ref1))) < 1e-1  # bf16-MXU tolerance

    # Case 2: indim == outdim, half_res=False -> stride-1 convs + identity shortcut.
    raw2 = build_block_params(kp2, 64, 64)
    x2 = jax.random.normal(kx2, (2, 64, 32, 32), jnp.float32)
    out2 = jax.block_until_ready(
        simple_block_forward(prepare_block_params(raw2), x2, half_res=False))
    ref2 = ref_simple_block(raw2, x2, half_res=False)
    assert out2.shape == (2, 64, 32, 32), out2.shape
    assert bool(jnp.all(jnp.isfinite(out2)))
    assert float(jnp.max(jnp.abs(out2 - ref2))) < 1e-1

    print("KERNEL_OK")
</pallas_src>

<mosaic_0001>
module attributes {stable_mosaic.version = 11 : i64} {
  func.func @_conv_kernel(%arg0: i32, %arg1: memref<1x36x9x64xf32, #tpu.memory_space<vmem>>, %arg2: memref<3x3x64x128xbf16, #tpu.memory_space<vmem>>, %arg3: memref<1x64x128xf32, #tpu.memory_space<vmem>>) attributes {dimension_semantics = [#tpu.dimension_semantics<parallel>], iteration_bounds = array<i64: 2>, scalar_prefetch = 0 : i64, scratch_operands = 0 : i64, tpu.core_type = #tpu.core_type<tc>, window_params = [{transform_indices = @transform_0, window_bounds = array<i64: 1, 36, 9, 64>}, {pipeline_mode = #tpu.pipeline_mode<synchronous>, transform_indices = @transform_1, window_bounds = array<i64: 3, 3, 64, 128>}, {transform_indices = @transform_2, window_bounds = array<i64: 1, 64, 128>}]} {
    %cst = arith.constant 0.000000e+00 : f32
    %0 = vector.broadcast %cst : f32 to vector<64x128xf32>
    %c0 = arith.constant 0 : index
    %c0_0 = arith.constant 0 : index
    %c0_1 = arith.constant 0 : index
    %c0_2 = arith.constant 0 : index
    %1 = vector.load %arg1[%c0, %c0_0, %c0_1, %c0_2] : memref<1x36x9x64xf32, #tpu.memory_space<vmem>>, vector<1x8x8x64xf32>
    %2 = vector.shape_cast %1 : vector<1x8x8x64xf32> to vector<8x8x64xf32>
    %3 = vector.shape_cast %2 : vector<8x8x64xf32> to vector<64x64xf32>
    %4 = arith.truncf %3 : vector<64x64xf32> to vector<64x64xbf16>
    %c0_3 = arith.constant 0 : index
    %c0_4 = arith.constant 0 : index
    %c0_5 = arith.constant 0 : index
    %c0_6 = arith.constant 0 : index
    %5 = vector.load %arg2[%c0_3, %c0_4, %c0_5, %c0_6] : memref<3x3x64x128xbf16, #tpu.memory_space<vmem>>, vector<1x1x64x128xbf16>
    %6 = vector.shape_cast %5 : vector<1x1x64x128xbf16> to vector<64x128xbf16>
    %cst_7 = arith.constant dense<0.000000e+00> : vector<64x128xf32>
    %7 = tpu.matmul %4, %6, %cst_7 {dimension_numbers = #tpu.dot_dimension_numbers<[1], [0], [0], [1], [0, 0, 1, 1], [], []>} : vector<64x64xbf16>, vector<64x128xbf16>, vector<64x128xf32> -> vector<64x128xf32>
    %8 = arith.addf %0, %7 : vector<64x128xf32>
    %c0_8 = arith.constant 0 : index
    %c9 = arith.constant 9 : index
    %c0_9 = arith.constant 0 : index
    %c0_10 = arith.constant 0 : index
    %9 = vector.load %arg1[%c0_8, %c9, %c0_9, %c0_10] : memref<1x36x9x64xf32, #tpu.memory_space<vmem>>, vector<1x8x8x64xf32>
    %10 = vector.shape_cast %9 : vector<1x8x8x64xf32> to vector<8x8x64xf32>
    %11 = vector.shape_cast %10 : vector<8x8x64xf32> to vector<64x64xf32>
    %12 = arith.truncf %11 : vector<64x64xf32> to vector<64x64xbf16>
    %c0_11 = arith.constant 0 : index
    %c1 = arith.constant 1 : index
    %c0_12 = arith.constant 0 : index
    %c0_13 = arith.constant 0 : index
    %13 = vector.load %arg2[%c0_11, %c1, %c0_12, %c0_13] : memref<3x3x64x128xbf16, #tpu.memory_space<vmem>>, vector<1x1x64x128xbf16>
    %14 = vector.shape_cast %13 : vector<1x1x64x128xbf16> to vector<64x128xbf16>
    %cst_14 = arith.constant dense<0.000000e+00> : vector<64x128xf32>
    %15 = tpu.matmul %12, %14, %cst_14 {dimension_numbers = #tpu.dot_dimension_numbers<[1], [0], [0], [1], [0, 0, 1, 1], [], []>} : vector<64x64xbf16>, vector<64x128xbf16>, vector<64x128xf32> -> vector<64x128xf32>
    %16 = arith.addf %8, %15 : vector<64x128xf32>
    %c0_15 = arith.constant 0 : index
    %c0_16 = arith.constant 0 : index
    %c1_17 = arith.constant 1 : index
    %c0_18 = arith.constant 0 : index
    %17 = vector.load %arg1[%c0_15, %c0_16, %c1_17, %c0_18] : memref<1x36x9x64xf32, #tpu.memory_space<vmem>>, vector<1x8x8x64xf32>
    %18 = vector.shape_cast %17 : vector<1x8x8x64xf32> to vector<8x8x64xf32>
    %19 = vector.shape_cast %18 : vector<8x8x64xf32> to vector<64x64xf32>
    %20 = arith.truncf %19 : vector<64x64xf32> to vector<64x64xbf16>
    %c0_19 = arith.constant 0 : index
    %c2 = arith.constant 2 : index
    %c0_20 = arith.constant 0 : index
    %c0_21 = arith.constant 0 : index
    %21 = vector.load %arg2[%c0_19, %c2, %c0_20, %c0_21] : memref<3x3x64x128xbf16, #tpu.memory_space<vmem>>, vector<1x1x64x128xbf16>
    %22 = vector.shape_cast %21 : vector<1x1x64x128xbf16> to vector<64x128xbf16>
    %cst_22 = arith.constant dense<0.000000e+00> : vector<64x128xf32>
    %23 = tpu.matmul %20, %22, %cst_22 {dimension_numbers = #tpu.dot_dimension_numbers<[1], [0], [0], [1], [0, 0, 1, 1], [], []>} : vector<64x64xbf16>, vector<64x128xbf16>, vector<64x128xf32> -> vector<64x128xf32>
    %24 = arith.addf %16, %23 : vector<64x128xf32>
    %c0_23 = arith.constant 0 : index
    %c18 = arith.constant 18 : index
    %c0_24 = arith.constant 0 : index
    %c0_25 = arith.constant 0 : index
    %25 = vector.load %arg1[%c0_23, %c18, %c0_24, %c0_25] : memref<1x36x9x64xf32, #tpu.memory_space<vmem>>, vector<1x8x8x64xf32>
    %26 = vector.shape_cast %25 : vector<1x8x8x64xf32> to vector<8x8x64xf32>
    %27 = vector.shape_cast %26 : vector<8x8x64xf32> to vector<64x64xf32>
    %28 = arith.truncf %27 : vector<64x64xf32> to vector<64x64xbf16>
    %c1_26 = arith.constant 1 : index
    %c0_27 = arith.constant 0 : index
    %c0_28 = arith.constant 0 : index
    %c0_29 = arith.constant 0 : index
    %29 = vector.load %arg2[%c1_26, %c0_27, %c0_28, %c0_29] : memref<3x3x64x128xbf16, #tpu.memory_space<vmem>>, vector<1x1x64x128xbf16>
    %30 = vector.shape_cast %29 : vector<1x1x64x128xbf16> to vector<64x128xbf16>
    %cst_30 = arith.constant dense<0.000000e+00> : vector<64x128xf32>
    %31 = tpu.matmul %28, %30, %cst_30 {dimension_numbers = #tpu.dot_dimension_numbers<[1], [0], [0], [1], [0, 0, 1, 1], [], []>} : vector<64x64xbf16>, vector<64x128xbf16>, vector<64x128xf32> -> vector<64x128xf32>
    %32 = arith.addf %24, %31 : vector<64x128xf32>
    %c0_31 = arith.constant 0 : index
    %c27 = arith.constant 27 : index
    %c0_32 = arith.constant 0 : index
    %c0_33 = arith.constant 0 : index
    %33 = vector.load %arg1[%c0_31, %c27, %c0_32, %c0_33] : memref<1x36x9x64xf32, #tpu.memory_space<vmem>>, vector<1x8x8x64xf32>
    %34 = vector.shape_cast %33 : vector<1x8x8x64xf32> to vector<8x8x64xf32>
    %35 = vector.shape_cast %34 : vector<8x8x64xf32> to vector<64x64xf32>
    %36 = arith.truncf %35 : vector<64x64xf32> to vector<64x64xbf16>
    %c1_34 = arith.constant 1 : index
    %c1_35 = arith.constant 1 : index
    %c0_36 = arith.constant 0 : index
    %c0_37 = arith.constant 0 : index
    %37 = vector.load %arg2[%c1_34, %c1_35, %c0_36, %c0_37] : memref<3x3x64x128xbf16, #tpu.memory_space<vmem>>, vector<1x1x64x128xbf16>
    %38 = vector.shape_cast %37 : vector<1x1x64x128xbf16> to vector<64x128xbf16>
    %cst_38 = arith.constant dense<0.000000e+00> : vector<64x128xf32>
    %39 = tpu.matmul %36, %38, %cst_38 {dimension_numbers = #tpu.dot_dimension_numbers<[1], [0], [0], [1], [0, 0, 1, 1], [], []>} : vector<64x64xbf16>, vector<64x128xbf16>, vector<64x128xf32> -> vector<64x128xf32>
    %40 = arith.addf %32, %39 : vector<64x128xf32>
    %c0_39 = arith.constant 0 : index
    %c18_40 = arith.constant 18 : index
    %c1_41 = arith.constant 1 : index
    %c0_42 = arith.constant 0 : index
    %41 = vector.load %arg1[%c0_39, %c18_40, %c1_41, %c0_42] : memref<1x36x9x64xf32, #tpu.memory_space<vmem>>, vector<1x8x8x64xf32>
    %42 = vector.shape_cast %41 : vector<1x8x8x64xf32> to vector<8x8x64xf32>
    %43 = vector.shape_cast %42 : vector<8x8x64xf32> to vector<64x64xf32>
    %44 = arith.truncf %43 : vector<64x64xf32> to vector<64x64xbf16>
    %c1_43 = arith.constant 1 : index
    %c2_44 = arith.constant 2 : index
    %c0_45 = arith.constant 0 : index
    %c0_46 = arith.constant 0 : index
    %45 = vector.load %arg2[%c1_43, %c2_44, %c0_45, %c0_46] : memref<3x3x64x128xbf16, #tpu.memory_space<vmem>>, vector<1x1x64x128xbf16>
    %46 = vector.shape_cast %45 : vector<1x1x64x128xbf16> to vector<64x128xbf16>
    %cst_47 = arith.constant dense<0.000000e+00> : vector<64x128xf32>
    %47 = tpu.matmul %44, %46, %cst_47 {dimension_numbers = #tpu.dot_dimension_numbers<[1], [0], [0], [1], [0, 0, 1, 1], [], []>} : vector<64x64xbf16>, vector<64x128xbf16>, vector<64x128xf32> -> vector<64x128xf32>
    %48 = arith.addf %40, %47 : vector<64x128xf32>
    %c0_48 = arith.constant 0 : index
    %c1_49 = arith.constant 1 : index
    %c0_50 = arith.constant 0 : index
    %c0_51 = arith.constant 0 : index
    %49 = vector.load %arg1[%c0_48, %c1_49, %c0_50, %c0_51] : memref<1x36x9x64xf32, #tpu.memory_space<vmem>>, vector<1x8x8x64xf32>
    %50 = vector.shape_cast %49 : vector<1x8x8x64xf32> to vector<8x8x64xf32>
    %51 = vector.shape_cast %50 : vector<8x8x64xf32> to vector<64x64xf32>
    %52 = arith.truncf %51 : vector<64x64xf32> to vector<64x64xbf16>
    %c2_52 = arith.constant 2 : index
    %c0_53 = arith.constant 0 : index
    %c0_54 = arith.constant 0 : index
    %c0_55 = arith.constant 0 : index
    %53 = vector.load %arg2[%c2_52, %c0_53, %c0_54, %c0_55] : memref<3x3x64x128xbf16, #tpu.memory_space<vmem>>, vector<1x1x64x128xbf16>
    %54 = vector.shape_cast %53 : vector<1x1x64x128xbf16> to vector<64x128xbf16>
    %cst_56 = arith.constant dense<0.000000e+00> : vector<64x128xf32>
    %55 = tpu.matmul %52, %54, %cst_56 {dimension_numbers = #tpu.dot_dimension_numbers<[1], [0], [0], [1], [0, 0, 1, 1], [], []>} : vector<64x64xbf16>, vector<64x128xbf16>, vector<64x128xf32> -> vector<64x128xf32>
    %56 = arith.addf %48, %55 : vector<64x128xf32>
    %c0_57 = arith.constant 0 : index
    %c10 = arith.constant 10 : index
    %c0_58 = arith.constant 0 : index
    %c0_59 = arith.constant 0 : index
    %57 = vector.load %arg1[%c0_57, %c10, %c0_58, %c0_59] : memref<1x36x9x64xf32, #tpu.memory_space<vmem>>, vector<1x8x8x64xf32>
    %58 = vector.shape_cast %57 : vector<1x8x8x64xf32> to vector<8x8x64xf32>
    %59 = vector.shape_cast %58 : vector<8x8x64xf32> to vector<64x64xf32>
    %60 = arith.truncf %59 : vector<64x64xf32> to vector<64x64xbf16>
    %c2_60 = arith.constant 2 : index
    %c1_61 = arith.constant 1 : index
    %c0_62 = arith.constant 0 : index
    %c0_63 = arith.constant 0 : index
    %61 = vector.load %arg2[%c2_60, %c1_61, %c0_62, %c0_63] : memref<3x3x64x128xbf16, #tpu.memory_space<vmem>>, vector<1x1x64x128xbf16>
    %62 = vector.shape_cast %61 : vector<1x1x64x128xbf16> to vector<64x128xbf16>
    %cst_64 = arith.constant dense<0.000000e+00> : vector<64x128xf32>
    %63 = tpu.matmul %60, %62, %cst_64 {dimension_numbers = #tpu.dot_dimension_numbers<[1], [0], [0], [1], [0, 0, 1, 1], [], []>} : vector<64x64xbf16>, vector<64x128xbf16>, vector<64x128xf32> -> vector<64x128xf32>
    %64 = arith.addf %56, %63 : vector<64x128xf32>
    %c0_65 = arith.constant 0 : index
    %c1_66 = arith.constant 1 : index
    %c1_67 = arith.constant 1 : index
    %c0_68 = arith.constant 0 : index
    %65 = vector.load %arg1[%c0_65, %c1_66, %c1_67, %c0_68] : memref<1x36x9x64xf32, #tpu.memory_space<vmem>>, vector<1x8x8x64xf32>
    %66 = vector.shape_cast %65 : vector<1x8x8x64xf32> to vector<8x8x64xf32>
    %67 = vector.shape_cast %66 : vector<8x8x64xf32> to vector<64x64xf32>
    %68 = arith.truncf %67 : vector<64x64xf32> to vector<64x64xbf16>
    %c2_69 = arith.constant 2 : index
    %c2_70 = arith.constant 2 : index
    %c0_71 = arith.constant 0 : index
    %c0_72 = arith.constant 0 : index
    %69 = vector.load %arg2[%c2_69, %c2_70, %c0_71, %c0_72] : memref<3x3x64x128xbf16, #tpu.memory_space<vmem>>, vector<1x1x64x128xbf16>
    %70 = vector.shape_cast %69 : vector<1x1x64x128xbf16> to vector<64x128xbf16>
    %cst_73 = arith.constant dense<0.000000e+00> : vector<64x128xf32>
    %71 = tpu.matmul %68, %70, %cst_73 {dimension_numbers = #tpu.dot_dimension_numbers<[1], [0], [0], [1], [0, 0, 1, 1], [], []>} : vector<64x64xbf16>, vector<64x128xbf16>, vector<64x128xf32> -> vector<64x128xf32>
    %72 = arith.addf %64, %71 : vector<64x128xf32>
    %c0_74 = arith.constant 0 : index
    %c0_75 = arith.constant 0 : index
    %c0_76 = arith.constant 0 : index
    %73 = vector.load %arg3[%c0_74, %c0_75, %c0_76] : memref<1x64x128xf32, #tpu.memory_space<vmem>>, vector<1x64x128xf32>
    %74 = vector.shape_cast %73 : vector<1x64x128xf32> to vector<64x128xf32>
    %75 = vector.shape_cast %72 : vector<64x128xf32> to vector<1x64x128xf32>
    tpu.vector_store %arg3[%c0_74, %c0_75, %c0_76], %75 {strides = array<i32>} : memref<1x64x128xf32, #tpu.memory_space<vmem>>, vector<1x64x128xf32>,
    return
  }
  func.func @transform_0(%arg0: i32) -> (i32, i32, i32, i32) {
    %c0_i32 = arith.constant 0 : i32
    %c0_i32_0 = arith.constant 0 : i32
    %c0_i32_1 = arith.constant 0 : i32
    %c0_i32_2 = arith.constant 0 : i32
    return %arg0, %c0_i32, %c0_i32_0, %c0_i32_1 : i32, i32, i32, i32
  }
  func.func @transform_1(%arg0: i32) -> (i32, i32, i32, i32) {
    %c0_i32 = arith.constant 0 : i32
    %c0_i32_0 = arith.constant 0 : i32
    %c0_i32_1 = arith.constant 0 : i32
    %c0_i32_2 = arith.constant 0 : i32
    %c0_i32_3 = arith.constant 0 : i32
    return %c0_i32, %c0_i32_0, %c0_i32_1, %c0_i32_2 : i32, i32, i32, i32
  }
  func.func @transform_2(%arg0: i32) -> (i32, i32, i32) {
    %c0_i32 = arith.constant 0 : i32
    %c0_i32_0 = arith.constant 0 : i32
    %c0_i32_1 = arith.constant 0 : i32
    return %arg0, %c0_i32, %c0_i32_0 : i32, i32, i32
  }
}

module attributes {stable_mosaic.version = 11 : i64} {
  func.func @_stats_kernel(%arg0: i32, %arg1: memref<128x128xf32, #tpu.memory_space<vmem>>, %arg2: memref<1x128xf32, #tpu.memory_space<vmem>>, %arg3: memref<1x128xf32, #tpu.memory_space<vmem>>) attributes {dimension_semantics = [#tpu.dimension_semantics<arbitrary>], iteration_bounds = array<i64: 1>, scalar_prefetch = 0 : i64, scratch_operands = 0 : i64, tpu.core_type = #tpu.core_type<tc>, window_params = [{transform_indices = @transform_0, window_bounds = array<i64: 128, 128>}, {pipeline_mode = #tpu.pipeline_mode<synchronous>, transform_indices = @transform_1, window_bounds = array<i64: 1, 128>}, {pipeline_mode = #tpu.pipeline_mode<synchronous>, transform_indices = @transform_2, window_bounds = array<i64: 1, 128>}]} {
    %c0_i32 = arith.constant 0 : i32
    %0 = arith.cmpi eq, %arg0, %c0_i32 : i32
    %1 = arith.extui %0 : i1 to i32
    %c0_i32_0 = arith.constant 0 : i32
    %2 = arith.cmpi ne, %1, %c0_i32_0 : i32
    scf.if %2 {
      %cst_13 = arith.constant 0.000000e+00 : f32
      %23 = vector.broadcast %cst_13 : f32 to vector<1x128xf32>
      %c0_14 = arith.constant 0 : index
      %c0_15 = arith.constant 0 : index
      %24 = vector.load %arg2[%c0_14, %c0_15] : memref<1x128xf32, #tpu.memory_space<vmem>>, vector<1x128xf32>
      tpu.vector_store %arg2[%c0_14, %c0_15], %23 {strides = array<i32>} : memref<1x128xf32, #tpu.memory_space<vmem>>, vector<1x128xf32>,
      %cst_16 = arith.constant 0.000000e+00 : f32
      %25 = vector.broadcast %cst_16 : f32 to vector<1x128xf32>
      %c0_17 = arith.constant 0 : index
      %c0_18 = arith.constant 0 : index
      %26 = vector.load %arg3[%c0_17, %c0_18] : memref<1x128xf32, #tpu.memory_space<vmem>>, vector<1x128xf32>
      tpu.vector_store %arg3[%c0_17, %c0_18], %25 {strides = array<i32>} : memref<1x128xf32, #tpu.memory_space<vmem>>, vector<1x128xf32>,
    } else {
    }
    %3 = tpu.iota {dimensions = array<i32: 0>} : vector<128x128xi32>
    %c128_i32 = arith.constant 128 : i32
    %4 = arith.muli %arg0, %c128_i32 : i32
    %5 = vector.broadcast %4 : i32 to vector<128x128xi32>
    %6 = arith.addi %3, %5 : vector<128x128xi32>
    %c128_i32_1 = arith.constant 128 : i32
    %7 = vector.broadcast %c128_i32_1 : i32 to vector<128x128xi32>
    %8 = arith.cmpi slt, %6, %7 : vector<128x128xi32>
    %c0 = arith.constant 0 : index
    %c0_2 = arith.constant 0 : index
    %9 = vector.load %arg1[%c0, %c0_2] : memref<128x128xf32, #tpu.memory_space<vmem>>, vector<128x128xf32>
    %cst = arith.constant 0.000000e+00 : f32
    %10 = vector.broadcast %cst : f32 to vector<128x128xf32>
    %11 = arith.select %8, %9, %10 : vector<128x128xi1>, vector<128x128xf32>
    %c0_3 = arith.constant 0 : index
    %c0_4 = arith.constant 0 : index
    %12 = vector.load %arg2[%c0_3, %c0_4] : memref<1x128xf32, #tpu.memory_space<vmem>>, vector<1x128xf32>
    %cst_5 = arith.constant dense<0.000000e+00> : vector<128xf32>
    %13 = vector.multi_reduction <add>, %11, %cst_5 [0] : vector<128x128xf32> to vector<128xf32>
    %14 = vector.shape_cast %13 : vector<128xf32> to vector<1x128xf32>
    %15 = arith.addf %12, %14 : vector<1x128xf32>
    %c0_6 = arith.constant 0 : index
    %c0_7 = arith.constant 0 : index
    %16 = vector.load %arg2[%c0_6, %c0_7] : memref<1x128xf32, #tpu.memory_space<vmem>>, vector<1x128xf32>
    tpu.vector_store %arg2[%c0_6, %c0_7], %15 {strides = array<i32>} : memref<1x128xf32, #tpu.memory_space<vmem>>, vector<1x128xf32>,
    %c0_8 = arith.constant 0 : index
    %c0_9 = arith.constant 0 : index
    %17 = vector.load %arg3[%c0_8, %c0_9] : memref<1x128xf32, #tpu.memory_space<vmem>>, vector<1x128xf32>
    %18 = arith.mulf %11, %11 : vector<128x128xf32>
    %cst_10 = arith.constant dense<0.000000e+00> : vector<128xf32>
    %19 = vector.multi_reduction <add>, %18, %cst_10 [0] : vector<128x128xf32> to vector<128xf32>
    %20 = vector.shape_cast %19 : vector<128xf32> to vector<1x128xf32>
    %21 = arith.addf %17, %20 : vector<1x128xf32>
    %c0_11 = arith.constant 0 : index
    %c0_12 = arith.constant 0 : index
    %22 = vector.load %arg3[%c0_11, %c0_12] : memref<1x128xf32, #tpu.memory_space<vmem>>, vector<1x128xf32>
    tpu.vector_store %arg3[%c0_11, %c0_12], %21 {strides = array<i32>} : memref<1x128xf32, #tpu.memory_space<vmem>>, vector<1x128xf32>,
    return
  }
  func.func @transform_0(%arg0: i32) -> (i32, i32) {
    %c0_i32 = arith.constant 0 : i32
    %c0_i32_0 = arith.constant 0 : i32
    return %arg0, %c0_i32 : i32, i32
  }
  func.func @transform_1(%arg0: i32) -> (i32, i32) {
    %c0_i32 = arith.constant 0 : i32
    %c0_i32_0 = arith.constant 0 : i32
    %c0_i32_1 = arith.constant 0 : i32
    return %c0_i32, %c0_i32_0 : i32, i32
  }
  func.func @transform_2(%arg0: i32) -> (i32, i32) {
    %c0_i32 = arith.constant 0 : i32
    %c0_i32_0 = arith.constant 0 : i32
    %c0_i32_1 = arith.constant 0 : i32
    return %c0_i32, %c0_i32_0 : i32, i32
  }
}

module attributes {stable_mosaic.version = 11 : i64} {
  func.func @_bn_act_kernel(%arg0: i32, %arg1: memref<128x128xf32, #tpu.memory_space<vmem>>, %arg2: memref<1x128xf32, #tpu.memory_space<vmem>>, %arg3: memref<1x128xf32, #tpu.memory_space<vmem>>, %arg4: memref<128x128xf32, #tpu.memory_space<vmem>>) attributes {dimension_semantics = [#tpu.dimension_semantics<parallel>], iteration_bounds = array<i64: 1>, scalar_prefetch = 0 : i64, scratch_operands = 0 : i64, tpu.core_type = #tpu.core_type<tc>, window_params = [{transform_indices = @transform_0, window_bounds = array<i64: 128, 128>}, {pipeline_mode = #tpu.pipeline_mode<synchronous>, transform_indices = @transform_1, window_bounds = array<i64: 1, 128>}, {pipeline_mode = #tpu.pipeline_mode<synchronous>, transform_indices = @transform_2, window_bounds = array<i64: 1, 128>}, {transform_indices = @transform_3, window_bounds = array<i64: 128, 128>}]} {
    %c0 = arith.constant 0 : index
    %c0_0 = arith.constant 0 : index
    %0 = vector.load %arg1[%c0, %c0_0] : memref<128x128xf32, #tpu.memory_space<vmem>>, vector<128x128xf32>
    %c0_1 = arith.constant 0 : index
    %c0_2 = arith.constant 0 : index
    %1 = vector.load %arg2[%c0_1, %c0_2] : memref<1x128xf32, #tpu.memory_space<vmem>>, vector<1x128xf32>
    %2 = vector.broadcast %1 : vector<1x128xf32> to vector<128x128xf32>
    %3 = arith.mulf %0, %2 : vector<128x128xf32>
    %c0_3 = arith.constant 0 : index
    %c0_4 = arith.constant 0 : index
    %4 = vector.load %arg3[%c0_3, %c0_4] : memref<1x128xf32, #tpu.memory_space<vmem>>, vector<1x128xf32>
    %5 = vector.broadcast %4 : vector<1x128xf32> to vector<128x128xf32>
    %6 = arith.addf %3, %5 : vector<128x128xf32>
    %cst = arith.constant 0.000000e+00 : f32
    %7 = vector.broadcast %cst : f32 to vector<128x128xf32>
    %8 = arith.maximumf %6, %7 : vector<128x128xf32>
    %c0_5 = arith.constant 0 : index
    %c0_6 = arith.constant 0 : index
    %9 = vector.load %arg4[%c0_5, %c0_6] : memref<128x128xf32, #tpu.memory_space<vmem>>, vector<128x128xf32>
    tpu.vector_store %arg4[%c0_5, %c0_6], %8 {strides = array<i32>} : memref<128x128xf32, #tpu.memory_space<vmem>>, vector<128x128xf32>,
    return
  }
  func.func @transform_0(%arg0: i32) -> (i32, i32) {
    %c0_i32 = arith.constant 0 : i32
    %c0_i32_0 = arith.constant 0 : i32
    return %arg0, %c0_i32 : i32, i32
  }
  func.func @transform_1(%arg0: i32) -> (i32, i32) {
    %c0_i32 = arith.constant 0 : i32
    %c0_i32_0 = arith.constant 0 : i32
    %c0_i32_1 = arith.constant 0 : i32
    return %c0_i32, %c0_i32_0 : i32, i32
  }
  func.func @transform_2(%arg0: i32) -> (i32, i32) {
    %c0_i32 = arith.constant 0 : i32
    %c0_i32_0 = arith.constant 0 : i32
    %c0_i32_1 = arith.constant 0 : i32
    return %c0_i32, %c0_i32_0 : i32, i32
  }
  func.func @transform_3(%arg0: i32) -> (i32, i32) {
    %c0_i32 = arith.constant 0 : i32
    %c0_i32_0 = arith.constant 0 : i32
    return %arg0, %c0_i32 : i32, i32
  }
}

module attributes {stable_mosaic.version = 11 : i64} {
  func.func @_conv_kernel(%arg0: i32, %arg1: memref<1x8x8x64xf32, #tpu.memory_space<vmem>>, %arg2: memref<1x1x64x128xbf16, #tpu.memory_space<vmem>>, %arg3: memref<1x64x128xf32, #tpu.memory_space<vmem>>) attributes {dimension_semantics = [#tpu.dimension_semantics<parallel>], iteration_bounds = array<i64: 2>, scalar_prefetch = 0 : i64, scratch_operands = 0 : i64, tpu.core_type = #tpu.core_type<tc>, window_params = [{transform_indices = @transform_0, window_bounds = array<i64: 1, 8, 8, 64>}, {pipeline_mode = #tpu.pipeline_mode<synchronous>, transform_indices = @transform_1, window_bounds = array<i64: 1, 1, 64, 128>}, {transform_indices = @transform_2, window_bounds = array<i64: 1, 64, 128>}]} {
    %cst = arith.constant 0.000000e+00 : f32
    %0 = vector.broadcast %cst : f32 to vector<64x128xf32>
    %c0 = arith.constant 0 : index
    %c0_0 = arith.constant 0 : index
    %c0_1 = arith.constant 0 : index
    %c0_2 = arith.constant 0 : index
    %1 = vector.load %arg1[%c0, %c0_0, %c0_1, %c0_2] : memref<1x8x8x64xf32, #tpu.memory_space<vmem>>, vector<1x8x8x64xf32>
    %2 = vector.shape_cast %1 : vector<1x8x8x64xf32> to vector<8x8x64xf32>
    %3 = vector.shape_cast %2 : vector<8x8x64xf32> to vector<64x64xf32>
    %4 = arith.truncf %3 : vector<64x64xf32> to vector<64x64xbf16>
    %c0_3 = arith.constant 0 : index
    %c0_4 = arith.constant 0 : index
    %c0_5 = arith.constant 0 : index
    %c0_6 = arith.constant 0 : index
    %5 = vector.load %arg2[%c0_3, %c0_4, %c0_5, %c0_6] : memref<1x1x64x128xbf16, #tpu.memory_space<vmem>>, vector<1x1x64x128xbf16>
    %6 = vector.shape_cast %5 : vector<1x1x64x128xbf16> to vector<64x128xbf16>
    %cst_7 = arith.constant dense<0.000000e+00> : vector<64x128xf32>
    %7 = tpu.matmul %4, %6, %cst_7 {dimension_numbers = #tpu.dot_dimension_numbers<[1], [0], [0], [1], [0, 0, 1, 1], [], []>} : vector<64x64xbf16>, vector<64x128xbf16>, vector<64x128xf32> -> vector<64x128xf32>
    %8 = arith.addf %0, %7 : vector<64x128xf32>
    %c0_8 = arith.constant 0 : index
    %c0_9 = arith.constant 0 : index
    %c0_10 = arith.constant 0 : index
    %9 = vector.load %arg3[%c0_8, %c0_9, %c0_10] : memref<1x64x128xf32, #tpu.memory_space<vmem>>, vector<1x64x128xf32>
    %10 = vector.shape_cast %9 : vector<1x64x128xf32> to vector<64x128xf32>
    %11 = vector.shape_cast %8 : vector<64x128xf32> to vector<1x64x128xf32>
    tpu.vector_store %arg3[%c0_8, %c0_9, %c0_10], %11 {strides = array<i32>} : memref<1x64x128xf32, #tpu.memory_space<vmem>>, vector<1x64x128xf32>,
    return
  }
  func.func @transform_0(%arg0: i32) -> (i32, i32, i32, i32) {
    %c0_i32 = arith.constant 0 : i32
    %c0_i32_0 = arith.constant 0 : i32
    %c0_i32_1 = arith.constant 0 : i32
    %c0_i32_2 = arith.constant 0 : i32
    return %arg0, %c0_i32, %c0_i32_0, %c0_i32_1 : i32, i32, i32, i32
  }
  func.func @transform_1(%arg0: i32) -> (i32, i32, i32, i32) {
    %c0_i32 = arith.constant 0 : i32
    %c0_i32_0 = arith.constant 0 : i32
    %c0_i32_1 = arith.constant 0 : i32
    %c0_i32_2 = arith.constant 0 : i32
    %c0_i32_3 = arith.constant 0 : i32
    return %c0_i32, %c0_i32_0, %c0_i32_1, %c0_i32_2 : i32, i32, i32, i32
  }
  func.func @transform_2(%arg0: i32) -> (i32, i32, i32) {
    %c0_i32 = arith.constant 0 : i32
    %c0_i32_0 = arith.constant 0 : i32
    %c0_i32_1 = arith.constant 0 : i32
    return %arg0, %c0_i32, %c0_i32_0 : i32, i32, i32
  }
}

module attributes {stable_mosaic.version = 11 : i64} {
  func.func @_conv_kernel(%arg0: i32, %arg1: memref<1x10x10x128xf32, #tpu.memory_space<vmem>>, %arg2: memref<3x3x128x128xbf16, #tpu.memory_space<vmem>>, %arg3: memref<1x64x128xf32, #tpu.memory_space<vmem>>) attributes {dimension_semantics = [#tpu.dimension_semantics<parallel>], iteration_bounds = array<i64: 2>, scalar_prefetch = 0 : i64, scratch_operands = 0 : i64, tpu.core_type = #tpu.core_type<tc>, window_params = [{transform_indices = @transform_0, window_bounds = array<i64: 1, 10, 10, 128>}, {pipeline_mode = #tpu.pipeline_mode<synchronous>, transform_indices = @transform_1, window_bounds = array<i64: 3, 3, 128, 128>}, {transform_indices = @transform_2, window_bounds = array<i64: 1, 64, 128>}]} {
    %cst = arith.constant 0.000000e+00 : f32
    %0 = vector.broadcast %cst : f32 to vector<64x128xf32>
    %c0 = arith.constant 0 : index
    %c0_0 = arith.constant 0 : index
    %c0_1 = arith.constant 0 : index
    %c0_2 = arith.constant 0 : index
    %1 = vector.load %arg1[%c0, %c0_0, %c0_1, %c0_2] : memref<1x10x10x128xf32, #tpu.memory_space<vmem>>, vector<1x8x8x128xf32>
    %2 = vector.shape_cast %1 : vector<1x8x8x128xf32> to vector<8x8x128xf32>
    %3 = vector.shape_cast %2 : vector<8x8x128xf32> to vector<64x128xf32>
    %4 = arith.truncf %3 : vector<64x128xf32> to vector<64x128xbf16>
    %c0_3 = arith.constant 0 : index
    %c0_4 = arith.constant 0 : index
    %c0_5 = arith.constant 0 : index
    %c0_6 = arith.constant 0 : index
    %5 = vector.load %arg2[%c0_3, %c0_4, %c0_5, %c0_6] : memref<3x3x128x128xbf16, #tpu.memory_space<vmem>>, vector<1x1x128x128xbf16>
    %6 = vector.shape_cast %5 : vector<1x1x128x128xbf16> to vector<128x128xbf16>
    %cst_7 = arith.constant dense<0.000000e+00> : vector<64x128xf32>
    %7 = tpu.matmul %4, %6, %cst_7 {dimension_numbers = #tpu.dot_dimension_numbers<[1], [0], [0], [1], [0, 0, 1, 1], [], []>} : vector<64x128xbf16>, vector<128x128xbf16>, vector<64x128xf32> -> vector<64x128xf32>
    %8 = arith.addf %0, %7 : vector<64x128xf32>
    %c0_8 = arith.constant 0 : index
    %c0_9 = arith.constant 0 : index
    %c1 = arith.constant 1 : index
    %c0_10 = arith.constant 0 : index
    %9 = vector.load %arg1[%c0_8, %c0_9, %c1, %c0_10] : memref<1x10x10x128xf32, #tpu.memory_space<vmem>>, vector<1x8x8x128xf32>
    %10 = vector.shape_cast %9 : vector<1x8x8x128xf32> to vector<8x8x128xf32>
    %11 = vector.shape_cast %10 : vector<8x8x128xf32> to vector<64x128xf32>
    %12 = arith.truncf %11 : vector<64x128xf32> to vector<64x128xbf16>
    %c0_11 = arith.constant 0 : index
    %c1_12 = arith.constant 1 : index
    %c0_13 = arith.constant 0 : index
    %c0_14 = arith.constant 0 : index
    %13 = vector.load %arg2[%c0_11, %c1_12, %c0_13, %c0_14] : memref<3x3x128x128xbf16, #tpu.memory_space<vmem>>, vector<1x1x128x128xbf16>
    %14 = vector.shape_cast %13 : vector<1x1x128x128xbf16> to vector<128x128xbf16>
    %cst_15 = arith.constant dense<0.000000e+00> : vector<64x128xf32>
    %15 = tpu.matmul %12, %14, %cst_15 {dimension_numbers = #tpu.dot_dimension_numbers<[1], [0], [0], [1], [0, 0, 1, 1], [], []>} : vector<64x128xbf16>, vector<128x128xbf16>, vector<64x128xf32> -> vector<64x128xf32>
    %16 = arith.addf %8, %15 : vector<64x128xf32>
    %c0_16 = arith.constant 0 : index
    %c0_17 = arith.constant 0 : index
    %c2 = arith.constant 2 : index
    %c0_18 = arith.constant 0 : index
    %17 = vector.load %arg1[%c0_16, %c0_17, %c2, %c0_18] : memref<1x10x10x128xf32, #tpu.memory_space<vmem>>, vector<1x8x8x128xf32>
    %18 = vector.shape_cast %17 : vector<1x8x8x128xf32> to vector<8x8x128xf32>
    %19 = vector.shape_cast %18 : vector<8x8x128xf32> to vector<64x128xf32>
    %20 = arith.truncf %19 : vector<64x128xf32> to vector<64x128xbf16>
    %c0_19 = arith.constant 0 : index
    %c2_20 = arith.constant 2 : index
    %c0_21 = arith.constant 0 : index
    %c0_22 = arith.constant 0 : index
    %21 = vector.load %arg2[%c0_19, %c2_20, %c0_21, %c0_22] : memref<3x3x128x128xbf16, #tpu.memory_space<vmem>>, vector<1x1x128x128xbf16>
    %22 = vector.shape_cast %21 : vector<1x1x128x128xbf16> to vector<128x128xbf16>
    %cst_23 = arith.constant dense<0.000000e+00> : vector<64x128xf32>
    %23 = tpu.matmul %20, %22, %cst_23 {dimension_numbers = #tpu.dot_dimension_numbers<[1], [0], [0], [1], [0, 0, 1, 1], [], []>} : vector<64x128xbf16>, vector<128x128xbf16>, vector<64x128xf32> -> vector<64x128xf32>
    %24 = arith.addf %16, %23 : vector<64x128xf32>
    %c0_24 = arith.constant 0 : index
    %c1_25 = arith.constant 1 : index
    %c0_26 = arith.constant 0 : index
    %c0_27 = arith.constant 0 : index
    %25 = vector.load %arg1[%c0_24, %c1_25, %c0_26, %c0_27] : memref<1x10x10x128xf32, #tpu.memory_space<vmem>>, vector<1x8x8x128xf32>
    %26 = vector.shape_cast %25 : vector<1x8x8x128xf32> to vector<8x8x128xf32>
    %27 = vector.shape_cast %26 : vector<8x8x128xf32> to vector<64x128xf32>
    %28 = arith.truncf %27 : vector<64x128xf32> to vector<64x128xbf16>
    %c1_28 = arith.constant 1 : index
    %c0_29 = arith.constant 0 : index
    %c0_30 = arith.constant 0 : index
    %c0_31 = arith.constant 0 : index
    %29 = vector.load %arg2[%c1_28, %c0_29, %c0_30, %c0_31] : memref<3x3x128x128xbf16, #tpu.memory_space<vmem>>, vector<1x1x128x128xbf16>
    %30 = vector.shape_cast %29 : vector<1x1x128x128xbf16> to vector<128x128xbf16>
    %cst_32 = arith.constant dense<0.000000e+00> : vector<64x128xf32>
    %31 = tpu.matmul %28, %30, %cst_32 {dimension_numbers = #tpu.dot_dimension_numbers<[1], [0], [0], [1], [0, 0, 1, 1], [], []>} : vector<64x128xbf16>, vector<128x128xbf16>, vector<64x128xf32> -> vector<64x128xf32>
    %32 = arith.addf %24, %31 : vector<64x128xf32>
    %c0_33 = arith.constant 0 : index
    %c1_34 = arith.constant 1 : index
    %c1_35 = arith.constant 1 : index
    %c0_36 = arith.constant 0 : index
    %33 = vector.load %arg1[%c0_33, %c1_34, %c1_35, %c0_36] : memref<1x10x10x128xf32, #tpu.memory_space<vmem>>, vector<1x8x8x128xf32>
    %34 = vector.shape_cast %33 : vector<1x8x8x128xf32> to vector<8x8x128xf32>
    %35 = vector.shape_cast %34 : vector<8x8x128xf32> to vector<64x128xf32>
    %36 = arith.truncf %35 : vector<64x128xf32> to vector<64x128xbf16>
    %c1_37 = arith.constant 1 : index
    %c1_38 = arith.constant 1 : index
    %c0_39 = arith.constant 0 : index
    %c0_40 = arith.constant 0 : index
    %37 = vector.load %arg2[%c1_37, %c1_38, %c0_39, %c0_40] : memref<3x3x128x128xbf16, #tpu.memory_space<vmem>>, vector<1x1x128x128xbf16>
    %38 = vector.shape_cast %37 : vector<1x1x128x128xbf16> to vector<128x128xbf16>
    %cst_41 = arith.constant dense<0.000000e+00> : vector<64x128xf32>
    %39 = tpu.matmul %36, %38, %cst_41 {dimension_numbers = #tpu.dot_dimension_numbers<[1], [0], [0], [1], [0, 0, 1, 1], [], []>} : vector<64x128xbf16>, vector<128x128xbf16>, vector<64x128xf32> -> vector<64x128xf32>
    %40 = arith.addf %32, %39 : vector<64x128xf32>
    %c0_42 = arith.constant 0 : index
    %c1_43 = arith.constant 1 : index
    %c2_44 = arith.constant 2 : index
    %c0_45 = arith.constant 0 : index
    %41 = vector.load %arg1[%c0_42, %c1_43, %c2_44, %c0_45] : memref<1x10x10x128xf32, #tpu.memory_space<vmem>>, vector<1x8x8x128xf32>
    %42 = vector.shape_cast %41 : vector<1x8x8x128xf32> to vector<8x8x128xf32>
    %43 = vector.shape_cast %42 : vector<8x8x128xf32> to vector<64x128xf32>
    %44 = arith.truncf %43 : vector<64x128xf32> to vector<64x128xbf16>
    %c1_46 = arith.constant 1 : index
    %c2_47 = arith.constant 2 : index
    %c0_48 = arith.constant 0 : index
    %c0_49 = arith.constant 0 : index
    %45 = vector.load %arg2[%c1_46, %c2_47, %c0_48, %c0_49] : memref<3x3x128x128xbf16, #tpu.memory_space<vmem>>, vector<1x1x128x128xbf16>
    %46 = vector.shape_cast %45 : vector<1x1x128x128xbf16> to vector<128x128xbf16>
    %cst_50 = arith.constant dense<0.000000e+00> : vector<64x128xf32>
    %47 = tpu.matmul %44, %46, %cst_50 {dimension_numbers = #tpu.dot_dimension_numbers<[1], [0], [0], [1], [0, 0, 1, 1], [], []>} : vector<64x128xbf16>, vector<128x128xbf16>, vector<64x128xf32> -> vector<64x128xf32>
    %48 = arith.addf %40, %47 : vector<64x128xf32>
    %c0_51 = arith.constant 0 : index
    %c2_52 = arith.constant 2 : index
    %c0_53 = arith.constant 0 : index
    %c0_54 = arith.constant 0 : index
    %49 = vector.load %arg1[%c0_51, %c2_52, %c0_53, %c0_54] : memref<1x10x10x128xf32, #tpu.memory_space<vmem>>, vector<1x8x8x128xf32>
    %50 = vector.shape_cast %49 : vector<1x8x8x128xf32> to vector<8x8x128xf32>
    %51 = vector.shape_cast %50 : vector<8x8x128xf32> to vector<64x128xf32>
    %52 = arith.truncf %51 : vector<64x128xf32> to vector<64x128xbf16>
    %c2_55 = arith.constant 2 : index
    %c0_56 = arith.constant 0 : index
    %c0_57 = arith.constant 0 : index
    %c0_58 = arith.constant 0 : index
    %53 = vector.load %arg2[%c2_55, %c0_56, %c0_57, %c0_58] : memref<3x3x128x128xbf16, #tpu.memory_space<vmem>>, vector<1x1x128x128xbf16>
    %54 = vector.shape_cast %53 : vector<1x1x128x128xbf16> to vector<128x128xbf16>
    %cst_59 = arith.constant dense<0.000000e+00> : vector<64x128xf32>
    %55 = tpu.matmul %52, %54, %cst_59 {dimension_numbers = #tpu.dot_dimension_numbers<[1], [0], [0], [1], [0, 0, 1, 1], [], []>} : vector<64x128xbf16>, vector<128x128xbf16>, vector<64x128xf32> -> vector<64x128xf32>
    %56 = arith.addf %48, %55 : vector<64x128xf32>
    %c0_60 = arith.constant 0 : index
    %c2_61 = arith.constant 2 : index
    %c1_62 = arith.constant 1 : index
    %c0_63 = arith.constant 0 : index
    %57 = vector.load %arg1[%c0_60, %c2_61, %c1_62, %c0_63] : memref<1x10x10x128xf32, #tpu.memory_space<vmem>>, vector<1x8x8x128xf32>
    %58 = vector.shape_cast %57 : vector<1x8x8x128xf32> to vector<8x8x128xf32>
    %59 = vector.shape_cast %58 : vector<8x8x128xf32> to vector<64x128xf32>
    %60 = arith.truncf %59 : vector<64x128xf32> to vector<64x128xbf16>
    %c2_64 = arith.constant 2 : index
    %c1_65 = arith.constant 1 : index
    %c0_66 = arith.constant 0 : index
    %c0_67 = arith.constant 0 : index
    %61 = vector.load %arg2[%c2_64, %c1_65, %c0_66, %c0_67] : memref<3x3x128x128xbf16, #tpu.memory_space<vmem>>, vector<1x1x128x128xbf16>
    %62 = vector.shape_cast %61 : vector<1x1x128x128xbf16> to vector<128x128xbf16>
    %cst_68 = arith.constant dense<0.000000e+00> : vector<64x128xf32>
    %63 = tpu.matmul %60, %62, %cst_68 {dimension_numbers = #tpu.dot_dimension_numbers<[1], [0], [0], [1], [0, 0, 1, 1], [], []>} : vector<64x128xbf16>, vector<128x128xbf16>, vector<64x128xf32> -> vector<64x128xf32>
    %64 = arith.addf %56, %63 : vector<64x128xf32>
    %c0_69 = arith.constant 0 : index
    %c2_70 = arith.constant 2 : index
    %c2_71 = arith.constant 2 : index
    %c0_72 = arith.constant 0 : index
    %65 = vector.load %arg1[%c0_69, %c2_70, %c2_71, %c0_72] : memref<1x10x10x128xf32, #tpu.memory_space<vmem>>, vector<1x8x8x128xf32>
    %66 = vector.shape_cast %65 : vector<1x8x8x128xf32> to vector<8x8x128xf32>
    %67 = vector.shape_cast %66 : vector<8x8x128xf32> to vector<64x128xf32>
    %68 = arith.truncf %67 : vector<64x128xf32> to vector<64x128xbf16>
    %c2_73 = arith.constant 2 : index
    %c2_74 = arith.constant 2 : index
    %c0_75 = arith.constant 0 : index
    %c0_76 = arith.constant 0 : index
    %69 = vector.load %arg2[%c2_73, %c2_74, %c0_75, %c0_76] : memref<3x3x128x128xbf16, #tpu.memory_space<vmem>>, vector<1x1x128x128xbf16>
    %70 = vector.shape_cast %69 : vector<1x1x128x128xbf16> to vector<128x128xbf16>
    %cst_77 = arith.constant dense<0.000000e+00> : vector<64x128xf32>
    %71 = tpu.matmul %68, %70, %cst_77 {dimension_numbers = #tpu.dot_dimension_numbers<[1], [0], [0], [1], [0, 0, 1, 1], [], []>} : vector<64x128xbf16>, vector<128x128xbf16>, vector<64x128xf32> -> vector<64x128xf32>
    %72 = arith.addf %64, %71 : vector<64x128xf32>
    %c0_78 = arith.constant 0 : index
    %c0_79 = arith.constant 0 : index
    %c0_80 = arith.constant 0 : index
    %73 = vector.load %arg3[%c0_78, %c0_79, %c0_80] : memref<1x64x128xf32, #tpu.memory_space<vmem>>, vector<1x64x128xf32>
    %74 = vector.shape_cast %73 : vector<1x64x128xf32> to vector<64x128xf32>
    %75 = vector.shape_cast %72 : vector<64x128xf32> to vector<1x64x128xf32>
    tpu.vector_store %arg3[%c0_78, %c0_79, %c0_80], %75 {strides = array<i32>} : memref<1x64x128xf32, #tpu.memory_space<vmem>>, vector<1x64x128xf32>,
    return
  }
  func.func @transform_0(%arg0: i32) -> (i32, i32, i32, i32) {
    %c0_i32 = arith.constant 0 : i32
    %c0_i32_0 = arith.constant 0 : i32
    %c0_i32_1 = arith.constant 0 : i32
    %c0_i32_2 = arith.constant 0 : i32
    return %arg0, %c0_i32, %c0_i32_0, %c0_i32_1 : i32, i32, i32, i32
  }
  func.func @transform_1(%arg0: i32) -> (i32, i32, i32, i32) {
    %c0_i32 = arith.constant 0 : i32
    %c0_i32_0 = arith.constant 0 : i32
    %c0_i32_1 = arith.constant 0 : i32
    %c0_i32_2 = arith.constant 0 : i32
    %c0_i32_3 = arith.constant 0 : i32
    return %c0_i32, %c0_i32_0, %c0_i32_1, %c0_i32_2 : i32, i32, i32, i32
  }
  func.func @transform_2(%arg0: i32) -> (i32, i32, i32) {
    %c0_i32 = arith.constant 0 : i32
    %c0_i32_0 = arith.constant 0 : i32
    %c0_i32_1 = arith.constant 0 : i32
    return %arg0, %c0_i32, %c0_i32_0 : i32, i32, i32
  }
}

module attributes {stable_mosaic.version = 11 : i64} {
  func.func @_bn_act_kernel(%arg0: i32, %arg1: memref<128x128xf32, #tpu.memory_space<vmem>>, %arg2: memref<1x128xf32, #tpu.memory_space<vmem>>, %arg3: memref<1x128xf32, #tpu.memory_space<vmem>>, %arg4: memref<128x128xf32, #tpu.memory_space<vmem>>) attributes {dimension_semantics = [#tpu.dimension_semantics<parallel>], iteration_bounds = array<i64: 1>, scalar_prefetch = 0 : i64, scratch_operands = 0 : i64, tpu.core_type = #tpu.core_type<tc>, window_params = [{transform_indices = @transform_0, window_bounds = array<i64: 128, 128>}, {pipeline_mode = #tpu.pipeline_mode<synchronous>, transform_indices = @transform_1, window_bounds = array<i64: 1, 128>}, {pipeline_mode = #tpu.pipeline_mode<synchronous>, transform_indices = @transform_2, window_bounds = array<i64: 1, 128>}, {transform_indices = @transform_3, window_bounds = array<i64: 128, 128>}]} {
    %c0 = arith.constant 0 : index
    %c0_0 = arith.constant 0 : index
    %0 = vector.load %arg1[%c0, %c0_0] : memref<128x128xf32, #tpu.memory_space<vmem>>, vector<128x128xf32>
    %c0_1 = arith.constant 0 : index
    %c0_2 = arith.constant 0 : index
    %1 = vector.load %arg2[%c0_1, %c0_2] : memref<1x128xf32, #tpu.memory_space<vmem>>, vector<1x128xf32>
    %2 = vector.broadcast %1 : vector<1x128xf32> to vector<128x128xf32>
    %3 = arith.mulf %0, %2 : vector<128x128xf32>
    %c0_3 = arith.constant 0 : index
    %c0_4 = arith.constant 0 : index
    %4 = vector.load %arg3[%c0_3, %c0_4] : memref<1x128xf32, #tpu.memory_space<vmem>>, vector<1x128xf32>
    %5 = vector.broadcast %4 : vector<1x128xf32> to vector<128x128xf32>
    %6 = arith.addf %3, %5 : vector<128x128xf32>
    %c0_5 = arith.constant 0 : index
    %c0_6 = arith.constant 0 : index
    %7 = vector.load %arg4[%c0_5, %c0_6] : memref<128x128xf32, #tpu.memory_space<vmem>>, vector<128x128xf32>
    tpu.vector_store %arg4[%c0_5, %c0_6], %6 {strides = array<i32>} : memref<128x128xf32, #tpu.memory_space<vmem>>, vector<128x128xf32>,
    return
  }
  func.func @transform_0(%arg0: i32) -> (i32, i32) {
    %c0_i32 = arith.constant 0 : i32
    %c0_i32_0 = arith.constant 0 : i32
    return %arg0, %c0_i32 : i32, i32
  }
  func.func @transform_1(%arg0: i32) -> (i32, i32) {
    %c0_i32 = arith.constant 0 : i32
    %c0_i32_0 = arith.constant 0 : i32
    %c0_i32_1 = arith.constant 0 : i32
    return %c0_i32, %c0_i32_0 : i32, i32
  }
  func.func @transform_2(%arg0: i32) -> (i32, i32) {
    %c0_i32 = arith.constant 0 : i32
    %c0_i32_0 = arith.constant 0 : i32
    %c0_i32_1 = arith.constant 0 : i32
    return %c0_i32, %c0_i32_0 : i32, i32
  }
  func.func @transform_3(%arg0: i32) -> (i32, i32) {
    %c0_i32 = arith.constant 0 : i32
    %c0_i32_0 = arith.constant 0 : i32
    return %arg0, %c0_i32 : i32, i32
  }
}

module attributes {stable_mosaic.version = 11 : i64} {
  func.func @_bn_add_act_kernel(%arg0: i32, %arg1: memref<128x128xf32, #tpu.memory_space<vmem>>, %arg2: memref<1x128xf32, #tpu.memory_space<vmem>>, %arg3: memref<1x128xf32, #tpu.memory_space<vmem>>, %arg4: memref<128x128xf32, #tpu.memory_space<vmem>>, %arg5: memref<128x128xf32, #tpu.memory_space<vmem>>) attributes {dimension_semantics = [#tpu.dimension_semantics<parallel>], iteration_bounds = array<i64: 1>, scalar_prefetch = 0 : i64, scratch_operands = 0 : i64, tpu.core_type = #tpu.core_type<tc>, window_params = [{transform_indices = @transform_0, window_bounds = array<i64: 128, 128>}, {pipeline_mode = #tpu.pipeline_mode<synchronous>, transform_indices = @transform_1, window_bounds = array<i64: 1, 128>}, {pipeline_mode = #tpu.pipeline_mode<synchronous>, transform_indices = @transform_2, window_bounds = array<i64: 1, 128>}, {transform_indices = @transform_3, window_bounds = array<i64: 128, 128>}, {transform_indices = @transform_4, window_bounds = array<i64: 128, 128>}]} {
    %c0 = arith.constant 0 : index
    %c0_0 = arith.constant 0 : index
    %0 = vector.load %arg1[%c0, %c0_0] : memref<128x128xf32, #tpu.memory_space<vmem>>, vector<128x128xf32>
    %c0_1 = arith.constant 0 : index
    %c0_2 = arith.constant 0 : index
    %1 = vector.load %arg2[%c0_1, %c0_2] : memref<1x128xf32, #tpu.memory_space<vmem>>, vector<1x128xf32>
    %2 = vector.broadcast %1 : vector<1x128xf32> to vector<128x128xf32>
    %3 = arith.mulf %0, %2 : vector<128x128xf32>
    %c0_3 = arith.constant 0 : index
    %c0_4 = arith.constant 0 : index
    %4 = vector.load %arg3[%c0_3, %c0_4] : memref<1x128xf32, #tpu.memory_space<vmem>>, vector<1x128xf32>
    %5 = vector.broadcast %4 : vector<1x128xf32> to vector<128x128xf32>
    %6 = arith.addf %3, %5 : vector<128x128xf32>
    %c0_5 = arith.constant 0 : index
    %c0_6 = arith.constant 0 : index
    %7 = vector.load %arg4[%c0_5, %c0_6] : memref<128x128xf32, #tpu.memory_space<vmem>>, vector<128x128xf32>
    %8 = arith.addf %6, %7 : vector<128x128xf32>
    %cst = arith.constant 0.000000e+00 : f32
    %9 = vector.broadcast %cst : f32 to vector<128x128xf32>
    %10 = arith.maximumf %8, %9 : vector<128x128xf32>
    %c0_7 = arith.constant 0 : index
    %c0_8 = arith.constant 0 : index
    %11 = vector.load %arg5[%c0_7, %c0_8] : memref<128x128xf32, #tpu.memory_space<vmem>>, vector<128x128xf32>
    tpu.vector_store %arg5[%c0_7, %c0_8], %10 {strides = array<i32>} : memref<128x128xf32, #tpu.memory_space<vmem>>, vector<128x128xf32>,
    return
  }
  func.func @transform_0(%arg0: i32) -> (i32, i32) {
    %c0_i32 = arith.constant 0 : i32
    %c0_i32_0 = arith.constant 0 : i32
    return %arg0, %c0_i32 : i32, i32
  }
  func.func @transform_1(%arg0: i32) -> (i32, i32) {
    %c0_i32 = arith.constant 0 : i32
    %c0_i32_0 = arith.constant 0 : i32
    %c0_i32_1 = arith.constant 0 : i32
    return %c0_i32, %c0_i32_0 : i32, i32
  }
  func.func @transform_2(%arg0: i32) -> (i32, i32) {
    %c0_i32 = arith.constant 0 : i32
    %c0_i32_0 = arith.constant 0 : i32
    %c0_i32_1 = arith.constant 0 : i32
    return %c0_i32, %c0_i32_0 : i32, i32
  }
  func.func @transform_3(%arg0: i32) -> (i32, i32) {
    %c0_i32 = arith.constant 0 : i32
    %c0_i32_0 = arith.constant 0 : i32
    return %arg0, %c0_i32 : i32, i32
  }
  func.func @transform_4(%arg0: i32) -> (i32, i32) {
    %c0_i32 = arith.constant 0 : i32
    %c0_i32_0 = arith.constant 0 : i32
    return %arg0, %c0_i32 : i32, i32
  }
}

</mosaic_0001>

<llo_original>
// kernel: simple_block_forward.11
$region0: #{simple_block_forward.11}
  #allocation0 [shape = 'u32[]', space=smem, size = 0x4, offset = 0x4, fixed_abs, tag = 'smem constant byte address 0x4 - core index']
  #allocation1 [shape = 'u32[144,128]{1,0:T(1,128)}', space=vmem, size = 0x12000, scoped, tag = 'internal scratch']
  %s0 = inlined_call_operand.vmem [shape: f32[128,128], index: 0, kind: input, shape index: {}]
  %s1 = inlined_call_operand.vmem [shape: f32[1,128], index: 1, kind: input, shape index: {}]
  %s2 = inlined_call_operand.vmem [shape: f32[1,128], index: 2, kind: input, shape index: {}]
  %s3 = inlined_call_operand.vmem [shape: f32[128,128], index: 3, kind: output, shape index: {}]
  %s4 = sld [smem:[#allocation0]]
  $region22: #{simple_block_forward.11} parent=0
    _
  %s6 = ssub.s32 1, %s4
  %s7 = scalar_select 0, %s6, %s4
  // Predicated region
  $region2: #{simple_block_forward.11} parent=0 // pred_check
    _
  $region3: #{simple_block_forward.11} parent=0 // pred_check_branch
    %9 = sbr.rel (0) target = $region5
  $region4: #{simple_block_forward.11} parent=0 // pred_region
    _
  $region5: #{simple_block_forward.11} parent=0 // pred_fallthru
    _
  // Predicated region
  $region6: #{simple_block_forward.11} parent=0 // pred_check
    _
  $region7: #{simple_block_forward.11} parent=0 // pred_check_branch
    %11 = sbr.rel (0) target = $region9
  $region8: #{simple_block_forward.11} parent=0 // pred_region
    _
  $region9: #{simple_block_forward.11} parent=0 // pred_fallthru
    _
  // Predicated region
  $region10: #{simple_block_forward.11} parent=0 // pred_check
    _
  $region11: #{simple_block_forward.11} parent=0 // pred_check_branch
    %13 = sbr.rel (0) target = $region13
  $region12: #{simple_block_forward.11} parent=0 // pred_region
    _
  $region13: #{simple_block_forward.11} parent=0 // pred_fallthru
    _
  %v14 = vld [vmem:[%s0] sm:$0xff]
  %v15 = vld [vmem:[%s0 + $0x8] sm:$0xff]
  %v16 = vld [vmem:[%s0 + $0x10] sm:$0xff]
  %v17 = vld [vmem:[%s0 + $0x18] sm:$0xff]
  %v18 = vld [vmem:[%s0 + $0x20] sm:$0xff]
  %v19 = vld [vmem:[%s0 + $0x28] sm:$0xff]
  %v20 = vld [vmem:[%s0 + $0x30] sm:$0xff]
  %v21 = vld [vmem:[%s0 + $0x38] sm:$0xff]
  %v22 = vld [vmem:[%s0 + $0x40] sm:$0xff]
  %v23 = vld [vmem:[%s0 + $0x48] sm:$0xff]
  %v24 = vld [vmem:[%s0 + $0x50] sm:$0xff]
  %v25 = vld [vmem:[%s0 + $0x58] sm:$0xff]
  %v26 = vld [vmem:[%s0 + $0x60] sm:$0xff]
  %v27 = vld [vmem:[%s0 + $0x68] sm:$0xff]
  %v28 = vld [vmem:[%s0 + $0x70] sm:$0xff]
  %v29 = vld [vmem:[%s0 + $0x78] sm:$0xff]
  %v30 = vld [vmem:[%s1] sm:$0x1]
  %v32 = vlaneseq
  %v33 = vshrl.u32 %v32, 7
  %v34 = vsub.s32 0, %v33
  %v35 = vrot.slane %v30, %v34
  %v37 = vmul.f32 %v14, %v35
  %v38 = vmul.f32 %v15, %v35
  %v39 = vmul.f32 %v16, %v35
  %v40 = vmul.f32 %v17, %v35
  %v41 = vmul.f32 %v18, %v35
  %v42 = vmul.f32 %v19, %v35
  %v43 = vmul.f32 %v20, %v35
  %v44 = vmul.f32 %v21, %v35
  %v45 = vmul.f32 %v22, %v35
  %v46 = vmul.f32 %v23, %v35
  %v47 = vmul.f32 %v24, %v35
  %v48 = vmul.f32 %v25, %v35
  %v49 = vmul.f32 %v26, %v35
  %v50 = vmul.f32 %v27, %v35
  %v51 = vmul.f32 %v28, %v35
  %v52 = vmul.f32 %v29, %v35
  %v53 = vld [vmem:[%s2] sm:$0x1]
  %v55 = vlaneseq
  %v56 = vshrl.u32 %v55, 7
  %v57 = vsub.s32 0, %v56
  %v58 = vrot.slane %v53, %v57
  %v60 = vadd.f32 %v37, %v58
  %v61 = vadd.f32 %v38, %v58
  %v62 = vadd.f32 %v39, %v58
  %v63 = vadd.f32 %v40, %v58
  %v64 = vadd.f32 %v41, %v58
  %v65 = vadd.f32 %v42, %v58
  %v66 = vadd.f32 %v43, %v58
  %v67 = vadd.f32 %v44, %v58
  %v68 = vadd.f32 %v45, %v58
  %v69 = vadd.f32 %v46, %v58
  %v70 = vadd.f32 %v47, %v58
  %v71 = vadd.f32 %v48, %v58
  %v72 = vadd.f32 %v49, %v58
  %v73 = vadd.f32 %v50, %v58
  %v74 = vadd.f32 %v51, %v58
  %v75 = vadd.f32 %v52, %v58
  %v76 = vmax.f32 %v60, 0.0
  %v77 = vmax.f32 %v61, 0.0
  %v78 = vmax.f32 %v62, 0.0
  %v79 = vmax.f32 %v63, 0.0
  %v80 = vmax.f32 %v64, 0.0
  %v81 = vmax.f32 %v65, 0.0
  %v82 = vmax.f32 %v66, 0.0
  %v83 = vmax.f32 %v67, 0.0
  %v84 = vmax.f32 %v68, 0.0
  %v85 = vmax.f32 %v69, 0.0
  %v86 = vmax.f32 %v70, 0.0
  %v87 = vmax.f32 %v71, 0.0
  %v88 = vmax.f32 %v72, 0.0
  %v89 = vmax.f32 %v73, 0.0
  %v90 = vmax.f32 %v74, 0.0
  %v91 = vmax.f32 %v75, 0.0
  %92 = vst [vmem:[%s3] sm:$0xff] %v76
  %93 = vst [vmem:[%s3 + $0x8] sm:$0xff] %v77
  %94 = vst [vmem:[%s3 + $0x10] sm:$0xff] %v78
  %95 = vst [vmem:[%s3 + $0x18] sm:$0xff] %v79
  %96 = vst [vmem:[%s3 + $0x20] sm:$0xff] %v80
  %97 = vst [vmem:[%s3 + $0x28] sm:$0xff] %v81
  %98 = vst [vmem:[%s3 + $0x30] sm:$0xff] %v82
  %99 = vst [vmem:[%s3 + $0x38] sm:$0xff] %v83
  %100 = vst [vmem:[%s3 + $0x40] sm:$0xff] %v84
  %101 = vst [vmem:[%s3 + $0x48] sm:$0xff] %v85
  %102 = vst [vmem:[%s3 + $0x50] sm:$0xff] %v86
  %103 = vst [vmem:[%s3 + $0x58] sm:$0xff] %v87
  %104 = vst [vmem:[%s3 + $0x60] sm:$0xff] %v88
  %105 = vst [vmem:[%s3 + $0x68] sm:$0xff] %v89
  %106 = vst [vmem:[%s3 + $0x70] sm:$0xff] %v90
  %107 = vst [vmem:[%s3 + $0x78] sm:$0xff] %v91
  // Predicated region
  $region14: #{simple_block_forward.11} parent=0 // pred_check
    _
  $region15: #{simple_block_forward.11} parent=0 // pred_check_branch
    %109 = sbr.rel (0) target = $region17
  $region16: #{simple_block_forward.11} parent=0 // pred_region
    _
  $region17: #{simple_block_forward.11} parent=0 // pred_fallthru
    _
  // Predicated region
  $region18: #{simple_block_forward.11} parent=0 // pred_check
    _
  $region19: #{simple_block_forward.11} parent=0 // pred_check_branch
    %111 = sbr.rel (0) target = $region21
  $region20: #{simple_block_forward.11} parent=0 // pred_region
    _
  $region21: #{simple_block_forward.11} parent=0 // pred_fallthru
    _

// kernel: simple_block_forward.10
$region0: #{simple_block_forward.10}
  #allocation0 [shape = 'u32[]', space=smem, size = 0x4, offset = 0x4, fixed_abs, tag = 'smem constant byte address 0x4 - core index']
  #allocation1 [shape = 'u32[144,128]{1,0:T(1,128)}', space=vmem, size = 0x12000, scoped, tag = 'internal scratch']
  %s0 = inlined_call_operand.vmem [shape: f32[128,128], index: 0, kind: input, shape index: {}]
  %s1 = inlined_call_operand.vmem [shape: f32[1,128], index: 1, kind: output, shape index: {0}]
  %s2 = inlined_call_operand.vmem [shape: f32[1,128], index: 2, kind: output, shape index: {1}]
  %3 = xla_tuple %s1, %s2
  %s4 = sld [smem:[#allocation0]]
  $region26: #{simple_block_forward.10} parent=0
    _
  %s6 = ssub.s32 1, %s4
  %s7 = scalar_select 0, %s6, %s4
  // Predicated region
  $region2: #{simple_block_forward.10} parent=0 // pred_check
    _
  $region3: #{simple_block_forward.10} parent=0 // pred_check_branch
    %9 = sbr.rel (0) target = $region5
  $region4: #{simple_block_forward.10} parent=0 // pred_region
    _
  $region5: #{simple_block_forward.10} parent=0 // pred_fallthru
    _
  %p10 = scmp.eq.s32.totalorder 0, 0
  // Predicated region
  $region6: #{simple_block_forward.10} parent=0 // pred_check
    %p11 = pneg %p10
  $region7: #{simple_block_forward.10} parent=0 // pred_check_branch
    %13 = sbr.rel (%p11) target = $region9
  $region8: #{simple_block_forward.10} parent=0 // pred_region
    %14 = vst [vmem:[%s1] sm:$0x1] 0.0
    %15 = vst [vmem:[%s2] sm:$0x1] 0.0
  $region9: #{simple_block_forward.10} parent=0 // pred_fallthru
    _
  %v16 = vlaneseq
  %v17 = vshrl.u32 %v16, 7
  %v18 = vadd.s32 %v17, 8
  %v19 = vadd.s32 %v17, 16
  %v20 = vadd.s32 %v17, 24
  %v21 = vadd.s32 %v17, 32
  %v22 = vadd.s32 %v17, 40
  %v23 = vadd.s32 %v17, 48
  %v24 = vadd.s32 %v17, 56
  %v25 = vadd.s32 %v17, 64
  %v26 = vadd.s32 %v17, 72
  %v27 = vadd.s32 %v17, 80
  %v28 = vadd.s32 %v17, 88
  %v29 = vadd.s32 %v17, 96
  %v30 = vadd.s32 %v17, 104
  %v31 = vadd.s32 %v17, 112
  %v32 = vadd.s32 %v17, 120
  %s33 = smul.u32 0, 128
  %v34 = vstv %s33
  %v35 = vadd.s32 %v17, %v34
  %v36 = vadd.s32 %v18, %v34
  %v37 = vadd.s32 %v19, %v34
  %v38 = vadd.s32 %v20, %v34
  %v39 = vadd.s32 %v21, %v34
  %v40 = vadd.s32 %v22, %v34
  %v41 = vadd.s32 %v23, %v34
  %v42 = vadd.s32 %v24, %v34
  %v43 = vadd.s32 %v25, %v34
  %v44 = vadd.s32 %v26, %v34
  %v45 = vadd.s32 %v27, %v34
  %v46 = vadd.s32 %v28, %v34
  %v47 = vadd.s32 %v29, %v34
  %v48 = vadd.s32 %v30, %v34
  %v49 = vadd.s32 %v31, %v34
  %v50 = vadd.s32 %v32, %v34
  %vm51 = vcmp.lt.s32.totalorder %v35, 128
  %vm52 = vcmp.lt.s32.totalorder %v36, 128
  %vm53 = vcmp.lt.s32.totalorder %v37, 128
  %vm54 = vcmp.lt.s32.totalorder %v38, 128
  %vm55 = vcmp.lt.s32.totalorder %v39, 128
  %vm56 = vcmp.lt.s32.totalorder %v40, 128
  %vm57 = vcmp.lt.s32.totalorder %v41, 128
  %vm58 = vcmp.lt.s32.totalorder %v42, 128
  %vm59 = vcmp.lt.s32.totalorder %v43, 128
  %vm60 = vcmp.lt.s32.totalorder %v44, 128
  %vm61 = vcmp.lt.s32.totalorder %v45, 128
  %vm62 = vcmp.lt.s32.totalorder %v46, 128
  %vm63 = vcmp.lt.s32.totalorder %v47, 128
  %vm64 = vcmp.lt.s32.totalorder %v48, 128
  %vm65 = vcmp.lt.s32.totalorder %v49, 128
  %vm66 = vcmp.lt.s32.totalorder %v50, 128
  %v67 = vld [vmem:[%s0] sm:$0xff]
  %v68 = vld [vmem:[%s0 + $0x8] sm:$0xff]
  %v69 = vld [vmem:[%s0 + $0x10] sm:$0xff]
  %v70 = vld [vmem:[%s0 + $0x18] sm:$0xff]
  %v71 = vld [vmem:[%s0 + $0x20] sm:$0xff]
  %v72 = vld [vmem:[%s0 + $0x28] sm:$0xff]
  %v73 = vld [vmem:[%s0 + $0x30] sm:$0xff]
  %v74 = vld [vmem:[%s0 + $0x38] sm:$0xff]
  %v75 = vld [vmem:[%s0 + $0x40] sm:$0xff]
  %v76 = vld [vmem:[%s0 + $0x48] sm:$0xff]
  %v77 = vld [vmem:[%s0 + $0x50] sm:$0xff]
  %v78 = vld [vmem:[%s0 + $0x58] sm:$0xff]
  %v79 = vld [vmem:[%s0 + $0x60] sm:$0xff]
  %v80 = vld [vmem:[%s0 + $0x68] sm:$0xff]
  %v81 = vld [vmem:[%s0 + $0x70] sm:$0xff]
  %v82 = vld [vmem:[%s0 + $0x78] sm:$0xff]
  %v83 = vsel %vm51, %v67, 0.0
  %v84 = vsel %vm52, %v68, 0.0
  %v85 = vsel %vm53, %v69, 0.0
  %v86 = vsel %vm54, %v70, 0.0
  %v87 = vsel %vm55, %v71, 0.0
  %v88 = vsel %vm56, %v72, 0.0
  %v89 = vsel %vm57, %v73, 0.0
  %v90 = vsel %vm58, %v74, 0.0
  %v91 = vsel %vm59, %v75, 0.0
  %v92 = vsel %vm60, %v76, 0.0
  %v93 = vsel %vm61, %v77, 0.0
  %v94 = vsel %vm62, %v78, 0.0
  %v95 = vsel %vm63, %v79, 0.0
  %v96 = vsel %vm64, %v80, 0.0
  %v97 = vsel %vm65, %v81, 0.0
  %v98 = vsel %vm66, %v82, 0.0
  %v99 = vld [vmem:[%s1] sm:$0x1]
  %v100 = vadd.f32 %v83, %v84
  %v101 = vadd.f32 %v100, %v85
  %v102 = vadd.f32 %v101, %v86
  %v103 = vadd.f32 %v102, %v87
  %v104 = vadd.f32 %v103, %v88
  %v105 = vadd.f32 %v104, %v89
  %v106 = vadd.f32 %v105, %v90
  %v107 = vadd.f32 %v106, %v91
  %v108 = vadd.f32 %v107, %v92
  %v109 = vadd.f32 %v108, %v93
  %v110 = vadd.f32 %v109, %v94
  %v111 = vadd.f32 %v110, %v95
  %v112 = vadd.f32 %v111, %v96
  %v113 = vadd.f32 %v112, %v97
  %v114 = vadd.f32 %v113, %v98
  %v115 = vrot.slane %v114, 4
  %v116 = vadd.f32 %v114, %v115
  %v117 = vrot.slane %v116, 2
  %v118 = vadd.f32 %v116, %v117
  %v119 = vrot.slane %v118, 1
  %v120 = vadd.f32 %v118, %v119
  %v121 = vadd.f32 %v99, %v120
  %122 = vst [vmem:[%s1] sm:$0x1] %v121
  %v123 = vld [vmem:[%s2] sm:$0x1]
  %v124 = vmul.f32 %v83, %v83
  %v125 = vmul.f32 %v84, %v84
  %v126 = vmul.f32 %v85, %v85
  %v127 = vmul.f32 %v86, %v86
  %v128 = vmul.f32 %v87, %v87
  %v129 = vmul.f32 %v88, %v88
  %v130 = vmul.f32 %v89, %v89
  %v131 = vmul.f32 %v90, %v90
  %v132 = vmul.f32 %v91, %v91
  %v133 = vmul.f32 %v92, %v92
  %v134 = vmul.f32 %v93, %v93
  %v135 = vmul.f32 %v94, %v94
  %v136 = vmul.f32 %v95, %v95
  %v137 = vmul.f32 %v96, %v96
  %v138 = vmul.f32 %v97, %v97
  %v139 = vmul.f32 %v98, %v98
  %v140 = vadd.f32 %v124, %v125
  %v141 = vadd.f32 %v140, %v126
  %v142 = vadd.f32 %v141, %v127
  %v143 = vadd.f32 %v142, %v128
  %v144 = vadd.f32 %v143, %v129
  %v145 = vadd.f32 %v144, %v130
  %v146 = vadd.f32 %v145, %v131
  %v147 = vadd.f32 %v146, %v132
  %v148 = vadd.f32 %v147, %v133
  %v149 = vadd.f32 %v148, %v134
  %v150 = vadd.f32 %v149, %v135
  %v151 = vadd.f32 %v150, %v136
  %v152 = vadd.f32 %v151, %v137
  %v153 = vadd.f32 %v152, %v138
  %v154 = vadd.f32 %v153, %v139
  %v155 = vrot.slane %v154, 4
  %v156 = vadd.f32 %v154, %v155
  %v157 = vrot.slane %v156, 2
  %v158 = vadd.f32 %v156, %v157
  %v159 = vrot.slane %v158, 1
  %v160 = vadd.f32 %v158, %v159
  %v161 = vadd.f32 %v123, %v160
  %162 = vst [vmem:[%s2] sm:$0x1] %v161
  // Predicated region
  $region10: #{simple_block_forward.10} parent=0 // pred_check
    _
  $region11: #{simple_block_forward.10} parent=0 // pred_check_branch
    %164 = sbr.rel (0) target = $region13
  $region12: #{simple_block_forward.10} parent=0 // pred_region
    _
  $region13: #{simple_block_forward.10} parent=0 // pred_fallthru
    _
  // Predicated region
  $region14: #{simple_block_forward.10} parent=0 // pred_check
    _
  $region15: #{simple_block_forward.10} parent=0 // pred_check_branch
    %166 = sbr.rel (0) target = $region17
  $region16: #{simple_block_forward.10} parent=0 // pred_region
    _
  $region17: #{simple_block_forward.10} parent=0 // pred_fallthru
    _
  // Predicated region
  $region18: #{simple_block_forward.10} parent=0 // pred_check
    _
  $region19: #{simple_block_forward.10} parent=0 // pred_check_branch
    %168 = sbr.rel (0) target = $region21
  $region20: #{simple_block_forward.10} parent=0 // pred_region
    _
  $region21: #{simple_block_forward.10} parent=0 // pred_fallthru
    _
  // Predicated region
  $region22: #{simple_block_forward.10} parent=0 // pred_check
    _
  $region23: #{simple_block_forward.10} parent=0 // pred_check_branch
    %170 = sbr.rel (0) target = $region25
  $region24: #{simple_block_forward.10} parent=0 // pred_region
    _
  $region25: #{simple_block_forward.10} parent=0 // pred_fallthru
    _

// kernel: simple_block_forward.9
$region0: #{simple_block_forward.9}
  #allocation0 [shape = 'u32[]', space=smem, size = 0x4, offset = 0x4, fixed_abs, tag = 'smem constant byte address 0x4 - core index']
  #allocation1 [shape = 'u32[144,128]{1,0:T(1,128)}', space=vmem, size = 0x12000, scoped, tag = 'internal scratch']
  %s0 = inlined_call_operand.vmem [shape: f32[2,36,9,64], index: 0, kind: input, shape index: {}]
  %s1 = inlined_call_operand.vmem [shape: bf16[3,3,64,128], index: 1, kind: input, shape index: {}]
  %s2 = inlined_call_operand.vmem [shape: f32[2,64,128], index: 2, kind: output, shape index: {}]
  %s3 = sld [smem:[#allocation0]]
  $region41: #{simple_block_forward.9} parent=0
    _
  %s5 = ssub.s32 1, %s3
  %s6 = scalar_select 0, %s5, %s3
  loop: start=0, step=1, limit=4
  $region2: #{simple_block_forward.9} parent=0 // loop_pre_header
    _
  $region3: #{simple_block_forward.9} parent=0 // loop_header
    %s8 = sphi 0, %s12
    %p9 = scmp.ge.s32.totalorder %s8, 4
    %s18 = sphi 0, %s20
    %s21 = sphi 0, %s18
    %s22 = sphi 0, %s21
    %s38 = sphi 0, %s22
    %s42 = sphi 0, %s42
    %s44 = sphi 0, %s42
    %s45 = sphi 0, %s44
    %s59 = sphi 0, %s45
    %s65 = sphi 0, %s67
    %s68 = sphi 0, %s65
    %s69 = sphi 0, %s68
    %s85 = sphi 0, %s69
  $region4: #{simple_block_forward.9} parent=0 // loop_header_branch
    %11 = sbr.rel (%p9) target = $region8
  $region5: #{simple_block_forward.9} parent=0 // loop_body
    %s13 = ssub.s32 %s8, 1
    %s14 = ssub.s32 %s8, 2
    %s15 = sadd.s32 %s8, 1
    %s16 = ssub.s32 %s8, %s15
    %p17 = scmp.eq.s32.totalorder %s16, 0
    %s19 = sadd.s32 %s18, 1
    %s20 = scalar_select %p17, %s18, %s19
    %p23 = pneg %p17
    %p24 = scmp.eq.s32.totalorder %s8, 1
    %p25 = por %p23, %p24
    %p26 = scmp.ne.s32.totalorder %s18, %s21
    %p27 = scmp.eq.s32.totalorder %s8, 0
    %p28 = por %p26, %p27
    %p29 = scmp.ne.s32.totalorder %s18, %s21
    %p30 = scmp.eq.s32.totalorder %s13, 1
    %p31 = por %p29, %p30
    %p32 = scmp.ne.s32.totalorder %s21, %s22
    %p33 = scmp.eq.s32.totalorder %s13, 0
    %p34 = por %p32, %p33
    %p35 = scmp.ne.s32.totalorder %s21, %s22
    %p36 = scmp.eq.s32.totalorder %s14, 1
    %p37 = por %p35, %p36
    %p39 = scmp.ne.s32.totalorder %s22, %s38
    %p40 = scmp.eq.s32.totalorder %s14, 0
    %p41 = por %p39, %p40
    %s43 = sadd.s32 %s42, 1
    %p46 = scmp.eq.s32.totalorder %s8, 1
    %p47 = scmp.ne.s32.totalorder %s42, %s44
    %p48 = scmp.eq.s32.totalorder %s8, 0
    %p49 = por %p47, %p48
    %p50 = scmp.ne.s32.totalorder %s42, %s44
    %p51 = scmp.eq.s32.totalorder %s13, 1
    %p52 = por %p50, %p51
    %p53 = scmp.ne.s32.totalorder %s44, %s45
    %p54 = scmp.eq.s32.totalorder %s13, 0
    %p55 = por %p53, %p54
    %p56 = scmp.ne.s32.totalorder %s44, %s45
    %p57 = scmp.eq.s32.totalorder %s14, 1
    %p58 = por %p56, %p57
    %p60 = scmp.ne.s32.totalorder %s45, %s59
    %p61 = scmp.eq.s32.totalorder %s14, 0
    %p62 = por %p60, %p61
    %s63 = ssub.s32 %s8, %s15
    %p64 = scmp.eq.s32.totalorder %s63, 0
    %s66 = sadd.s32 %s65, 1
    %s67 = scalar_select %p64, %s65, %s66
    %p70 = pneg %p64
    %p71 = scmp.eq.s32.totalorder %s8, 1
    %p72 = por %p70, %p71
    %p73 = scmp.ne.s32.totalorder %s65, %s68
    %p74 = scmp.eq.s32.totalorder %s8, 0
    %p75 = por %p73, %p74
    %p76 = scmp.ne.s32.totalorder %s65, %s68
    %p77 = scmp.eq.s32.totalorder %s13, 1
    %p78 = por %p76, %p77
    %p79 = scmp.ne.s32.totalorder %s68, %s69
    %p80 = scmp.eq.s32.totalorder %s13, 0
    %p81 = por %p79, %p80
    %p82 = scmp.ne.s32.totalorder %s68, %s69
    %p83 = scmp.eq.s32.totalorder %s14, 1
    %p84 = por %p82, %p83
    %p86 = scmp.ne.s32.totalorder %s69, %s85
    %p87 = scmp.eq.s32.totalorder %s14, 0
    %p88 = por %p86, %p87
    %p89 = scmp.le.s32.totalorder 1, %s8
    %p90 = scmp.lt.s32.totalorder %s8, 3
    %p91 = pnand %p89, %p90
    %p92 = pneg %p91
    // Predicated region
    $region9: #{simple_block_forward.9} parent=5 // pred_check
      _
    $region10: #{simple_block_forward.9} parent=5 // pred_check_branch
      %94 = sbr.rel (%p91) target = $region12
    $region11: #{simple_block_forward.9} parent=5 // pred_region
      %s95 = ssub.s32 %s8, 1
      // Predicated region
      $region13: #{simple_block_forward.9} parent=11 // pred_check
        %p96 = pneg %p55
      $region14: #{simple_block_forward.9} parent=11 // pred_check_branch
        %98 = sbr.rel (%p96) target = $region16
      $region15: #{simple_block_forward.9} parent=11 // pred_region
        _
      $region16: #{simple_block_forward.9} parent=11 // pred_fallthru
        _
    $region12: #{simple_block_forward.9} parent=5 // pred_fallthru
      _
    %p99 = scmp.lt.s32.totalorder %s8, 2
    // Predicated region
    $region17: #{simple_block_forward.9} parent=5 // pred_check
      %p100 = pneg %p99
    $region18: #{simple_block_forward.9} parent=5 // pred_check_branch
      %102 = sbr.rel (%p100) target = $region20
    $region19: #{simple_block_forward.9} parent=5 // pred_region
      // Predicated region
      $region21: #{simple_block_forward.9} parent=19 // pred_check
        %p103 = pneg %p28
      $region22: #{simple_block_forward.9} parent=19 // pred_check_branch
        %105 = sbr.rel (%p103) target = $region24
      $region23: #{simple_block_forward.9} parent=19 // pred_region
        %p106 = scmp.lt.s32.totalorder %s8, 1
        %s107 = scalar_select %p106, %s8, 1
        %s108 = smul.addr %s107, 72
        %s109 = smul.addr %s108, 8
        %s110 = scalar_lea.vmem %s0, %s109
      $region24: #{simple_block_forward.9} parent=19 // pred_fallthru
        _
    $region20: #{simple_block_forward.9} parent=5 // pred_fallthru
      _
    %p111 = scmp.le.s32.totalorder 1, %s8
    %p112 = scmp.lt.s32.totalorder %s8, 3
    %p113 = pnand %p111, %p112
    %p114 = pneg %p113
    // Predicated region
    $region25: #{simple_block_forward.9} parent=5 // pred_check
      _
    $region26: #{simple_block_forward.9} parent=5 // pred_check_branch
      %116 = sbr.rel (%p113) target = $region28
    $region27: #{simple_block_forward.9} parent=5 // pred_region
      %s117 = ssub.s32 %s8, 1
      %p118 = scmp.lt.s32.totalorder %s13, 1
      %s119 = scalar_select %p118, %s13, 1
      %s120 = smul.addr %s119, 72
      %s121 = smul.addr %s120, 8
      %s122 = scalar_lea.vmem %s0, %s121
      %p123 = pneg %p34
      %p124 = pneg %p31
      %p125 = pneg %p55
      %p126 = pneg %p52
      %p127 = pneg %p81
      %p128 = pneg %p78
      %p129 = scmp.lt.s32.totalorder %s13, 1
      %s130 = scalar_select %p129, %s13, 1
      %s131 = smul.addr %s130, 8
      %s132 = smul.addr %s131, 8
      %s133 = scalar_lea.vmem %s2, %s132
      %p134 = scmp.lt.s32.totalorder %s13, 1
      %s135 = scalar_select %p134, %s13, 1
      %s136 = smul.addr %s135, 72
      %s137 = smul.addr %s136, 8
      %s138 = scalar_lea.vmem %s0, %s137
      %p139 = scmp.lt.s32.totalorder %s13, 1
      %s140 = scalar_select %p139, %s13, 1
      %s141 = smul.addr %s140, 8
      %s142 = smul.addr %s141, 8
      %s143 = scalar_lea.vmem %s2, %s142
      %v145 = vld [vmem:[%s138] sm:$0xff]
      %v146 = vld [vmem:[%s138 + $0x10] sm:$0xff]
      %v147 = vld [vmem:[%s138 + $0x20] sm:$0xff]
      %v148 = vld [vmem:[%s138 + $0x30] sm:$0xff]
      %v149 = vld [vmem:[%s138 + $0x40] sm:$0xff]
      %v150 = vld [vmem:[%s138 + $0x50] sm:$0xff]
      %v151 = vld [vmem:[%s138 + $0x60] sm:$0xff]
      %v152 = vld [vmem:[%s138 + $0x70] sm:$0xff]
      %v153 = vpack.c.bf16 %v146, %v145
      %v154 = vpack.c.bf16 %v148, %v147
      %v155 = vpack.c.bf16 %v150, %v149
      %v156 = vpack.c.bf16 %v152, %v151
      %v157 = vld [vmem:[%s1] sm:$0xf]
      %v158 = vld [vmem:[%s1 + $0x4] sm:$0xf]
      %v159 = vld [vmem:[%s1 + $0x8] sm:$0xf]
      %v160 = vld [vmem:[%s1 + $0xc] sm:$0xf]
      %v161 = vld [vmem:[%s1 + $0x10] sm:$0xf]
      %v162 = vld [vmem:[%s1 + $0x14] sm:$0xf]
      %v163 = vld [vmem:[%s1 + $0x18] sm:$0xf]
      %v164 = vld [vmem:[%s1 + $0x1c] sm:$0xf]
      %s165 = scalar_lea.vmem %s138, 144
      %v166 = vld [vmem:[%s165] sm:$0xff]
      %v167 = vld [vmem:[%s165 + $0x10] sm:$0xff]
      %v168 = vld [vmem:[%s165 + $0x20] sm:$0xff]
      %v169 = vld [vmem:[%s165 + $0x30] sm:$0xff]
      %v170 = vld [vmem:[%s165 + $0x40] sm:$0xff]
      %v171 = vld [vmem:[%s165 + $0x50] sm:$0xff]
      %v172 = vld [vmem:[%s165 + $0x60] sm:$0xff]
      %v173 = vld [vmem:[%s165 + $0x70] sm:$0xff]
      %v174 = vpack.c.bf16 %v167, %v166
      %v175 = vpack.c.bf16 %v169, %v168
      %v176 = vpack.c.bf16 %v171, %v170
      %v177 = vpack.c.bf16 %v173, %v172
      %s178 = scalar_lea.vmem %s1, 32
      %v179 = vld [vmem:[%s178] sm:$0xf]
      %v180 = vld [vmem:[%s178 + $0x4] sm:$0xf]
      %v181 = vld [vmem:[%s178 + $0x8] sm:$0xf]
      %v182 = vld [vmem:[%s178 + $0xc] sm:$0xf]
      %v183 = vld [vmem:[%s178 + $0x10] sm:$0xf]
      %v184 = vld [vmem:[%s178 + $0x14] sm:$0xf]
      %v185 = vld [vmem:[%s178 + $0x18] sm:$0xf]
      %v186 = vld [vmem:[%s178 + $0x1c] sm:$0xf]
      %v195 = vunpack.c.l.b16 %v179
      %v196 = vunpack.c.l.b16 %v180
      %v197 = vunpack.c.l.b16 %v181
      %v198 = vunpack.c.l.b16 %v182
      %v199 = vunpack.c.l.b16 %v183
      %v200 = vunpack.c.l.b16 %v184
      %v201 = vunpack.c.l.b16 %v185
      %v202 = vunpack.c.l.b16 %v186
      %v203 = vpack.c.b16 %v196, %v195
      %v204 = vpack.c.b16 %v198, %v197
      %v205 = vpack.c.b16 %v200, %v199
      %v206 = vpack.c.b16 %v202, %v201
      %vm211 = vcmask 523264
      %v213 = vsel %vm211, %v174, 0
      %v216 = vsel %vm211, %v175, 0
      %v219 = vsel %vm211, %v176, 0
      %v222 = vsel %vm211, %v177, 0
      %224 = vmatprep.subr.bf16.mxu0 0
      %225 = vmatpush1.bf16.msra.mxu0 0
      %226 = vmatprep.subr.bf16.mxu0 0
      %227 = vmatpush1.bf16.msra.mxu0 0
      %228 = vmatprep.subr.bf16.mxu0 0
      %229 = vmatpush1.bf16.msra.mxu0 0
      %230 = vmatprep.subr.bf16.mxu0 0
      %231 = vmatpush1.bf16.msra.mxu0 0
      %232 = vmatprep.subr.bf16.mxu0 0
      %233 = vmatpush1.bf16.msra.mxu0 %v206
      %234 = vmatprep.subr.bf16.mxu0 0
      %235 = vmatpush1.bf16.msra.mxu0 %v205
      %236 = vmatprep.subr.bf16.mxu0 0
      %237 = vmatpush1.bf16.msra.mxu0 %v204
      %238 = vmatprep.subr.bf16.mxu0 0
      %239 = vmatpush1.bf16.msra.mxu0 %v203
      %240 = vmatprep.subr.bf16.mxu0 0
      %241 = vmatpush2.bf16.msra.mxu0 0
      %242 = vmatprep.subr.bf16.mxu0 0
      %243 = vmatpush2.bf16.msra.mxu0 0
      %244 = vmatprep.subr.bf16.mxu0 0
      %245 = vmatpush2.bf16.msra.mxu0 0
      %246 = vmatprep.subr.bf16.mxu0 0
      %247 = vmatpush2.bf16.msra.mxu0 0
      %248 = vmatprep.subr.bf16.mxu0 0
      %249 = vmatpush2.bf16.msra.mxu0 0
      %250 = vmatprep.subr.bf16.mxu0 0
      %251 = vmatpush2.bf16.msra.mxu0 0
      %252 = vmatprep.subr.bf16.mxu0 0
      %253 = vmatpush2.bf16.msra.mxu0 0
      %254 = vmatprep.subr.bf16.mxu0 0
      %255 = vmatpush2.bf16.msra.mxu0 0
      %256 = vmatprep.mubr.bf16.mxu0 0
      %257 = vmatmul.mubr.bf16.gmra.mxu0 %v213
      %v258 = vpop.f32.mrf.mxu0
      %v259 = vadd.f32 0.0, %v258
      %v260 = vpop.f32.mrf.mxu0
      %v261 = vpop.f32.mrf.mxu0
      %v262 = vadd.f32 0.0, %v261
      %v263 = vpop.f32.mrf.mxu0
      %264 = vmatprep.mubr.bf16.mxu0 0
      %265 = vmatmul.mubr.bf16.gmra.mxu0 %v216
      %v266 = vpop.f32.mrf.mxu0
      %v267 = vadd.f32 0.0, %v266
      %v268 = vpop.f32.mrf.mxu0
      %v269 = vpop.f32.mrf.mxu0
      %v270 = vadd.f32 0.0, %v269
      %v271 = vpop.f32.mrf.mxu0
      %272 = vmatprep.mubr.bf16.mxu0 0
      %273 = vmatmul.mubr.bf16.gmra.mxu0 %v219
      %v274 = vpop.f32.mrf.mxu0
      %v275 = vadd.f32 0.0, %v274
      %v276 = vpop.f32.mrf.mxu0
      %v277 = vpop.f32.mrf.mxu0
      %v278 = vadd.f32 0.0, %v277
      %v279 = vpop.f32.mrf.mxu0
      %280 = vmatprep.mubr.bf16.mxu0 0
      %281 = vmatmul.mubr.bf16.gmra.mxu0 %v222
      %v282 = vpop.f32.mrf.mxu0
      %v283 = vadd.f32 0.0, %v282
      %v284 = vpop.f32.mrf.mxu0
      %v285 = vpop.f32.mrf.mxu0
      %v286 = vadd.f32 0.0, %v285
      %v287 = vpop.f32.mrf.mxu0
      %288 = vdwg.mxu0
      %v297 = vunpack.c.l.b16 %v157
      %v298 = vunpack.c.l.b16 %v158
      %v299 = vunpack.c.l.b16 %v159
      %v300 = vunpack.c.l.b16 %v160
      %v301 = vunpack.c.l.b16 %v161
      %v302 = vunpack.c.l.b16 %v162
      %v303 = vunpack.c.l.b16 %v163
      %v304 = vunpack.c.l.b16 %v164
      %v305 = vpack.c.b16 %v298, %v297
      %v306 = vpack.c.b16 %v300, %v299
      %v307 = vpack.c.b16 %v302, %v301
      %v308 = vpack.c.b16 %v304, %v303
      %v314 = vsel %vm211, %v153, 0
      %v317 = vsel %vm211, %v154, 0
      %v320 = vsel %vm211, %v155, 0
      %v323 = vsel %vm211, %v156, 0
      %325 = vmatprep.subr.bf16.mxu0 0
      %326 = vmatpush1.bf16.msra.mxu0 0
      %327 = vmatprep.subr.bf16.mxu0 0
      %328 = vmatpush1.bf16.msra.mxu0 0
      %329 = vmatprep.subr.bf16.mxu0 0
      %330 = vmatpush1.bf16.msra.mxu0 0
      %331 = vmatprep.subr.bf16.mxu0 0
      %332 = vmatpush1.bf16.msra.mxu0 0
      %333 = vmatprep.subr.bf16.mxu0 0
      %334 = vmatpush1.bf16.msra.mxu0 %v308
      %335 = vmatprep.subr.bf16.mxu0 0
      %336 = vmatpush1.bf16.msra.mxu0 %v307
      %337 = vmatprep.subr.bf16.mxu0 0
      %338 = vmatpush1.bf16.msra.mxu0 %v306
      %339 = vmatprep.subr.bf16.mxu0 0
      %340 = vmatpush1.bf16.msra.mxu0 %v305
      %341 = vmatprep.subr.bf16.mxu0 0
      %342 = vmatpush2.bf16.msra.mxu0 0
      %343 = vmatprep.subr.bf16.mxu0 0
      %344 = vmatpush2.bf16.msra.mxu0 0
      %345 = vmatprep.subr.bf16.mxu0 0
      %346 = vmatpush2.bf16.msra.mxu0 0
      %347 = vmatprep.subr.bf16.mxu0 0
      %348 = vmatpush2.bf16.msra.mxu0 0
      %349 = vmatprep.subr.bf16.mxu0 0
      %350 = vmatpush2.bf16.msra.mxu0 0
      %351 = vmatprep.subr.bf16.mxu0 0
      %352 = vmatpush2.bf16.msra.mxu0 0
      %353 = vmatprep.subr.bf16.mxu0 0
      %354 = vmatpush2.bf16.msra.mxu0 0
      %355 = vmatprep.subr.bf16.mxu0 0
      %356 = vmatpush2.bf16.msra.mxu0 0
      %357 = vmatprep.mubr.bf16.mxu0 0
      %358 = vmatmul.mubr.bf16.gmra.mxu0 %v314
      %v359 = vpop.f32.mrf.mxu0
      %v360 = vadd.f32 %v259, %v359
      %v361 = vpop.f32.mrf.mxu0
      %v362 = vpop.f32.mrf.mxu0
      %v363 = vadd.f32 %v262, %v362
      %v364 = vpop.f32.mrf.mxu0
      %365 = vmatprep.mubr.bf16.mxu0 0
      %366 = vmatmul.mubr.bf16.gmra.mxu0 %v317
      %v367 = vpop.f32.mrf.mxu0
      %v368 = vadd.f32 %v267, %v367
      %v369 = vpop.f32.mrf.mxu0
      %v370 = vpop.f32.mrf.mxu0
      %v371 = vadd.f32 %v270, %v370
      %v372 = vpop.f32.mrf.mxu0
      %373 = vmatprep.mubr.bf16.mxu0 0
      %374 = vmatmul.mubr.bf16.gmra.mxu0 %v320
      %v375 = vpop.f32.mrf.mxu0
      %v376 = vadd.f32 %v275, %v375
      %v377 = vpop.f32.mrf.mxu0
      %v378 = vpop.f32.mrf.mxu0
      %v379 = vadd.f32 %v278, %v378
      %v380 = vpop.f32.mrf.mxu0
      %381 = vmatprep.mubr.bf16.mxu0 0
      %382 = vmatmul.mubr.bf16.gmra.mxu0 %v323
      %v383 = vpop.f32.mrf.mxu0
      %v384 = vadd.f32 %v283, %v383
      %v385 = vpop.f32.mrf.mxu0
      %v386 = vpop.f32.mrf.mxu0
      %v387 = vadd.f32 %v286, %v386
      %v388 = vpop.f32.mrf.mxu0
      %389 = vdwg.mxu0
      %v390 = vld [vmem:[%s138 + $0x1] sm:$0xff]
      %v391 = vld [vmem:[%s138 + $0x11] sm:$0xff]
      %v392 = vld [vmem:[%s138 + $0x21] sm:$0xff]
      %v393 = vld [vmem:[%s138 + $0x31] sm:$0xff]
      %v394 = vld [vmem:[%s138 + $0x41] sm:$0xff]
      %v395 = vld [vmem:[%s138 + $0x51] sm:$0xff]
      %v396 = vld [vmem:[%s138 + $0x61] sm:$0xff]
      %v397 = vld [vmem:[%s138 + $0x71] sm:$0xff]
      %v398 = vpack.c.bf16 %v391, %v390
      %v399 = vpack.c.bf16 %v393, %v392
      %v400 = vpack.c.bf16 %v395, %v394
      %v401 = vpack.c.bf16 %v397, %v396
      %s402 = scalar_lea.vmem %s1, 64
      %v403 = vld [vmem:[%s402] sm:$0xf]
      %v404 = vld [vmem:[%s402 + $0x4] sm:$0xf]
      %v405 = vld [vmem:[%s402 + $0x8] sm:$0xf]
      %v406 = vld [vmem:[%s402 + $0xc] sm:$0xf]
      %v407 = vld [vmem:[%s402 + $0x10] sm:$0xf]
      %v408 = vld [vmem:[%s402 + $0x14] sm:$0xf]
      %v409 = vld [vmem:[%s402 + $0x18] sm:$0xf]
      %v410 = vld [vmem:[%s402 + $0x1c] sm:$0xf]
      %v419 = vunpack.c.l.b16 %v403
      %v420 = vunpack.c.l.b16 %v404
      %v421 = vunpack.c.l.b16 %v405
      %v422 = vunpack.c.l.b16 %v406
      %v423 = vunpack.c.l.b16 %v407
      %v424 = vunpack.c.l.b16 %v408
      %v425 = vunpack.c.l.b16 %v409
      %v426 = vunpack.c.l.b16 %v410
      %v427 = vpack.c.b16 %v420, %v419
      %v428 = vpack.c.b16 %v422, %v421
      %v429 = vpack.c.b16 %v424, %v423
      %v430 = vpack.c.b16 %v426, %v425
      %v436 = vsel %vm211, %v398, 0
      %v439 = vsel %vm211, %v399, 0
      %v442 = vsel %vm211, %v400, 0
      %v445 = vsel %vm211, %v401, 0
      %447 = vmatprep.subr.bf16.mxu0 0
      %448 = vmatpush1.bf16.msra.mxu0 0
      %449 = vmatprep.subr.bf16.mxu0 0
      %450 = vmatpush1.bf16.msra.mxu0 0
      %451 = vmatprep.subr.bf16.mxu0 0
      %452 = vmatpush1.bf16.msra.mxu0 0
      %453 = vmatprep.subr.bf16.mxu0 0
      %454 = vmatpush1.bf16.msra.mxu0 0
      %455 = vmatprep.subr.bf16.mxu0 0
      %456 = vmatpush1.bf16.msra.mxu0 %v430
      %457 = vmatprep.subr.bf16.mxu0 0
      %458 = vmatpush1.bf16.msra.mxu0 %v429
      %459 = vmatprep.subr.bf16.mxu0 0
      %460 = vmatpush1.bf16.msra.mxu0 %v428
      %461 = vmatprep.subr.bf16.mxu0 0
      %462 = vmatpush1.bf16.msra.mxu0 %v427
      %463 = vmatprep.subr.bf16.mxu0 0
      %464 = vmatpush2.bf16.msra.mxu0 0
      %465 = vmatprep.subr.bf16.mxu0 0
      %466 = vmatpush2.bf16.msra.mxu0 0
      %467 = vmatprep.subr.bf16.mxu0 0
      %468 = vmatpush2.bf16.msra.mxu0 0
      %469 = vmatprep.subr.bf16.mxu0 0
      %470 = vmatpush2.bf16.msra.mxu0 0
      %471 = vmatprep.subr.bf16.mxu0 0
      %472 = vmatpush2.bf16.msra.mxu0 0
      %473 = vmatprep.subr.bf16.mxu0 0
      %474 = vmatpush2.bf16.msra.mxu0 0
      %475 = vmatprep.subr.bf16.mxu0 0
      %476 = vmatpush2.bf16.msra.mxu0 0
      %477 = vmatprep.subr.bf16.mxu0 0
      %478 = vmatpush2.bf16.msra.mxu0 0
      %479 = vmatprep.mubr.bf16.mxu0 0
      %480 = vmatmul.mubr.bf16.gmra.mxu0 %v436
      %v481 = vpop.f32.mrf.mxu0
      %v482 = vadd.f32 0.0, %v481
      %v483 = vpop.f32.mrf.mxu0
      %v484 = vpop.f32.mrf.mxu0
      %v485 = vadd.f32 0.0, %v484
      %v486 = vpop.f32.mrf.mxu0
      %487 = vmatprep.mubr.bf16.mxu0 0
      %488 = vmatmul.mubr.bf16.gmra.mxu0 %v439
      %v489 = vpop.f32.mrf.mxu0
      %v490 = vadd.f32 0.0, %v489
      %v491 = vpop.f32.mrf.mxu0
      %v492 = vpop.f32.mrf.mxu0
      %v493 = vadd.f32 0.0, %v492
      %v494 = vpop.f32.mrf.mxu0
      %495 = vmatprep.mubr.bf16.mxu0 0
      %496 = vmatmul.mubr.bf16.gmra.mxu0 %v442
      %v497 = vpop.f32.mrf.mxu0
      %v498 = vadd.f32 0.0, %v497
      %v499 = vpop.f32.mrf.mxu0
      %v500 = vpop.f32.mrf.mxu0
      %v501 = vadd.f32 0.0, %v500
      %v502 = vpop.f32.mrf.mxu0
      %503 = vmatprep.mubr.bf16.mxu0 0
      %504 = vmatmul.mubr.bf16.gmra.mxu0 %v445
      %v505 = vpop.f32.mrf.mxu0
      %v506 = vadd.f32 0.0, %v505
      %v507 = vpop.f32.mrf.mxu0
      %v508 = vpop.f32.mrf.mxu0
      %v509 = vadd.f32 0.0, %v508
      %v510 = vpop.f32.mrf.mxu0
      %511 = vdwg.mxu0
      %v512 = vadd.f32 %v360, %v482
      %v513 = vadd.f32 %v363, %v485
      %v514 = vadd.f32 %v368, %v490
      %v515 = vadd.f32 %v371, %v493
      %v516 = vadd.f32 %v376, %v498
      %v517 = vadd.f32 %v379, %v501
      %v518 = vadd.f32 %v384, %v506
      %v519 = vadd.f32 %v387, %v509
      %s520 = scalar_lea.vmem %s138, 288
      %v521 = vld [vmem:[%s520] sm:$0xff]
      %v522 = vld [vmem:[%s520 + $0x10] sm:$0xff]
      %v523 = vld [vmem:[%s520 + $0x20] sm:$0xff]
      %v524 = vld [vmem:[%s520 + $0x30] sm:$0xff]
      %v525 = vld [vmem:[%s520 + $0x40] sm:$0xff]
      %v526 = vld [vmem:[%s520 + $0x50] sm:$0xff]
      %v527 = vld [vmem:[%s520 + $0x60] sm:$0xff]
      %v528 = vld [vmem:[%s520 + $0x70] sm:$0xff]
      %v529 = vpack.c.bf16 %v522, %v521
      %v530 = vpack.c.bf16 %v524, %v523
      %v531 = vpack.c.bf16 %v526, %v525
      %v532 = vpack.c.bf16 %v528, %v527
      %s533 = scalar_lea.vmem %s1, 96
      %v534 = vld [vmem:[%s533] sm:$0xf]
      %v535 = vld [vmem:[%s533 + $0x4] sm:$0xf]
      %v536 = vld [vmem:[%s533 + $0x8] sm:$0xf]
      %v537 = vld [vmem:[%s533 + $0xc] sm:$0xf]
      %v538 = vld [vmem:[%s533 + $0x10] sm:$0xf]
      %v539 = vld [vmem:[%s533 + $0x14] sm:$0xf]
      %v540 = vld [vmem:[%s533 + $0x18] sm:$0xf]
      %v541 = vld [vmem:[%s533 + $0x1c] sm:$0xf]
      %v550 = vunpack.c.l.b16 %v534
      %v551 = vunpack.c.l.b16 %v535
      %v552 = vunpack.c.l.b16 %v536
      %v553 = vunpack.c.l.b16 %v537
      %v554 = vunpack.c.l.b16 %v538
      %v555 = vunpack.c.l.b16 %v539
      %v556 = vunpack.c.l.b16 %v540
      %v557 = vunpack.c.l.b16 %v541
      %v558 = vpack.c.b16 %v551, %v550
      %v559 = vpack.c.b16 %v553, %v552
      %v560 = vpack.c.b16 %v555, %v554
      %v561 = vpack.c.b16 %v557, %v556
      %v567 = vsel %vm211, %v529, 0
      %v570 = vsel %vm211, %v530, 0
      %v573 = vsel %vm211, %v531, 0
      %v576 = vsel %vm211, %v532, 0
      %578 = vmatprep.subr.bf16.mxu0 0
      %579 = vmatpush1.bf16.msra.mxu0 0
      %580 = vmatprep.subr.bf16.mxu0 0
      %581 = vmatpush1.bf16.msra.mxu0 0
      %582 = vmatprep.subr.bf16.mxu0 0
      %583 = vmatpush1.bf16.msra.mxu0 0
      %584 = vmatprep.subr.bf16.mxu0 0
      %585 = vmatpush1.bf16.msra.mxu0 0
      %586 = vmatprep.subr.bf16.mxu0 0
      %587 = vmatpush1.bf16.msra.mxu0 %v561
      %588 = vmatprep.subr.bf16.mxu0 0
      %589 = vmatpush1.bf16.msra.mxu0 %v560
      %590 = vmatprep.subr.bf16.mxu0 0
      %591 = vmatpush1.bf16.msra.mxu0 %v559
      %592 = vmatprep.subr.bf16.mxu0 0
      %593 = vmatpush1.bf16.msra.mxu0 %v558
      %594 = vmatprep.subr.bf16.mxu0 0
      %595 = vmatpush2.bf16.msra.mxu0 0
      %596 = vmatprep.subr.bf16.mxu0 0
      %597 = vmatpush2.bf16.msra.mxu0 0
      %598 = vmatprep.subr.bf16.mxu0 0
      %599 = vmatpush2.bf16.msra.mxu0 0
      %600 = vmatprep.subr.bf16.mxu0 0
      %601 = vmatpush2.bf16.msra.mxu0 0
      %602 = vmatprep.subr.bf16.mxu0 0
      %603 = vmatpush2.bf16.msra.mxu0 0
      %604 = vmatprep.subr.bf16.mxu0 0
      %605 = vmatpush2.bf16.msra.mxu0 0
      %606 = vmatprep.subr.bf16.mxu0 0
      %607 = vmatpush2.bf16.msra.mxu0 0
      %608 = vmatprep.subr.bf16.mxu0 0
      %609 = vmatpush2.bf16.msra.mxu0 0
      %610 = vmatprep.mubr.bf16.mxu0 0
      %611 = vmatmul.mubr.bf16.gmra.mxu0 %v567
      %v612 = vpop.f32.mrf.mxu0
      %v613 = vadd.f32 0.0, %v612
      %v614 = vpop.f32.mrf.mxu0
      %v615 = vpop.f32.mrf.mxu0
      %v616 = vadd.f32 0.0, %v615
      %v617 = vpop.f32.mrf.mxu0
      %618 = vmatprep.mubr.bf16.mxu0 0
      %619 = vmatmul.mubr.bf16.gmra.mxu0 %v570
      %v620 = vpop.f32.mrf.mxu0
      %v621 = vadd.f32 0.0, %v620
      %v622 = vpop.f32.mrf.mxu0
      %v623 = vpop.f32.mrf.mxu0
      %v624 = vadd.f32 0.0, %v623
      %v625 = vpop.f32.mrf.mxu0
      %626 = vmatprep.mubr.bf16.mxu0 0
      %627 = vmatmul.mubr.bf16.gmra.mxu0 %v573
      %v628 = vpop.f32.mrf.mxu0
      %v629 = vadd.f32 0.0, %v628
      %v630 = vpop.f32.mrf.mxu0
      %v631 = vpop.f32.mrf.mxu0
      %v632 = vadd.f32 0.0, %v631
      %v633 = vpop.f32.mrf.mxu0
      %634 = vmatprep.mubr.bf16.mxu0 0
      %635 = vmatmul.mubr.bf16.gmra.mxu0 %v576
      %v636 = vpop.f32.mrf.mxu0
      %v637 = vadd.f32 0.0, %v636
      %v638 = vpop.f32.mrf.mxu0
      %v639 = vpop.f32.mrf.mxu0
      %v640 = vadd.f32 0.0, %v639
      %v641 = vpop.f32.mrf.mxu0
      %642 = vdwg.mxu0
      %v643 = vadd.f32 %v512, %v613
      %v644 = vadd.f32 %v513, %v616
      %v645 = vadd.f32 %v514, %v621
      %v646 = vadd.f32 %v515, %v624
      %v647 = vadd.f32 %v516, %v629
      %v648 = vadd.f32 %v517, %v632
      %v649 = vadd.f32 %v518, %v637
      %v650 = vadd.f32 %v519, %v640
      %s651 = scalar_lea.vmem %s138, 432
      %v652 = vld [vmem:[%s651] sm:$0xff]
      %v653 = vld [vmem:[%s651 + $0x10] sm:$0xff]
      %v654 = vld [vmem:[%s651 + $0x20] sm:$0xff]
      %v655 = vld [vmem:[%s651 + $0x30] sm:$0xff]
      %v656 = vld [vmem:[%s651 + $0x40] sm:$0xff]
      %v657 = vld [vmem:[%s651 + $0x50] sm:$0xff]
      %v658 = vld [vmem:[%s651 + $0x60] sm:$0xff]
      %v659 = vld [vmem:[%s651 + $0x70] sm:$0xff]
      %v660 = vpack.c.bf16 %v653, %v652
      %v661 = vpack.c.bf16 %v655, %v654
      %v662 = vpack.c.bf16 %v657, %v656
      %v663 = vpack.c.bf16 %v659, %v658
      %s664 = scalar_lea.vmem %s1, 128
      %v665 = vld [vmem:[%s664] sm:$0xf]
      %v666 = vld [vmem:[%s664 + $0x4] sm:$0xf]
      %v667 = vld [vmem:[%s664 + $0x8] sm:$0xf]
      %v668 = vld [vmem:[%s664 + $0xc] sm:$0xf]
      %v669 = vld [vmem:[%s664 + $0x10] sm:$0xf]
      %v670 = vld [vmem:[%s664 + $0x14] sm:$0xf]
      %v671 = vld [vmem:[%s664 + $0x18] sm:$0xf]
      %v672 = vld [vmem:[%s664 + $0x1c] sm:$0xf]
      %v681 = vunpack.c.l.b16 %v665
      %v682 = vunpack.c.l.b16 %v666
      %v683 = vunpack.c.l.b16 %v667
      %v684 = vunpack.c.l.b16 %v668
      %v685 = vunpack.c.l.b16 %v669
      %v686 = vunpack.c.l.b16 %v670
      %v687 = vunpack.c.l.b16 %v671
      %v688 = vunpack.c.l.b16 %v672
      %v689 = vpack.c.b16 %v682, %v681
      %v690 = vpack.c.b16 %v684, %v683
      %v691 = vpack.c.b16 %v686, %v685
      %v692 = vpack.c.b16 %v688, %v687
      %v698 = vsel %vm211, %v660, 0
      %v701 = vsel %vm211, %v661, 0
      %v704 = vsel %vm211, %v662, 0
      %v707 = vsel %vm211, %v663, 0
      %709 = vmatprep.subr.bf16.mxu0 0
      %710 = vmatpush1.bf16.msra.mxu0 0
      %711 = vmatprep.subr.bf16.mxu0 0
      %712 = vmatpush1.bf16.msra.mxu0 0
      %713 = vmatprep.subr.bf16.mxu0 0
      %714 = vmatpush1.bf16.msra.mxu0 0
      %715 = vmatprep.subr.bf16.mxu0 0
      %716 = vmatpush1.bf16.msra.mxu0 0
      %717 = vmatprep.subr.bf16.mxu0 0
      %718 = vmatpush1.bf16.msra.mxu0 %v692
      %719 = vmatprep.subr.bf16.mxu0 0
      %720 = vmatpush1.bf16.msra.mxu0 %v691
      %721 = vmatprep.subr.bf16.mxu0 0
      %722 = vmatpush1.bf16.msra.mxu0 %v690
      %723 = vmatprep.subr.bf16.mxu0 0
      %724 = vmatpush1.bf16.msra.mxu0 %v689
      %725 = vmatprep.subr.bf16.mxu0 0
      %726 = vmatpush2.bf16.msra.mxu0 0
      %727 = vmatprep.subr.bf16.mxu0 0
      %728 = vmatpush2.bf16.msra.mxu0 0
      %729 = vmatprep.subr.bf16.mxu0 0
      %730 = vmatpush2.bf16.msra.mxu0 0
      %731 = vmatprep.subr.bf16.mxu0 0
      %732 = vmatpush2.bf16.msra.mxu0 0
      %733 = vmatprep.subr.bf16.mxu0 0
      %734 = vmatpush2.bf16.msra.mxu0 0
      %735 = vmatprep.subr.bf16.mxu0 0
      %736 = vmatpush2.bf16.msra.mxu0 0
      %737 = vmatprep.subr.bf16.mxu0 0
      %738 = vmatpush2.bf16.msra.mxu0 0
      %739 = vmatprep.subr.bf16.mxu0 0
      %740 = vmatpush2.bf16.msra.mxu0 0
      %741 = vmatprep.mubr.bf16.mxu0 0
      %742 = vmatmul.mubr.bf16.gmra.mxu0 %v698
      %v743 = vpop.f32.mrf.mxu0
      %v744 = vadd.f32 0.0, %v743
      %v745 = vpop.f32.mrf.mxu0
      %v746 = vpop.f32.mrf.mxu0
      %v747 = vadd.f32 0.0, %v746
      %v748 = vpop.f32.mrf.mxu0
      %749 = vmatprep.mubr.bf16.mxu0 0
      %750 = vmatmul.mubr.bf16.gmra.mxu0 %v701
      %v751 = vpop.f32.mrf.mxu0
      %v752 = vadd.f32 0.0, %v751
      %v753 = vpop.f32.mrf.mxu0
      %v754 = vpop.f32.mrf.mxu0
      %v755 = vadd.f32 0.0, %v754
      %v756 = vpop.f32.mrf.mxu0
      %757 = vmatprep.mubr.bf16.mxu0 0
      %758 = vmatmul.mubr.bf16.gmra.mxu0 %v704
      %v759 = vpop.f32.mrf.mxu0
      %v760 = vadd.f32 0.0, %v759
      %v761 = vpop.f32.mrf.mxu0
      %v762 = vpop.f32.mrf.mxu0
      %v763 = vadd.f32 0.0, %v762
      %v764 = vpop.f32.mrf.mxu0
      %765 = vmatprep.mubr.bf16.mxu0 0
      %766 = vmatmul.mubr.bf16.gmra.mxu0 %v707
      %v767 = vpop.f32.mrf.mxu0
      %v768 = vadd.f32 0.0, %v767
      %v769 = vpop.f32.mrf.mxu0
      %v770 = vpop.f32.mrf.mxu0
      %v771 = vadd.f32 0.0, %v770
      %v772 = vpop.f32.mrf.mxu0
      %773 = vdwg.mxu0
      %v774 = vadd.f32 %v643, %v744
      %v775 = vadd.f32 %v644, %v747
      %v776 = vadd.f32 %v645, %v752
      %v777 = vadd.f32 %v646, %v755
      %v778 = vadd.f32 %v647, %v760
      %v779 = vadd.f32 %v648, %v763
      %v780 = vadd.f32 %v649, %v768
      %v781 = vadd.f32 %v650, %v771
      %v782 = vld [vmem:[%s520 + $0x1] sm:$0xff]
      %v783 = vld [vmem:[%s520 + $0x11] sm:$0xff]
      %v784 = vld [vmem:[%s520 + $0x21] sm:$0xff]
      %v785 = vld [vmem:[%s520 + $0x31] sm:$0xff]
      %v786 = vld [vmem:[%s520 + $0x41] sm:$0xff]
      %v787 = vld [vmem:[%s520 + $0x51] sm:$0xff]
      %v788 = vld [vmem:[%s520 + $0x61] sm:$0xff]
      %v789 = vld [vmem:[%s520 + $0x71] sm:$0xff]
      %v790 = vpack.c.bf16 %v783, %v782
      %v791 = vpack.c.bf16 %v785, %v784
      %v792 = vpack.c.bf16 %v787, %v786
      %v793 = vpack.c.bf16 %v789, %v788
      %s794 = scalar_lea.vmem %s1, 160
      %v795 = vld [vmem:[%s794] sm:$0xf]
      %v796 = vld [vmem:[%s794 + $0x4] sm:$0xf]
      %v797 = vld [vmem:[%s794 + $0x8] sm:$0xf]
      %v798 = vld [vmem:[%s794 + $0xc] sm:$0xf]
      %v799 = vld [vmem:[%s794 + $0x10] sm:$0xf]
      %v800 = vld [vmem:[%s794 + $0x14] sm:$0xf]
      %v801 = vld [vmem:[%s794 + $0x18] sm:$0xf]
      %v802 = vld [vmem:[%s794 + $0x1c] sm:$0xf]
      %v811 = vunpack.c.l.b16 %v795
      %v812 = vunpack.c.l.b16 %v796
      %v813 = vunpack.c.l.b16 %v797
      %v814 = vunpack.c.l.b16 %v798
      %v815 = vunpack.c.l.b16 %v799
      %v816 = vunpack.c.l.b16 %v800
      %v817 = vunpack.c.l.b16 %v801
      %v818 = vunpack.c.l.b16 %v802
      %v819 = vpack.c.b16 %v812, %v811
      %v820 = vpack.c.b16 %v814, %v813
      %v821 = vpack.c.b16 %v816, %v815
      %v822 = vpack.c.b16 %v818, %v817
      %v828 = vsel %vm211, %v790, 0
      %v831 = vsel %vm211, %v791, 0
      %v834 = vsel %vm211, %v792, 0
      %v837 = vsel %vm211, %v793, 0
      %839 = vmatprep.subr.bf16.mxu0 0
      %840 = vmatpush1.bf16.msra.mxu0 0
      %841 = vmatprep.subr.bf16.mxu0 0
      %842 = vmatpush1.bf16.msra.mxu0 0
      %843 = vmatprep.subr.bf16.mxu0 0
      %844 = vmatpush1.bf16.msra.mxu0 0
      %845 = vmatprep.subr.bf16.mxu0 0
      %846 = vmatpush1.bf16.msra.mxu0 0
      %847 = vmatprep.subr.bf16.mxu0 0
      %848 = vmatpush1.bf16.msra.mxu0 %v822
      %849 = vmatprep.subr.bf16.mxu0 0
      %850 = vmatpush1.bf16.msra.mxu0 %v821
      %851 = vmatprep.subr.bf16.mxu0 0
      %852 = vmatpush1.bf16.msra.mxu0 %v820
      %853 = vmatprep.subr.bf16.mxu0 0
      %854 = vmatpush1.bf16.msra.mxu0 %v819
      %855 = vmatprep.subr.bf16.mxu0 0
      %856 = vmatpush2.bf16.msra.mxu0 0
      %857 = vmatprep.subr.bf16.mxu0 0
      %858 = vmatpush2.bf16.msra.mxu0 0
      %859 = vmatprep.subr.bf16.mxu0 0
      %860 = vmatpush2.bf16.msra.mxu0 0
      %861 = vmatprep.subr.bf16.mxu0 0
      %862 = vmatpush2.bf16.msra.mxu0 0
      %863 = vmatprep.subr.bf16.mxu0 0
      %864 = vmatpush2.bf16.msra.mxu0 0
      %865 = vmatprep.subr.bf16.mxu0 0
      %866 = vmatpush2.bf16.msra.mxu0 0
      %867 = vmatprep.subr.bf16.mxu0 0
      %868 = vmatpush2.bf16.msra.mxu0 0
      %869 = vmatprep.subr.bf16.mxu0 0
      %870 = vmatpush2.bf16.msra.mxu0 0
      %871 = vmatprep.mubr.bf16.mxu0 0
      %872 = vmatmul.mubr.bf16.gmra.mxu0 %v828
      %v873 = vpop.f32.mrf.mxu0
      %v874 = vadd.f32 0.0, %v873
      %v875 = vpop.f32.mrf.mxu0
      %v876 = vpop.f32.mrf.mxu0
      %v877 = vadd.f32 0.0, %v876
      %v878 = vpop.f32.mrf.mxu0
      %879 = vmatprep.mubr.bf16.mxu0 0
      %880 = vmatmul.mubr.bf16.gmra.mxu0 %v831
      %v881 = vpop.f32.mrf.mxu0
      %v882 = vadd.f32 0.0, %v881
      %v883 = vpop.f32.mrf.mxu0
      %v884 = vpop.f32.mrf.mxu0
      %v885 = vadd.f32 0.0, %v884
      %v886 = vpop.f32.mrf.mxu0
      %887 = vmatprep.mubr.bf16.mxu0 0
      %888 = vmatmul.mubr.bf16.gmra.mxu0 %v834
      %v889 = vpop.f32.mrf.mxu0
      %v890 = vadd.f32 0.0, %v889
      %v891 = vpop.f32.mrf.mxu0
      %v892 = vpop.f32.mrf.mxu0
      %v893 = vadd.f32 0.0, %v892
      %v894 = vpop.f32.mrf.mxu0
      %895 = vmatprep.mubr.bf16.mxu0 0
      %896 = vmatmul.mubr.bf16.gmra.mxu0 %v837
      %v897 = vpop.f32.mrf.mxu0
      %v898 = vadd.f32 0.0, %v897
      %v899 = vpop.f32.mrf.mxu0
      %v900 = vpop.f32.mrf.mxu0
      %v901 = vadd.f32 0.0, %v900
      %v902 = vpop.f32.mrf.mxu0
      %903 = vdwg.mxu0
      %v904 = vadd.f32 %v774, %v874
      %v905 = vadd.f32 %v775, %v877
      %v906 = vadd.f32 %v776, %v882
      %v907 = vadd.f32 %v777, %v885
      %v908 = vadd.f32 %v778, %v890
      %v909 = vadd.f32 %v779, %v893
      %v910 = vadd.f32 %v780, %v898
      %v911 = vadd.f32 %v781, %v901
      %s912 = scalar_lea.vmem %s138, 16
      %v913 = vld [vmem:[%s912] sm:$0xff]
      %v914 = vld [vmem:[%s912 + $0x10] sm:$0xff]
      %v915 = vld [vmem:[%s912 + $0x20] sm:$0xff]
      %v916 = vld [vmem:[%s912 + $0x30] sm:$0xff]
      %v917 = vld [vmem:[%s912 + $0x40] sm:$0xff]
      %v918 = vld [vmem:[%s912 + $0x50] sm:$0xff]
      %v919 = vld [vmem:[%s912 + $0x60] sm:$0xff]
      %v920 = vld [vmem:[%s912 + $0x70] sm:$0xff]
      %v921 = vpack.c.bf16 %v914, %v913
      %v922 = vpack.c.bf16 %v916, %v915
      %v923 = vpack.c.bf16 %v918, %v917
      %v924 = vpack.c.bf16 %v920, %v919
      %s925 = scalar_lea.vmem %s1, 192
      %v926 = vld [vmem:[%s925] sm:$0xf]
      %v927 = vld [vmem:[%s925 + $0x4] sm:$0xf]
      %v928 = vld [vmem:[%s925 + $0x8] sm:$0xf]
      %v929 = vld [vmem:[%s925 + $0xc] sm:$0xf]
      %v930 = vld [vmem:[%s925 + $0x10] sm:$0xf]
      %v931 = vld [vmem:[%s925 + $0x14] sm:$0xf]
      %v932 = vld [vmem:[%s925 + $0x18] sm:$0xf]
      %v933 = vld [vmem:[%s925 + $0x1c] sm:$0xf]
      %v942 = vunpack.c.l.b16 %v926
      %v943 = vunpack.c.l.b16 %v927
      %v944 = vunpack.c.l.b16 %v928
      %v945 = vunpack.c.l.b16 %v929
      %v946 = vunpack.c.l.b16 %v930
      %v947 = vunpack.c.l.b16 %v931
      %v948 = vunpack.c.l.b16 %v932
      %v949 = vunpack.c.l.b16 %v933
      %v950 = vpack.c.b16 %v943, %v942
      %v951 = vpack.c.b16 %v945, %v944
      %v952 = vpack.c.b16 %v947, %v946
      %v953 = vpack.c.b16 %v949, %v948
      %v959 = vsel %vm211, %v921, 0
      %v962 = vsel %vm211, %v922, 0
      %v965 = vsel %vm211, %v923, 0
      %v968 = vsel %vm211, %v924, 0
      %970 = vmatprep.subr.bf16.mxu0 0
      %971 = vmatpush1.bf16.msra.mxu0 0
      %972 = vmatprep.subr.bf16.mxu0 0
      %973 = vmatpush1.bf16.msra.mxu0 0
      %974 = vmatprep.subr.bf16.mxu0 0
      %975 = vmatpush1.bf16.msra.mxu0 0
      %976 = vmatprep.subr.bf16.mxu0 0
      %977 = vmatpush1.bf16.msra.mxu0 0
      %978 = vmatprep.subr.bf16.mxu0 0
      %979 = vmatpush1.bf16.msra.mxu0 %v953
      %980 = vmatprep.subr.bf16.mxu0 0
      %981 = vmatpush1.bf16.msra.mxu0 %v952
      %982 = vmatprep.subr.bf16.mxu0 0
      %983 = vmatpush1.bf16.msra.mxu0 %v951
      %984 = vmatprep.subr.bf16.mxu0 0
      %985 = vmatpush1.bf16.msra.mxu0 %v950
      %986 = vmatprep.subr.bf16.mxu0 0
      %987 = vmatpush2.bf16.msra.mxu0 0
      %988 = vmatprep.subr.bf16.mxu0 0
      %989 = vmatpush2.bf16.msra.mxu0 0
      %990 = vmatprep.subr.bf16.mxu0 0
      %991 = vmatpush2.bf16.msra.mxu0 0
      %992 = vmatprep.subr.bf16.mxu0 0
      %993 = vmatpush2.bf16.msra.mxu0 0
      %994 = vmatprep.subr.bf16.mxu0 0
      %995 = vmatpush2.bf16.msra.mxu0 0
      %996 = vmatprep.subr.bf16.mxu0 0
      %997 = vmatpush2.bf16.msra.mxu0 0
      %998 = vmatprep.subr.bf16.mxu0 0
      %999 = vmatpush2.bf16.msra.mxu0 0
      %1000 = vmatprep.subr.bf16.mxu0 0
      %1001 = vmatpush2.bf16.msra.mxu0 0
      %1002 = vmatprep.mubr.bf16.mxu0 0
      %1003 = vmatmul.mubr.bf16.gmra.mxu0 %v959
      %v1004 = vpop.f32.mrf.mxu0
      %v1005 = vadd.f32 0.0, %v1004
      %v1006 = vpop.f32.mrf.mxu0
      %v1007 = vpop.f32.mrf.mxu0
      %v1008 = vadd.f32 0.0, %v1007
      %v1009 = vpop.f32.mrf.mxu0
      %1010 = vmatprep.mubr.bf16.mxu0 0
      %1011 = vmatmul.mubr.bf16.gmra.mxu0 %v962
      %v1012 = vpop.f32.mrf.mxu0
      %v1013 = vadd.f32 0.0, %v1012
      %v1014 = vpop.f32.mrf.mxu0
      %v1015 = vpop.f32.mrf.mxu0
      %v1016 = vadd.f32 0.0, %v1015
      %v1017 = vpop.f32.mrf.mxu0
      %1018 = vmatprep.mubr.bf16.mxu0 0
      %1019 = vmatmul.mubr.bf16.gmra.mxu0 %v965
      %v1020 = vpop.f32.mrf.mxu0
      %v1021 = vadd.f32 0.0, %v1020
      %v1022 = vpop.f32.mrf.mxu0
      %v1023 = vpop.f32.mrf.mxu0
      %v1024 = vadd.f32 0.0, %v1023
      %v1025 = vpop.f32.mrf.mxu0
      %1026 = vmatprep.mubr.bf16.mxu0 0
      %1027 = vmatmul.mubr.bf16.gmra.mxu0 %v968
      %v1028 = vpop.f32.mrf.mxu0
      %v1029 = vadd.f32 0.0, %v1028
      %v1030 = vpop.f32.mrf.mxu0
      %v1031 = vpop.f32.mrf.mxu0
      %v1032 = vadd.f32 0.0, %v1031
      %v1033 = vpop.f32.mrf.mxu0
      %1034 = vdwg.mxu0
      %v1035 = vadd.f32 %v904, %v1005
      %v1036 = vadd.f32 %v905, %v1008
      %v1037 = vadd.f32 %v906, %v1013
      %v1038 = vadd.f32 %v907, %v1016
      %v1039 = vadd.f32 %v908, %v1021
      %v1040 = vadd.f32 %v909, %v1024
      %v1041 = vadd.f32 %v910, %v1029
      %v1042 = vadd.f32 %v911, %v1032
      %s1043 = scalar_lea.vmem %s138, 160
      %v1044 = vld [vmem:[%s1043] sm:$0xff]
      %v1045 = vld [vmem:[%s1043 + $0x10] sm:$0xff]
      %v1046 = vld [vmem:[%s1043 + $0x20] sm:$0xff]
      %v1047 = vld [vmem:[%s1043 + $0x30] sm:$0xff]
      %v1048 = vld [vmem:[%s1043 + $0x40] sm:$0xff]
      %v1049 = vld [vmem:[%s1043 + $0x50] sm:$0xff]
      %v1050 = vld [vmem:[%s1043 + $0x60] sm:$0xff]
      %v1051 = vld [vmem:[%s1043 + $0x70] sm:$0xff]
      %v1052 = vpack.c.bf16 %v1045, %v1044
      %v1053 = vpack.c.bf16 %v1047, %v1046
      %v1054 = vpack.c.bf16 %v1049, %v1048
      %v1055 = vpack.c.bf16 %v1051, %v1050
      %s1056 = scalar_lea.vmem %s1, 224
      %v1057 = vld [vmem:[%s1056] sm:$0xf]
      %v1058 = vld [vmem:[%s1056 + $0x4] sm:$0xf]
      %v1059 = vld [vmem:[%s1056 + $0x8] sm:$0xf]
      %v1060 = vld [vmem:[%s1056 + $0xc] sm:$0xf]
      %v1061 = vld [vmem:[%s1056 + $0x10] sm:$0xf]
      %v1062 = vld [vmem:[%s1056 + $0x14] sm:$0xf]
      %v1063 = vld [vmem:[%s1056 + $0x18] sm:$0xf]
      %v1064 = vld [vmem:[%s1056 + $0x1c] sm:$0xf]
      %v1073 = vunpack.c.l.b16 %v1057
      %v1074 = vunpack.c.l.b16 %v1058
      %v1075 = vunpack.c.l.b16 %v1059
      %v1076 = vunpack.c.l.b16 %v1060
      %v1077 = vunpack.c.l.b16 %v1061
      %v1078 = vunpack.c.l.b16 %v1062
      %v1079 = vunpack.c.l.b16 %v1063
      %v1080 = vunpack.c.l.b16 %v1064
      %v1081 = vpack.c.b16 %v1074, %v1073
      %v1082 = vpack.c.b16 %v1076, %v1075
      %v1083 = vpack.c.b16 %v1078, %v1077
      %v1084 = vpack.c.b16 %v1080, %v1079
      %v1090 = vsel %vm211, %v1052, 0
      %v1093 = vsel %vm211, %v1053, 0
      %v1096 = vsel %vm211, %v1054, 0
      %v1099 = vsel %vm211, %v1055, 0
      %1101 = vmatprep.subr.bf16.mxu0 0
      %1102 = vmatpush1.bf16.msra.mxu0 0
      %1103 = vmatprep.subr.bf16.mxu0 0
      %1104 = vmatpush1.bf16.msra.mxu0 0
      %1105 = vmatprep.subr.bf16.mxu0 0
      %1106 = vmatpush1.bf16.msra.mxu0 0
      %1107 = vmatprep.subr.bf16.mxu0 0
      %1108 = vmatpush1.bf16.msra.mxu0 0
      %1109 = vmatprep.subr.bf16.mxu0 0
      %1110 = vmatpush1.bf16.msra.mxu0 %v1084
      %1111 = vmatprep.subr.bf16.mxu0 0
      %1112 = vmatpush1.bf16.msra.mxu0 %v1083
      %1113 = vmatprep.subr.bf16.mxu0 0
      %1114 = vmatpush1.bf16.msra.mxu0 %v1082
      %1115 = vmatprep.subr.bf16.mxu0 0
      %1116 = vmatpush1.bf16.msra.mxu0 %v1081
      %1117 = vmatprep.subr.bf16.mxu0 0
      %1118 = vmatpush2.bf16.msra.mxu0 0
      %1119 = vmatprep.subr.bf16.mxu0 0
      %1120 = vmatpush2.bf16.msra.mxu0 0
      %1121 = vmatprep.subr.bf16.mxu0 0
      %1122 = vmatpush2.bf16.msra.mxu0 0
      %1123 = vmatprep.subr.bf16.mxu0 0
      %1124 = vmatpush2.bf16.msra.mxu0 0
      %1125 = vmatprep.subr.bf16.mxu0 0
      %1126 = vmatpush2.bf16.msra.mxu0 0
      %1127 = vmatprep.subr.bf16.mxu0 0
      %1128 = vmatpush2.bf16.msra.mxu0 0
      %1129 = vmatprep.subr.bf16.mxu0 0
      %1130 = vmatpush2.bf16.msra.mxu0 0
      %1131 = vmatprep.subr.bf16.mxu0 0
      %1132 = vmatpush2.bf16.msra.mxu0 0
      %1133 = vmatprep.mubr.bf16.mxu0 0
      %1134 = vmatmul.mubr.bf16.gmra.mxu0 %v1090
      %v1135 = vpop.f32.mrf.mxu0
      %v1136 = vadd.f32 0.0, %v1135
      %v1137 = vpop.f32.mrf.mxu0
      %v1138 = vpop.f32.mrf.mxu0
      %v1139 = vadd.f32 0.0, %v1138
      %v1140 = vpop.f32.mrf.mxu0
      %1141 = vmatprep.mubr.bf16.mxu0 0
      %1142 = vmatmul.mubr.bf16.gmra.mxu0 %v1093
      %v1143 = vpop.f32.mrf.mxu0
      %v1144 = vadd.f32 0.0, %v1143
      %v1145 = vpop.f32.mrf.mxu0
      %v1146 = vpop.f32.mrf.mxu0
      %v1147 = vadd.f32 0.0, %v1146
      %v1148 = vpop.f32.mrf.mxu0
      %1149 = vmatprep.mubr.bf16.mxu0 0
      %1150 = vmatmul.mubr.bf16.gmra.mxu0 %v1096
      %v1151 = vpop.f32.mrf.mxu0
      %v1152 = vadd.f32 0.0, %v1151
      %v1153 = vpop.f32.mrf.mxu0
      %v1154 = vpop.f32.mrf.mxu0
      %v1155 = vadd.f32 0.0, %v1154
      %v1156 = vpop.f32.mrf.mxu0
      %1157 = vmatprep.mubr.bf16.mxu0 0
      %1158 = vmatmul.mubr.bf16.gmra.mxu0 %v1099
      %v1159 = vpop.f32.mrf.mxu0
      %v1160 = vadd.f32 0.0, %v1159
      %v1161 = vpop.f32.mrf.mxu0
      %v1162 = vpop.f32.mrf.mxu0
      %v1163 = vadd.f32 0.0, %v1162
      %v1164 = vpop.f32.mrf.mxu0
      %1165 = vdwg.mxu0
      %v1166 = vadd.f32 %v1035, %v1136
      %v1167 = vadd.f32 %v1036, %v1139
      %v1168 = vadd.f32 %v1037, %v1144
      %v1169 = vadd.f32 %v1038, %v1147
      %v1170 = vadd.f32 %v1039, %v1152
      %v1171 = vadd.f32 %v1040, %v1155
      %v1172 = vadd.f32 %v1041, %v1160
      %v1173 = vadd.f32 %v1042, %v1163
      %v1174 = vld [vmem:[%s912 + $0x1] sm:$0xff]
      %v1175 = vld [vmem:[%s912 + $0x11] sm:$0xff]
      %v1176 = vld [vmem:[%s912 + $0x21] sm:$0xff]
      %v1177 = vld [vmem:[%s912 + $0x31] sm:$0xff]
      %v1178 = vld [vmem:[%s912 + $0x41] sm:$0xff]
      %v1179 = vld [vmem:[%s912 + $0x51] sm:$0xff]
      %v1180 = vld [vmem:[%s912 + $0x61] sm:$0xff]
      %v1181 = vld [vmem:[%s912 + $0x71] sm:$0xff]
      %v1182 = vpack.c.bf16 %v1175, %v1174
      %v1183 = vpack.c.bf16 %v1177, %v1176
      %v1184 = vpack.c.bf16 %v1179, %v1178
      %v1185 = vpack.c.bf16 %v1181, %v1180
      %s1186 = scalar_lea.vmem %s1, 256
      %v1187 = vld [vmem:[%s1186] sm:$0xf]
      %v1188 = vld [vmem:[%s1186 + $0x4] sm:$0xf]
      %v1189 = vld [vmem:[%s1186 + $0x8] sm:$0xf]
      %v1190 = vld [vmem:[%s1186 + $0xc] sm:$0xf]
      %v1191 = vld [vmem:[%s1186 + $0x10] sm:$0xf]
      %v1192 = vld [vmem:[%s1186 + $0x14] sm:$0xf]
      %v1193 = vld [vmem:[%s1186 + $0x18] sm:$0xf]
      %v1194 = vld [vmem:[%s1186 + $0x1c] sm:$0xf]
      %v1203 = vunpack.c.l.b16 %v1187
      %v1204 = vunpack.c.l.b16 %v1188
      %v1205 = vunpack.c.l.b16 %v1189
      %v1206 = vunpack.c.l.b16 %v1190
      %v1207 = vunpack.c.l.b16 %v1191
      %v1208 = vunpack.c.l.b16 %v1192
      %v1209 = vunpack.c.l.b16 %v1193
      %v1210 = vunpack.c.l.b16 %v1194
      %v1211 = vpack.c.b16 %v1204, %v1203
      %v1212 = vpack.c.b16 %v1206, %v1205
      %v1213 = vpack.c.b16 %v1208, %v1207
      %v1214 = vpack.c.b16 %v1210, %v1209
      %v1220 = vsel %vm211, %v1182, 0
      %v1223 = vsel %vm211, %v1183, 0
      %v1226 = vsel %vm211, %v1184, 0
      %v1229 = vsel %vm211, %v1185, 0
      %1231 = vmatprep.subr.bf16.mxu0 0
      %1232 = vmatpush1.bf16.msra.mxu0 0
      %1233 = vmatprep.subr.bf16.mxu0 0
      %1234 = vmatpush1.bf16.msra.mxu0 0
      %1235 = vmatprep.subr.bf16.mxu0 0
      %1236 = vmatpush1.bf16.msra.mxu0 0
      %1237 = vmatprep.subr.bf16.mxu0 0
      %1238 = vmatpush1.bf16.msra.mxu0 0
      %1239 = vmatprep.subr.bf16.mxu0 0
      %1240 = vmatpush1.bf16.msra.mxu0 %v1214
      %1241 = vmatprep.subr.bf16.mxu0 0
      %1242 = vmatpush1.bf16.msra.mxu0 %v1213
      %1243 = vmatprep.subr.bf16.mxu0 0
      %1244 = vmatpush1.bf16.msra.mxu0 %v1212
      %1245 = vmatprep.subr.bf16.mxu0 0
      %1246 = vmatpush1.bf16.msra.mxu0 %v1211
      %1247 = vmatprep.subr.bf16.mxu0 0
      %1248 = vmatpush2.bf16.msra.mxu0 0
      %1249 = vmatprep.subr.bf16.mxu0 0
      %1250 = vmatpush2.bf16.msra.mxu0 0
      %1251 = vmatprep.subr.bf16.mxu0 0
      %1252 = vmatpush2.bf16.msra.mxu0 0
      %1253 = vmatprep.subr.bf16.mxu0 0
      %1254 = vmatpush2.bf16.msra.mxu0 0
      %1255 = vmatprep.subr.bf16.mxu0 0
      %1256 = vmatpush2.bf16.msra.mxu0 0
      %1257 = vmatprep.subr.bf16.mxu0 0
      %1258 = vmatpush2.bf16.msra.mxu0 0
      %1259 = vmatprep.subr.bf16.mxu0 0
      %1260 = vmatpush2.bf16.msra.mxu0 0
      %1261 = vmatprep.subr.bf16.mxu0 0
      %1262 = vmatpush2.bf16.msra.mxu0 0
      %1263 = vmatprep.mubr.bf16.mxu0 0
      %1264 = vmatmul.mubr.bf16.gmra.mxu0 %v1220
      %v1265 = vpop.f32.mrf.mxu0
      %v1266 = vadd.f32 0.0, %v1265
      %v1267 = vpop.f32.mrf.mxu0
      %v1268 = vpop.f32.mrf.mxu0
      %v1269 = vadd.f32 0.0, %v1268
      %v1270 = vpop.f32.mrf.mxu0
      %1271 = vmatprep.mubr.bf16.mxu0 0
      %1272 = vmatmul.mubr.bf16.gmra.mxu0 %v1223
      %v1273 = vpop.f32.mrf.mxu0
      %v1274 = vadd.f32 0.0, %v1273
      %v1275 = vpop.f32.mrf.mxu0
      %v1276 = vpop.f32.mrf.mxu0
      %v1277 = vadd.f32 0.0, %v1276
      %v1278 = vpop.f32.mrf.mxu0
      %1279 = vmatprep.mubr.bf16.mxu0 0
      %1280 = vmatmul.mubr.bf16.gmra.mxu0 %v1226
      %v1281 = vpop.f32.mrf.mxu0
      %v1282 = vadd.f32 0.0, %v1281
      %v1283 = vpop.f32.mrf.mxu0
      %v1284 = vpop.f32.mrf.mxu0
      %v1285 = vadd.f32 0.0, %v1284
      %v1286 = vpop.f32.mrf.mxu0
      %1287 = vmatprep.mubr.bf16.mxu0 0
      %1288 = vmatmul.mubr.bf16.gmra.mxu0 %v1229
      %v1289 = vpop.f32.mrf.mxu0
      %v1290 = vadd.f32 0.0, %v1289
      %v1291 = vpop.f32.mrf.mxu0
      %v1292 = vpop.f32.mrf.mxu0
      %v1293 = vadd.f32 0.0, %v1292
      %v1294 = vpop.f32.mrf.mxu0
      %1295 = vdwg.mxu0
      %v1296 = vadd.f32 %v1166, %v1266
      %v1297 = vadd.f32 %v1167, %v1269
      %v1298 = vadd.f32 %v1168, %v1274
      %v1299 = vadd.f32 %v1169, %v1277
      %v1300 = vadd.f32 %v1170, %v1282
      %v1301 = vadd.f32 %v1171, %v1285
      %v1302 = vadd.f32 %v1172, %v1290
      %v1303 = vadd.f32 %v1173, %v1293
      %1304 = vst [vmem:[%s143] sm:$0xff] %v1296
      %1305 = vst [vmem:[%s143 + $0x8] sm:$0xff] %v1297
      %1306 = vst [vmem:[%s143 + $0x10] sm:$0xff] %v1298
      %1307 = vst [vmem:[%s143 + $0x18] sm:$0xff] %v1299
      %1308 = vst [vmem:[%s143 + $0x20] sm:$0xff] %v1300
      %1309 = vst [vmem:[%s143 + $0x28] sm:$0xff] %v1301
      %1310 = vst [vmem:[%s143 + $0x30] sm:$0xff] %v1302
      %1311 = vst [vmem:[%s143 + $0x38] sm:$0xff] %v1303
      %p1312 = scmp.lt.s32.totalorder %s13, 1
      %s1313 = scalar_select %p1312, %s13, 1
      %s1314 = smul.addr %s1313, 8
      %s1315 = smul.addr %s1314, 8
      %s1316 = scalar_lea.vmem %s2, %s1315
      // Predicated region
      $region29: #{simple_block_forward.9} parent=27 // pred_check
        %p1317 = pneg %p78
      $region30: #{simple_block_forward.9} parent=27 // pred_check_branch
        %1319 = sbr.rel (%p1317) target = $region32
      $region31: #{simple_block_forward.9} parent=27 // pred_region
        _
      $region32: #{simple_block_forward.9} parent=27 // pred_fallthru
        _
    $region28: #{simple_block_forward.9} parent=5 // pred_fallthru
      _
    %p1320 = scmp.le.s32.totalorder 2, %s8
    // Predicated region
    $region33: #{simple_block_forward.9} parent=5 // pred_check
      %p1321 = pneg %p1320
    $region34: #{simple_block_forward.9} parent=5 // pred_check_branch
      %1323 = sbr.rel (%p1321) target = $region36
    $region35: #{simple_block_forward.9} parent=5 // pred_region
      %s1324 = ssub.s32 %s8, 2
      // Predicated region
      $region37: #{simple_block_forward.9} parent=35 // pred_check
        %p1325 = pneg %p84
      $region38: #{simple_block_forward.9} parent=35 // pred_check_branch
        %1327 = sbr.rel (%p1325) target = $region40
      $region39: #{simple_block_forward.9} parent=35 // pred_region
        %p1328 = scmp.lt.s32.totalorder %s14, 1
        %s1329 = scalar_select %p1328, %s14, 1
        %s1330 = smul.addr %s1329, 8
        %s1331 = smul.addr %s1330, 8
        %s1332 = scalar_lea.vmem %s2, %s1331
      $region40: #{simple_block_forward.9} parent=35 // pred_fallthru
        _
    $region36: #{simple_block_forward.9} parent=5 // pred_fallthru
      _
  $region6: #{simple_block_forward.9} parent=0 // loop_footer
    %s12 = sadd.s32 1, %s8
  $region7: #{simple_block_forward.9} parent=0 // loop_footer_branch
    %7 = sbr.rel target = $region3
  $region8: #{simple_block_forward.9} parent=0 // loop_exit
    _

// kernel: simple_block_forward.13
$region0: #{simple_block_forward.13}
  #allocation0 [shape = 'u32[]', space=smem, size = 0x4, offset = 0x4, fixed_abs, tag = 'smem constant byte address 0x4 - core index']
  #allocation1 [shape = 'u32[144,128]{1,0:T(1,128)}', space=vmem, size = 0x12000, scoped, tag = 'internal scratch']
  %s0 = inlined_call_operand.vmem [shape: f32[2,8,8,64], index: 0, kind: input, shape index: {}]
  %s1 = inlined_call_operand.vmem [shape: bf16[1,1,64,128], index: 1, kind: input, shape index: {}]
  %s2 = inlined_call_operand.vmem [shape: f32[2,64,128], index: 2, kind: output, shape index: {}]
  %s3 = sld [smem:[#allocation0]]
  $region41: #{simple_block_forward.13} parent=0
    _
  %s5 = ssub.s32 1, %s3
  %s6 = scalar_select 0, %s5, %s3
  loop: start=0, step=1, limit=4
  $region2: #{simple_block_forward.13} parent=0 // loop_pre_header
    _
  $region3: #{simple_block_forward.13} parent=0 // loop_header
    %s8 = sphi 0, %s12
    %p9 = scmp.ge.s32.totalorder %s8, 4
    %s18 = sphi 0, %s20
    %s21 = sphi 0, %s18
    %s22 = sphi 0, %s21
    %s38 = sphi 0, %s22
    %s42 = sphi 0, %s42
    %s44 = sphi 0, %s42
    %s45 = sphi 0, %s44
    %s59 = sphi 0, %s45
    %s65 = sphi 0, %s67
    %s68 = sphi 0, %s65
    %s69 = sphi 0, %s68
    %s85 = sphi 0, %s69
  $region4: #{simple_block_forward.13} parent=0 // loop_header_branch
    %11 = sbr.rel (%p9) target = $region8
  $region5: #{simple_block_forward.13} parent=0 // loop_body
    %s13 = ssub.s32 %s8, 1
    %s14 = ssub.s32 %s8, 2
    %s15 = sadd.s32 %s8, 1
    %s16 = ssub.s32 %s8, %s15
    %p17 = scmp.eq.s32.totalorder %s16, 0
    %s19 = sadd.s32 %s18, 1
    %s20 = scalar_select %p17, %s18, %s19
    %p23 = pneg %p17
    %p24 = scmp.eq.s32.totalorder %s8, 1
    %p25 = por %p23, %p24
    %p26 = scmp.ne.s32.totalorder %s18, %s21
    %p27 = scmp.eq.s32.totalorder %s8, 0
    %p28 = por %p26, %p27
    %p29 = scmp.ne.s32.totalorder %s18, %s21
    %p30 = scmp.eq.s32.totalorder %s13, 1
    %p31 = por %p29, %p30
    %p32 = scmp.ne.s32.totalorder %s21, %s22
    %p33 = scmp.eq.s32.totalorder %s13, 0
    %p34 = por %p32, %p33
    %p35 = scmp.ne.s32.totalorder %s21, %s22
    %p36 = scmp.eq.s32.totalorder %s14, 1
    %p37 = por %p35, %p36
    %p39 = scmp.ne.s32.totalorder %s22, %s38
    %p40 = scmp.eq.s32.totalorder %s14, 0
    %p41 = por %p39, %p40
    %s43 = sadd.s32 %s42, 1
    %p46 = scmp.eq.s32.totalorder %s8, 1
    %p47 = scmp.ne.s32.totalorder %s42, %s44
    %p48 = scmp.eq.s32.totalorder %s8, 0
    %p49 = por %p47, %p48
    %p50 = scmp.ne.s32.totalorder %s42, %s44
    %p51 = scmp.eq.s32.totalorder %s13, 1
    %p52 = por %p50, %p51
    %p53 = scmp.ne.s32.totalorder %s44, %s45
    %p54 = scmp.eq.s32.totalorder %s13, 0
    %p55 = por %p53, %p54
    %p56 = scmp.ne.s32.totalorder %s44, %s45
    %p57 = scmp.eq.s32.totalorder %s14, 1
    %p58 = por %p56, %p57
    %p60 = scmp.ne.s32.totalorder %s45, %s59
    %p61 = scmp.eq.s32.totalorder %s14, 0
    %p62 = por %p60, %p61
    %s63 = ssub.s32 %s8, %s15
    %p64 = scmp.eq.s32.totalorder %s63, 0
    %s66 = sadd.s32 %s65, 1
    %s67 = scalar_select %p64, %s65, %s66
    %p70 = pneg %p64
    %p71 = scmp.eq.s32.totalorder %s8, 1
    %p72 = por %p70, %p71
    %p73 = scmp.ne.s32.totalorder %s65, %s68
    %p74 = scmp.eq.s32.totalorder %s8, 0
    %p75 = por %p73, %p74
    %p76 = scmp.ne.s32.totalorder %s65, %s68
    %p77 = scmp.eq.s32.totalorder %s13, 1
    %p78 = por %p76, %p77
    %p79 = scmp.ne.s32.totalorder %s68, %s69
    %p80 = scmp.eq.s32.totalorder %s13, 0
    %p81 = por %p79, %p80
    %p82 = scmp.ne.s32.totalorder %s68, %s69
    %p83 = scmp.eq.s32.totalorder %s14, 1
    %p84 = por %p82, %p83
    %p86 = scmp.ne.s32.totalorder %s69, %s85
    %p87 = scmp.eq.s32.totalorder %s14, 0
    %p88 = por %p86, %p87
    %p89 = scmp.le.s32.totalorder 1, %s8
    %p90 = scmp.lt.s32.totalorder %s8, 3
    %p91 = pnand %p89, %p90
    %p92 = pneg %p91
    // Predicated region
    $region9: #{simple_block_forward.13} parent=5 // pred_check
      _
    $region10: #{simple_block_forward.13} parent=5 // pred_check_branch
      %94 = sbr.rel (%p91) target = $region12
    $region11: #{simple_block_forward.13} parent=5 // pred_region
      %s95 = ssub.s32 %s8, 1
      // Predicated region
      $region13: #{simple_block_forward.13} parent=11 // pred_check
        %p96 = pneg %p55
      $region14: #{simple_block_forward.13} parent=11 // pred_check_branch
        %98 = sbr.rel (%p96) target = $region16
      $region15: #{simple_block_forward.13} parent=11 // pred_region
        _
      $region16: #{simple_block_forward.13} parent=11 // pred_fallthru
        _
    $region12: #{simple_block_forward.13} parent=5 // pred_fallthru
      _
    %p99 = scmp.lt.s32.totalorder %s8, 2
    // Predicated region
    $region17: #{simple_block_forward.13} parent=5 // pred_check
      %p100 = pneg %p99
    $region18: #{simple_block_forward.13} parent=5 // pred_check_branch
      %102 = sbr.rel (%p100) target = $region20
    $region19: #{simple_block_forward.13} parent=5 // pred_region
      // Predicated region
      $region21: #{simple_block_forward.13} parent=19 // pred_check
        %p103 = pneg %p28
      $region22: #{simple_block_forward.13} parent=19 // pred_check_branch
        %105 = sbr.rel (%p103) target = $region24
      $region23: #{simple_block_forward.13} parent=19 // pred_region
        %p106 = scmp.lt.s32.totalorder %s8, 1
        %s107 = scalar_select %p106, %s8, 1
        %s108 = smul.addr %s107, 8
        %s109 = smul.addr %s108, 8
        %s110 = scalar_lea.vmem %s0, %s109
      $region24: #{simple_block_forward.13} parent=19 // pred_fallthru
        _
    $region20: #{simple_block_forward.13} parent=5 // pred_fallthru
      _
    %p111 = scmp.le.s32.totalorder 1, %s8
    %p112 = scmp.lt.s32.totalorder %s8, 3
    %p113 = pnand %p111, %p112
    %p114 = pneg %p113
    // Predicated region
    $region25: #{simple_block_forward.13} parent=5 // pred_check
      _
    $region26: #{simple_block_forward.13} parent=5 // pred_check_branch
      %116 = sbr.rel (%p113) target = $region28
    $region27: #{simple_block_forward.13} parent=5 // pred_region
      %s117 = ssub.s32 %s8, 1
      %p118 = scmp.lt.s32.totalorder %s13, 1
      %s119 = scalar_select %p118, %s13, 1
      %s120 = smul.addr %s119, 8
      %s121 = smul.addr %s120, 8
      %s122 = scalar_lea.vmem %s0, %s121
      %p123 = pneg %p34
      %p124 = pneg %p31
      %p125 = pneg %p55
      %p126 = pneg %p52
      %p127 = pneg %p81
      %p128 = pneg %p78
      %p129 = scmp.lt.s32.totalorder %s13, 1
      %s130 = scalar_select %p129, %s13, 1
      %s131 = smul.addr %s130, 8
      %s132 = smul.addr %s131, 8
      %s133 = scalar_lea.vmem %s2, %s132
      %p134 = scmp.lt.s32.totalorder %s13, 1
      %s135 = scalar_select %p134, %s13, 1
      %s136 = smul.addr %s135, 8
      %s137 = smul.addr %s136, 8
      %s138 = scalar_lea.vmem %s0, %s137
      %p139 = scmp.lt.s32.totalorder %s13, 1
      %s140 = scalar_select %p139, %s13, 1
      %s141 = smul.addr %s140, 8
      %s142 = smul.addr %s141, 8
      %s143 = scalar_lea.vmem %s2, %s142
      %v145 = vld [vmem:[%s138] sm:$0xff]
      %v146 = vld [vmem:[%s138 + $0x8] sm:$0xff]
      %v147 = vld [vmem:[%s138 + $0x10] sm:$0xff]
      %v148 = vld [vmem:[%s138 + $0x18] sm:$0xff]
      %v149 = vld [vmem:[%s138 + $0x20] sm:$0xff]
      %v150 = vld [vmem:[%s138 + $0x28] sm:$0xff]
      %v151 = vld [vmem:[%s138 + $0x30] sm:$0xff]
      %v152 = vld [vmem:[%s138 + $0x38] sm:$0xff]
      %v153 = vpack.c.bf16 %v146, %v145
      %v154 = vpack.c.bf16 %v148, %v147
      %v155 = vpack.c.bf16 %v150, %v149
      %v156 = vpack.c.bf16 %v152, %v151
      %v157 = vld [vmem:[%s1] sm:$0xf]
      %v158 = vld [vmem:[%s1 + $0x4] sm:$0xf]
      %v159 = vld [vmem:[%s1 + $0x8] sm:$0xf]
      %v160 = vld [vmem:[%s1 + $0xc] sm:$0xf]
      %v161 = vld [vmem:[%s1 + $0x10] sm:$0xf]
      %v162 = vld [vmem:[%s1 + $0x14] sm:$0xf]
      %v163 = vld [vmem:[%s1 + $0x18] sm:$0xf]
      %v164 = vld [vmem:[%s1 + $0x1c] sm:$0xf]
      %v173 = vunpack.c.l.b16 %v157
      %v174 = vunpack.c.l.b16 %v158
      %v175 = vunpack.c.l.b16 %v159
      %v176 = vunpack.c.l.b16 %v160
      %v177 = vunpack.c.l.b16 %v161
      %v178 = vunpack.c.l.b16 %v162
      %v179 = vunpack.c.l.b16 %v163
      %v180 = vunpack.c.l.b16 %v164
      %v181 = vpack.c.b16 %v174, %v173
      %v182 = vpack.c.b16 %v176, %v175
      %v183 = vpack.c.b16 %v178, %v177
      %v184 = vpack.c.b16 %v180, %v179
      %vm189 = vcmask 523264
      %v191 = vsel %vm189, %v153, 0
      %v194 = vsel %vm189, %v154, 0
      %v197 = vsel %vm189, %v155, 0
      %v200 = vsel %vm189, %v156, 0
      %202 = vmatprep.subr.bf16.mxu0 0
      %203 = vmatpush1.bf16.msra.mxu0 0
      %204 = vmatprep.subr.bf16.mxu0 0
      %205 = vmatpush1.bf16.msra.mxu0 0
      %206 = vmatprep.subr.bf16.mxu0 0
      %207 = vmatpush1.bf16.msra.mxu0 0
      %208 = vmatprep.subr.bf16.mxu0 0
      %209 = vmatpush1.bf16.msra.mxu0 0
      %210 = vmatprep.subr.bf16.mxu0 0
      %211 = vmatpush1.bf16.msra.mxu0 %v184
      %212 = vmatprep.subr.bf16.mxu0 0
      %213 = vmatpush1.bf16.msra.mxu0 %v183
      %214 = vmatprep.subr.bf16.mxu0 0
      %215 = vmatpush1.bf16.msra.mxu0 %v182
      %216 = vmatprep.subr.bf16.mxu0 0
      %217 = vmatpush1.bf16.msra.mxu0 %v181
      %218 = vmatprep.subr.bf16.mxu0 0
      %219 = vmatpush2.bf16.msra.mxu0 0
      %220 = vmatprep.subr.bf16.mxu0 0
      %221 = vmatpush2.bf16.msra.mxu0 0
      %222 = vmatprep.subr.bf16.mxu0 0
      %223 = vmatpush2.bf16.msra.mxu0 0
      %224 = vmatprep.subr.bf16.mxu0 0
      %225 = vmatpush2.bf16.msra.mxu0 0
      %226 = vmatprep.subr.bf16.mxu0 0
      %227 = vmatpush2.bf16.msra.mxu0 0
      %228 = vmatprep.subr.bf16.mxu0 0
      %229 = vmatpush2.bf16.msra.mxu0 0
      %230 = vmatprep.subr.bf16.mxu0 0
      %231 = vmatpush2.bf16.msra.mxu0 0
      %232 = vmatprep.subr.bf16.mxu0 0
      %233 = vmatpush2.bf16.msra.mxu0 0
      %234 = vmatprep.mubr.bf16.mxu0 0
      %235 = vmatmul.mubr.bf16.gmra.mxu0 %v191
      %v236 = vpop.f32.mrf.mxu0
      %v237 = vadd.f32 0.0, %v236
      %v238 = vpop.f32.mrf.mxu0
      %v239 = vpop.f32.mrf.mxu0
      %v240 = vadd.f32 0.0, %v239
      %v241 = vpop.f32.mrf.mxu0
      %242 = vmatprep.mubr.bf16.mxu0 0
      %243 = vmatmul.mubr.bf16.gmra.mxu0 %v194
      %v244 = vpop.f32.mrf.mxu0
      %v245 = vadd.f32 0.0, %v244
      %v246 = vpop.f32.mrf.mxu0
      %v247 = vpop.f32.mrf.mxu0
      %v248 = vadd.f32 0.0, %v247
      %v249 = vpop.f32.mrf.mxu0
      %250 = vmatprep.mubr.bf16.mxu0 0
      %251 = vmatmul.mubr.bf16.gmra.mxu0 %v197
      %v252 = vpop.f32.mrf.mxu0
      %v253 = vadd.f32 0.0, %v252
      %v254 = vpop.f32.mrf.mxu0
      %v255 = vpop.f32.mrf.mxu0
      %v256 = vadd.f32 0.0, %v255
      %v257 = vpop.f32.mrf.mxu0
      %258 = vmatprep.mubr.bf16.mxu0 0
      %259 = vmatmul.mubr.bf16.gmra.mxu0 %v200
      %v260 = vpop.f32.mrf.mxu0
      %v261 = vadd.f32 0.0, %v260
      %v262 = vpop.f32.mrf.mxu0
      %v263 = vpop.f32.mrf.mxu0
      %v264 = vadd.f32 0.0, %v263
      %v265 = vpop.f32.mrf.mxu0
      %266 = vdwg.mxu0
      %267 = vst [vmem:[%s143] sm:$0xff] %v237
      %268 = vst [vmem:[%s143 + $0x8] sm:$0xff] %v240
      %269 = vst [vmem:[%s143 + $0x10] sm:$0xff] %v245
      %270 = vst [vmem:[%s143 + $0x18] sm:$0xff] %v248
      %271 = vst [vmem:[%s143 + $0x20] sm:$0xff] %v253
      %272 = vst [vmem:[%s143 + $0x28] sm:$0xff] %v256
      %273 = vst [vmem:[%s143 + $0x30] sm:$0xff] %v261
      %274 = vst [vmem:[%s143 + $0x38] sm:$0xff] %v264
      %p275 = scmp.lt.s32.totalorder %s13, 1
      %s276 = scalar_select %p275, %s13, 1
      %s277 = smul.addr %s276, 8
      %s278 = smul.addr %s277, 8
      %s279 = scalar_lea.vmem %s2, %s278
      // Predicated region
      $region29: #{simple_block_forward.13} parent=27 // pred_check
        %p280 = pneg %p78
      $region30: #{simple_block_forward.13} parent=27 // pred_check_branch
        %282 = sbr.rel (%p280) target = $region32
      $region31: #{simple_block_forward.13} parent=27 // pred_region
        _
      $region32: #{simple_block_forward.13} parent=27 // pred_fallthru
        _
    $region28: #{simple_block_forward.13} parent=5 // pred_fallthru
      _
    %p283 = scmp.le.s32.totalorder 2, %s8
    // Predicated region
    $region33: #{simple_block_forward.13} parent=5 // pred_check
      %p284 = pneg %p283
    $region34: #{simple_block_forward.13} parent=5 // pred_check_branch
      %286 = sbr.rel (%p284) target = $region36
    $region35: #{simple_block_forward.13} parent=5 // pred_region
      %s287 = ssub.s32 %s8, 2
      // Predicated region
      $region37: #{simple_block_forward.13} parent=35 // pred_check
        %p288 = pneg %p84
      $region38: #{simple_block_forward.13} parent=35 // pred_check_branch
        %290 = sbr.rel (%p288) target = $region40
      $region39: #{simple_block_forward.13} parent=35 // pred_region
        %p291 = scmp.lt.s32.totalorder %s14, 1
        %s292 = scalar_select %p291, %s14, 1
        %s293 = smul.addr %s292, 8
        %s294 = smul.addr %s293, 8
        %s295 = scalar_lea.vmem %s2, %s294
      $region40: #{simple_block_forward.13} parent=35 // pred_fallthru
        _
    $region36: #{simple_block_forward.13} parent=5 // pred_fallthru
      _
  $region6: #{simple_block_forward.13} parent=0 // loop_footer
    %s12 = sadd.s32 1, %s8
  $region7: #{simple_block_forward.13} parent=0 // loop_footer_branch
    %7 = sbr.rel target = $region3
  $region8: #{simple_block_forward.13} parent=0 // loop_exit
    _

// kernel: simple_block_forward.15
$region0: #{simple_block_forward.15}
  #allocation0 [shape = 'u32[]', space=smem, size = 0x4, offset = 0x4, fixed_abs, tag = 'smem constant byte address 0x4 - core index']
  #allocation1 [shape = 'u32[144,128]{1,0:T(1,128)}', space=vmem, size = 0x12000, scoped, tag = 'internal scratch']
  %s0 = inlined_call_operand.vmem [shape: f32[128,128], index: 0, kind: input, shape index: {}]
  %s1 = inlined_call_operand.vmem [shape: f32[1,128], index: 1, kind: input, shape index: {}]
  %s2 = inlined_call_operand.vmem [shape: f32[1,128], index: 2, kind: input, shape index: {}]
  %s3 = inlined_call_operand.vmem [shape: f32[128,128], index: 3, kind: output, shape index: {}]
  %s4 = sld [smem:[#allocation0]]
  $region22: #{simple_block_forward.15} parent=0
    _
  %s6 = ssub.s32 1, %s4
  %s7 = scalar_select 0, %s6, %s4
  // Predicated region
  $region2: #{simple_block_forward.15} parent=0 // pred_check
    _
  $region3: #{simple_block_forward.15} parent=0 // pred_check_branch
    %9 = sbr.rel (0) target = $region5
  $region4: #{simple_block_forward.15} parent=0 // pred_region
    _
  $region5: #{simple_block_forward.15} parent=0 // pred_fallthru
    _
  // Predicated region
  $region6: #{simple_block_forward.15} parent=0 // pred_check
    _
  $region7: #{simple_block_forward.15} parent=0 // pred_check_branch
    %11 = sbr.rel (0) target = $region9
  $region8: #{simple_block_forward.15} parent=0 // pred_region
    _
  $region9: #{simple_block_forward.15} parent=0 // pred_fallthru
    _
  // Predicated region
  $region10: #{simple_block_forward.15} parent=0 // pred_check
    _
  $region11: #{simple_block_forward.15} parent=0 // pred_check_branch
    %13 = sbr.rel (0) target = $region13
  $region12: #{simple_block_forward.15} parent=0 // pred_region
    _
  $region13: #{simple_block_forward.15} parent=0 // pred_fallthru
    _
  %v14 = vld [vmem:[%s0] sm:$0xff]
  %v15 = vld [vmem:[%s0 + $0x8] sm:$0xff]
  %v16 = vld [vmem:[%s0 + $0x10] sm:$0xff]
  %v17 = vld [vmem:[%s0 + $0x18] sm:$0xff]
  %v18 = vld [vmem:[%s0 + $0x20] sm:$0xff]
  %v19 = vld [vmem:[%s0 + $0x28] sm:$0xff]
  %v20 = vld [vmem:[%s0 + $0x30] sm:$0xff]
  %v21 = vld [vmem:[%s0 + $0x38] sm:$0xff]
  %v22 = vld [vmem:[%s0 + $0x40] sm:$0xff]
  %v23 = vld [vmem:[%s0 + $0x48] sm:$0xff]
  %v24 = vld [vmem:[%s0 + $0x50] sm:$0xff]
  %v25 = vld [vmem:[%s0 + $0x58] sm:$0xff]
  %v26 = vld [vmem:[%s0 + $0x60] sm:$0xff]
  %v27 = vld [vmem:[%s0 + $0x68] sm:$0xff]
  %v28 = vld [vmem:[%s0 + $0x70] sm:$0xff]
  %v29 = vld [vmem:[%s0 + $0x78] sm:$0xff]
  %v30 = vld [vmem:[%s1] sm:$0x1]
  %v32 = vlaneseq
  %v33 = vshrl.u32 %v32, 7
  %v34 = vsub.s32 0, %v33
  %v35 = vrot.slane %v30, %v34
  %v37 = vmul.f32 %v14, %v35
  %v38 = vmul.f32 %v15, %v35
  %v39 = vmul.f32 %v16, %v35
  %v40 = vmul.f32 %v17, %v35
  %v41 = vmul.f32 %v18, %v35
  %v42 = vmul.f32 %v19, %v35
  %v43 = vmul.f32 %v20, %v35
  %v44 = vmul.f32 %v21, %v35
  %v45 = vmul.f32 %v22, %v35
  %v46 = vmul.f32 %v23, %v35
  %v47 = vmul.f32 %v24, %v35
  %v48 = vmul.f32 %v25, %v35
  %v49 = vmul.f32 %v26, %v35
  %v50 = vmul.f32 %v27, %v35
  %v51 = vmul.f32 %v28, %v35
  %v52 = vmul.f32 %v29, %v35
  %v53 = vld [vmem:[%s2] sm:$0x1]
  %v55 = vlaneseq
  %v56 = vshrl.u32 %v55, 7
  %v57 = vsub.s32 0, %v56
  %v58 = vrot.slane %v53, %v57
  %v60 = vadd.f32 %v37, %v58
  %v61 = vadd.f32 %v38, %v58
  %v62 = vadd.f32 %v39, %v58
  %v63 = vadd.f32 %v40, %v58
  %v64 = vadd.f32 %v41, %v58
  %v65 = vadd.f32 %v42, %v58
  %v66 = vadd.f32 %v43, %v58
  %v67 = vadd.f32 %v44, %v58
  %v68 = vadd.f32 %v45, %v58
  %v69 = vadd.f32 %v46, %v58
  %v70 = vadd.f32 %v47, %v58
  %v71 = vadd.f32 %v48, %v58
  %v72 = vadd.f32 %v49, %v58
  %v73 = vadd.f32 %v50, %v58
  %v74 = vadd.f32 %v51, %v58
  %v75 = vadd.f32 %v52, %v58
  %76 = vst [vmem:[%s3] sm:$0xff] %v60
  %77 = vst [vmem:[%s3 + $0x8] sm:$0xff] %v61
  %78 = vst [vmem:[%s3 + $0x10] sm:$0xff] %v62
  %79 = vst [vmem:[%s3 + $0x18] sm:$0xff] %v63
  %80 = vst [vmem:[%s3 + $0x20] sm:$0xff] %v64
  %81 = vst [vmem:[%s3 + $0x28] sm:$0xff] %v65
  %82 = vst [vmem:[%s3 + $0x30] sm:$0xff] %v66
  %83 = vst [vmem:[%s3 + $0x38] sm:$0xff] %v67
  %84 = vst [vmem:[%s3 + $0x40] sm:$0xff] %v68
  %85 = vst [vmem:[%s3 + $0x48] sm:$0xff] %v69
  %86 = vst [vmem:[%s3 + $0x50] sm:$0xff] %v70
  %87 = vst [vmem:[%s3 + $0x58] sm:$0xff] %v71
  %88 = vst [vmem:[%s3 + $0x60] sm:$0xff] %v72
  %89 = vst [vmem:[%s3 + $0x68] sm:$0xff] %v73
  %90 = vst [vmem:[%s3 + $0x70] sm:$0xff] %v74
  %91 = vst [vmem:[%s3 + $0x78] sm:$0xff] %v75
  // Predicated region
  $region14: #{simple_block_forward.15} parent=0 // pred_check
    _
  $region15: #{simple_block_forward.15} parent=0 // pred_check_branch
    %93 = sbr.rel (0) target = $region17
  $region16: #{simple_block_forward.15} parent=0 // pred_region
    _
  $region17: #{simple_block_forward.15} parent=0 // pred_fallthru
    _
  // Predicated region
  $region18: #{simple_block_forward.15} parent=0 // pred_check
    _
  $region19: #{simple_block_forward.15} parent=0 // pred_check_branch
    %95 = sbr.rel (0) target = $region21
  $region20: #{simple_block_forward.15} parent=0 // pred_region
    _
  $region21: #{simple_block_forward.15} parent=0 // pred_fallthru
    _

// kernel: simple_block_forward.17
$region0: #{simple_block_forward.17}
  #allocation0 [shape = 'u32[]', space=smem, size = 0x4, offset = 0x4, fixed_abs, tag = 'smem constant byte address 0x4 - core index']
  #allocation1 [shape = 'u32[144,128]{1,0:T(1,128)}', space=vmem, size = 0x12000, scoped, tag = 'internal scratch']
  %s0 = inlined_call_operand.vmem [shape: f32[128,128], index: 0, kind: input, shape index: {}]
  %s1 = inlined_call_operand.vmem [shape: f32[1,128], index: 1, kind: input, shape index: {}]
  %s2 = inlined_call_operand.vmem [shape: f32[1,128], index: 2, kind: input, shape index: {}]
  %s3 = inlined_call_operand.vmem [shape: f32[128,128], index: 3, kind: input, shape index: {}]
  %s4 = inlined_call_operand.hbm [shape: f32[128,128], index: 4, kind: output, shape index: {}]
  %s5 = sld [smem:[#allocation0]]
  $region26: #{simple_block_forward.17} parent=0
    _
  %s7 = ssub.s32 1, %s5
  %s8 = scalar_select 0, %s7, %s5
  $region1: #{simple_block_forward.17} parent=0
    #allocation2 [shape = 'u8[65536]{0}', space=vmem, size = 0x10000, scoped, tag = 'output window, operand 0, single buffered']
    #allocation3 [shape = 's32[1]{0}', space=sflag, size = 0x4, scoped, tag = 'scoped memory for simple_block_forward.17']
    %9 = vsyncpa [#allocation3], 0
    // Predicated region
    $region2: #{simple_block_forward.17} parent=1 // pred_check
      _
    $region3: #{simple_block_forward.17} parent=1 // pred_check_branch
      %11 = sbr.rel (0) target = $region5
    $region4: #{simple_block_forward.17} parent=1 // pred_region
      _
    $region5: #{simple_block_forward.17} parent=1 // pred_fallthru
      _
    // Predicated region
    $region6: #{simple_block_forward.17} parent=1 // pred_check
      _
    $region7: #{simple_block_forward.17} parent=1 // pred_check_branch
      %13 = sbr.rel (0) target = $region9
    $region8: #{simple_block_forward.17} parent=1 // pred_region
      _
    $region9: #{simple_block_forward.17} parent=1 // pred_fallthru
      _
    // Predicated region
    $region10: #{simple_block_forward.17} parent=1 // pred_check
      _
    $region11: #{simple_block_forward.17} parent=1 // pred_check_branch
      %15 = sbr.rel (0) target = $region13
    $region12: #{simple_block_forward.17} parent=1 // pred_region
      _
    $region13: #{simple_block_forward.17} parent=1 // pred_fallthru
      _
    // Predicated region
    $region14: #{simple_block_forward.17} parent=1 // pred_check
      _
    $region15: #{simple_block_forward.17} parent=1 // pred_check_branch
      %17 = sbr.rel (0) target = $region17
    $region16: #{simple_block_forward.17} parent=1 // pred_region
      _
    $region17: #{simple_block_forward.17} parent=1 // pred_fallthru
      _
    %v18 = vld [vmem:[%s0] sm:$0xff]
    %v19 = vld [vmem:[%s0 + $0x8] sm:$0xff]
    %v20 = vld [vmem:[%s0 + $0x10] sm:$0xff]
    %v21 = vld [vmem:[%s0 + $0x18] sm:$0xff]
    %v22 = vld [vmem:[%s0 + $0x20] sm:$0xff]
    %v23 = vld [vmem:[%s0 + $0x28] sm:$0xff]
    %v24 = vld [vmem:[%s0 + $0x30] sm:$0xff]
    %v25 = vld [vmem:[%s0 + $0x38] sm:$0xff]
    %v26 = vld [vmem:[%s0 + $0x40] sm:$0xff]
    %v27 = vld [vmem:[%s0 + $0x48] sm:$0xff]
    %v28 = vld [vmem:[%s0 + $0x50] sm:$0xff]
    %v29 = vld [vmem:[%s0 + $0x58] sm:$0xff]
    %v30 = vld [vmem:[%s0 + $0x60] sm:$0xff]
    %v31 = vld [vmem:[%s0 + $0x68] sm:$0xff]
    %v32 = vld [vmem:[%s0 + $0x70] sm:$0xff]
    %v33 = vld [vmem:[%s0 + $0x78] sm:$0xff]
    %v34 = vld [vmem:[%s1] sm:$0x1]
    %v36 = vlaneseq
    %v37 = vshrl.u32 %v36, 7
    %v38 = vsub.s32 0, %v37
    %v39 = vrot.slane %v34, %v38
    %v41 = vmul.f32 %v18, %v39
    %v42 = vmul.f32 %v19, %v39
    %v43 = vmul.f32 %v20, %v39
    %v44 = vmul.f32 %v21, %v39
    %v45 = vmul.f32 %v22, %v39
    %v46 = vmul.f32 %v23, %v39
    %v47 = vmul.f32 %v24, %v39
    %v48 = vmul.f32 %v25, %v39
    %v49 = vmul.f32 %v26, %v39
    %v50 = vmul.f32 %v27, %v39
    %v51 = vmul.f32 %v28, %v39
    %v52 = vmul.f32 %v29, %v39
    %v53 = vmul.f32 %v30, %v39
    %v54 = vmul.f32 %v31, %v39
    %v55 = vmul.f32 %v32, %v39
    %v56 = vmul.f32 %v33, %v39
    %v57 = vld [vmem:[%s2] sm:$0x1]
    %v59 = vlaneseq
    %v60 = vshrl.u32 %v59, 7
    %v61 = vsub.s32 0, %v60
    %v62 = vrot.slane %v57, %v61
    %v64 = vadd.f32 %v41, %v62
    %v65 = vadd.f32 %v42, %v62
    %v66 = vadd.f32 %v43, %v62
    %v67 = vadd.f32 %v44, %v62
    %v68 = vadd.f32 %v45, %v62
    %v69 = vadd.f32 %v46, %v62
    %v70 = vadd.f32 %v47, %v62
    %v71 = vadd.f32 %v48, %v62
    %v72 = vadd.f32 %v49, %v62
    %v73 = vadd.f32 %v50, %v62
    %v74 = vadd.f32 %v51, %v62
    %v75 = vadd.f32 %v52, %v62
    %v76 = vadd.f32 %v53, %v62
    %v77 = vadd.f32 %v54, %v62
    %v78 = vadd.f32 %v55, %v62
    %v79 = vadd.f32 %v56, %v62
    %v80 = vld [vmem:[%s3] sm:$0xff]
    %v81 = vld [vmem:[%s3 + $0x8] sm:$0xff]
    %v82 = vld [vmem:[%s3 + $0x10] sm:$0xff]
    %v83 = vld [vmem:[%s3 + $0x18] sm:$0xff]
    %v84 = vld [vmem:[%s3 + $0x20] sm:$0xff]
    %v85 = vld [vmem:[%s3 + $0x28] sm:$0xff]
    %v86 = vld [vmem:[%s3 + $0x30] sm:$0xff]
    %v87 = vld [vmem:[%s3 + $0x38] sm:$0xff]
    %v88 = vld [vmem:[%s3 + $0x40] sm:$0xff]
    %v89 = vld [vmem:[%s3 + $0x48] sm:$0xff]
    %v90 = vld [vmem:[%s3 + $0x50] sm:$0xff]
    %v91 = vld [vmem:[%s3 + $0x58] sm:$0xff]
    %v92 = vld [vmem:[%s3 + $0x60] sm:$0xff]
    %v93 = vld [vmem:[%s3 + $0x68] sm:$0xff]
    %v94 = vld [vmem:[%s3 + $0x70] sm:$0xff]
    %v95 = vld [vmem:[%s3 + $0x78] sm:$0xff]
    %v96 = vadd.f32 %v64, %v80
    %v97 = vadd.f32 %v65, %v81
    %v98 = vadd.f32 %v66, %v82
    %v99 = vadd.f32 %v67, %v83
    %v100 = vadd.f32 %v68, %v84
    %v101 = vadd.f32 %v69, %v85
    %v102 = vadd.f32 %v70, %v86
    %v103 = vadd.f32 %v71, %v87
    %v104 = vadd.f32 %v72, %v88
    %v105 = vadd.f32 %v73, %v89
    %v106 = vadd.f32 %v74, %v90
    %v107 = vadd.f32 %v75, %v91
    %v108 = vadd.f32 %v76, %v92
    %v109 = vadd.f32 %v77, %v93
    %v110 = vadd.f32 %v78, %v94
    %v111 = vadd.f32 %v79, %v95
    %v112 = vmax.f32 %v96, 0.0
    %v113 = vmax.f32 %v97, 0.0
    %v114 = vmax.f32 %v98, 0.0
    %v115 = vmax.f32 %v99, 0.0
    %v116 = vmax.f32 %v100, 0.0
    %v117 = vmax.f32 %v101, 0.0
    %v118 = vmax.f32 %v102, 0.0
    %v119 = vmax.f32 %v103, 0.0
    %v120 = vmax.f32 %v104, 0.0
    %v121 = vmax.f32 %v105, 0.0
    %v122 = vmax.f32 %v106, 0.0
    %v123 = vmax.f32 %v107, 0.0
    %v124 = vmax.f32 %v108, 0.0
    %v125 = vmax.f32 %v109, 0.0
    %v126 = vmax.f32 %v110, 0.0
    %v127 = vmax.f32 %v111, 0.0
    %128 = vst [vmem:[#allocation2] sm:$0xff] %v112
    %129 = vst [vmem:[#allocation2 + $0x8] sm:$0xff] %v113
    %130 = vst [vmem:[#allocation2 + $0x10] sm:$0xff] %v114
    %131 = vst [vmem:[#allocation2 + $0x18] sm:$0xff] %v115
    %132 = vst [vmem:[#allocation2 + $0x20] sm:$0xff] %v116
    %133 = vst [vmem:[#allocation2 + $0x28] sm:$0xff] %v117
    %134 = vst [vmem:[#allocation2 + $0x30] sm:$0xff] %v118
    %135 = vst [vmem:[#allocation2 + $0x38] sm:$0xff] %v119
    %136 = vst [vmem:[#allocation2 + $0x40] sm:$0xff] %v120
    %137 = vst [vmem:[#allocation2 + $0x48] sm:$0xff] %v121
    %138 = vst [vmem:[#allocation2 + $0x50] sm:$0xff] %v122
    %139 = vst [vmem:[#allocation2 + $0x58] sm:$0xff] %v123
    %140 = vst [vmem:[#allocation2 + $0x60] sm:$0xff] %v124
    %141 = vst [vmem:[#allocation2 + $0x68] sm:$0xff] %v125
    %142 = vst [vmem:[#allocation2 + $0x70] sm:$0xff] %v126
    %143 = vst [vmem:[#allocation2 + $0x78] sm:$0xff] %v127
    // Predicated region
    $region18: #{simple_block_forward.17} parent=1 // pred_check
      _
    $region19: #{simple_block_forward.17} parent=1 // pred_check_branch
      %145 = sbr.rel (0) target = $region21
    $region20: #{simple_block_forward.17} parent=1 // pred_region
      %s147 = ssub.s32 2048, 2048
      %148 = vsyncadd [#allocation3], %s147
      %s149 = sshll.u32 [#allocation2], 4
      %s150 = int_to_ptr.vmem [resolvable:$true] %s149
      %155 = dma.vmem_to_hbm [thread:$0]  %s150, 2048, %s4, [#allocation3], 128, 128, 8
    $region21: #{simple_block_forward.17} parent=1 // pred_fallthru
      _
    // Predicated region
    $region22: #{simple_block_forward.17} parent=1 // pred_check
      _
    $region23: #{simple_block_forward.17} parent=1 // pred_check_branch
      %157 = sbr.rel (0) target = $region25
    $region24: #{simple_block_forward.17} parent=1 // pred_region
      %158 = dma.done [#allocation3], 2048
    $region25: #{simple_block_forward.17} parent=1 // pred_fallthru
      _
    %159 = vsyncpa [#allocation3], 1

// kernel: simple_block_forward.12
$region0: #{simple_block_forward.12}
  #allocation0 [shape = 'u32[]', space=smem, size = 0x4, offset = 0x4, fixed_abs, tag = 'smem constant byte address 0x4 - core index']
  #allocation1 [shape = 'u32[144,128]{1,0:T(1,128)}', space=vmem, size = 0x12000, scoped, tag = 'internal scratch']
  %s0 = inlined_call_operand.vmem [shape: f32[2,10,10,128], index: 0, kind: input, shape index: {}]
  %s1 = inlined_call_operand.vmem [shape: bf16[3,3,128,128], index: 1, kind: input, shape index: {}]
  %s2 = inlined_call_operand.vmem [shape: f32[2,64,128], index: 2, kind: output, shape index: {}]
  %s3 = sld [smem:[#allocation0]]
  $region41: #{simple_block_forward.12} parent=0
    _
  %s5 = ssub.s32 1, %s3
  %s6 = scalar_select 0, %s5, %s3
  loop: start=0, step=1, limit=4
  $region2: #{simple_block_forward.12} parent=0 // loop_pre_header
    _
  $region3: #{simple_block_forward.12} parent=0 // loop_header
    %s8 = sphi 0, %s12
    %p9 = scmp.ge.s32.totalorder %s8, 4
    %s18 = sphi 0, %s20
    %s21 = sphi 0, %s18
    %s22 = sphi 0, %s21
    %s38 = sphi 0, %s22
    %s42 = sphi 0, %s42
    %s44 = sphi 0, %s42
    %s45 = sphi 0, %s44
    %s59 = sphi 0, %s45
    %s65 = sphi 0, %s67
    %s68 = sphi 0, %s65
    %s69 = sphi 0, %s68
    %s85 = sphi 0, %s69
  $region4: #{simple_block_forward.12} parent=0 // loop_header_branch
    %11 = sbr.rel (%p9) target = $region8
  $region5: #{simple_block_forward.12} parent=0 // loop_body
    %s13 = ssub.s32 %s8, 1
    %s14 = ssub.s32 %s8, 2
    %s15 = sadd.s32 %s8, 1
    %s16 = ssub.s32 %s8, %s15
    %p17 = scmp.eq.s32.totalorder %s16, 0
    %s19 = sadd.s32 %s18, 1
    %s20 = scalar_select %p17, %s18, %s19
    %p23 = pneg %p17
    %p24 = scmp.eq.s32.totalorder %s8, 1
    %p25 = por %p23, %p24
    %p26 = scmp.ne.s32.totalorder %s18, %s21
    %p27 = scmp.eq.s32.totalorder %s8, 0
    %p28 = por %p26, %p27
    %p29 = scmp.ne.s32.totalorder %s18, %s21
    %p30 = scmp.eq.s32.totalorder %s13, 1
    %p31 = por %p29, %p30
    %p32 = scmp.ne.s32.totalorder %s21, %s22
    %p33 = scmp.eq.s32.totalorder %s13, 0
    %p34 = por %p32, %p33
    %p35 = scmp.ne.s32.totalorder %s21, %s22
    %p36 = scmp.eq.s32.totalorder %s14, 1
    %p37 = por %p35, %p36
    %p39 = scmp.ne.s32.totalorder %s22, %s38
    %p40 = scmp.eq.s32.totalorder %s14, 0
    %p41 = por %p39, %p40
    %s43 = sadd.s32 %s42, 1
    %p46 = scmp.eq.s32.totalorder %s8, 1
    %p47 = scmp.ne.s32.totalorder %s42, %s44
    %p48 = scmp.eq.s32.totalorder %s8, 0
    %p49 = por %p47, %p48
    %p50 = scmp.ne.s32.totalorder %s42, %s44
    %p51 = scmp.eq.s32.totalorder %s13, 1
    %p52 = por %p50, %p51
    %p53 = scmp.ne.s32.totalorder %s44, %s45
    %p54 = scmp.eq.s32.totalorder %s13, 0
    %p55 = por %p53, %p54
    %p56 = scmp.ne.s32.totalorder %s44, %s45
    %p57 = scmp.eq.s32.totalorder %s14, 1
    %p58 = por %p56, %p57
    %p60 = scmp.ne.s32.totalorder %s45, %s59
    %p61 = scmp.eq.s32.totalorder %s14, 0
    %p62 = por %p60, %p61
    %s63 = ssub.s32 %s8, %s15
    %p64 = scmp.eq.s32.totalorder %s63, 0
    %s66 = sadd.s32 %s65, 1
    %s67 = scalar_select %p64, %s65, %s66
    %p70 = pneg %p64
    %p71 = scmp.eq.s32.totalorder %s8, 1
    %p72 = por %p70, %p71
    %p73 = scmp.ne.s32.totalorder %s65, %s68
    %p74 = scmp.eq.s32.totalorder %s8, 0
    %p75 = por %p73, %p74
    %p76 = scmp.ne.s32.totalorder %s65, %s68
    %p77 = scmp.eq.s32.totalorder %s13, 1
    %p78 = por %p76, %p77
    %p79 = scmp.ne.s32.totalorder %s68, %s69
    %p80 = scmp.eq.s32.totalorder %s13, 0
    %p81 = por %p79, %p80
    %p82 = scmp.ne.s32.totalorder %s68, %s69
    %p83 = scmp.eq.s32.totalorder %s14, 1
    %p84 = por %p82, %p83
    %p86 = scmp.ne.s32.totalorder %s69, %s85
    %p87 = scmp.eq.s32.totalorder %s14, 0
    %p88 = por %p86, %p87
    %p89 = scmp.le.s32.totalorder 1, %s8
    %p90 = scmp.lt.s32.totalorder %s8, 3
    %p91 = pnand %p89, %p90
    %p92 = pneg %p91
    // Predicated region
    $region9: #{simple_block_forward.12} parent=5 // pred_check
      _
    $region10: #{simple_block_forward.12} parent=5 // pred_check_branch
      %94 = sbr.rel (%p91) target = $region12
    $region11: #{simple_block_forward.12} parent=5 // pred_region
      %s95 = ssub.s32 %s8, 1
      // Predicated region
      $region13: #{simple_block_forward.12} parent=11 // pred_check
        %p96 = pneg %p55
      $region14: #{simple_block_forward.12} parent=11 // pred_check_branch
        %98 = sbr.rel (%p96) target = $region16
      $region15: #{simple_block_forward.12} parent=11 // pred_region
        _
      $region16: #{simple_block_forward.12} parent=11 // pred_fallthru
        _
    $region12: #{simple_block_forward.12} parent=5 // pred_fallthru
      _
    %p99 = scmp.lt.s32.totalorder %s8, 2
    // Predicated region
    $region17: #{simple_block_forward.12} parent=5 // pred_check
      %p100 = pneg %p99
    $region18: #{simple_block_forward.12} parent=5 // pred_check_branch
      %102 = sbr.rel (%p100) target = $region20
    $region19: #{simple_block_forward.12} parent=5 // pred_region
      // Predicated region
      $region21: #{simple_block_forward.12} parent=19 // pred_check
        %p103 = pneg %p28
      $region22: #{simple_block_forward.12} parent=19 // pred_check_branch
        %105 = sbr.rel (%p103) target = $region24
      $region23: #{simple_block_forward.12} parent=19 // pred_region
        %p106 = scmp.lt.s32.totalorder %s8, 1
        %s107 = scalar_select %p106, %s8, 1
        %s108 = smul.addr %s107, 20
        %s109 = smul.addr %s108, 8
        %s110 = scalar_lea.vmem %s0, %s109
      $region24: #{simple_block_forward.12} parent=19 // pred_fallthru
        _
    $region20: #{simple_block_forward.12} parent=5 // pred_fallthru
      _
    %p111 = scmp.le.s32.totalorder 1, %s8
    %p112 = scmp.lt.s32.totalorder %s8, 3
    %p113 = pnand %p111, %p112
    %p114 = pneg %p113
    // Predicated region
    $region25: #{simple_block_forward.12} parent=5 // pred_check
      _
    $region26: #{simple_block_forward.12} parent=5 // pred_check_branch
      %116 = sbr.rel (%p113) target = $region28
    $region27: #{simple_block_forward.12} parent=5 // pred_region
      %s117 = ssub.s32 %s8, 1
      %p118 = scmp.lt.s32.totalorder %s13, 1
      %s119 = scalar_select %p118, %s13, 1
      %s120 = smul.addr %s119, 20
      %s121 = smul.addr %s120, 8
      %s122 = scalar_lea.vmem %s0, %s121
      %p123 = pneg %p34
      %p124 = pneg %p31
      %p125 = pneg %p55
      %p126 = pneg %p52
      %p127 = pneg %p81
      %p128 = pneg %p78
      %p129 = scmp.lt.s32.totalorder %s13, 1
      %s130 = scalar_select %p129, %s13, 1
      %s131 = smul.addr %s130, 8
      %s132 = smul.addr %s131, 8
      %s133 = scalar_lea.vmem %s2, %s132
      %p134 = scmp.lt.s32.totalorder %s13, 1
      %s135 = scalar_select %p134, %s13, 1
      %s136 = smul.addr %s135, 20
      %s137 = smul.addr %s136, 8
      %s138 = scalar_lea.vmem %s0, %s137
      %p139 = scmp.lt.s32.totalorder %s13, 1
      %s140 = scalar_select %p139, %s13, 1
      %s141 = smul.addr %s140, 8
      %s142 = smul.addr %s141, 8
      %s143 = scalar_lea.vmem %s2, %s142
      %v145 = vld [vmem:[%s138] sm:$0xff]
      %v146 = vld [vmem:[%s138 + $0x10] sm:$0xff]
      %v147 = vld [vmem:[%s138 + $0x20] sm:$0xff]
      %v148 = vld [vmem:[%s138 + $0x30] sm:$0xff]
      %v149 = vld [vmem:[%s138 + $0x40] sm:$0xff]
      %v150 = vld [vmem:[%s138 + $0x50] sm:$0xff]
      %v151 = vld [vmem:[%s138 + $0x60] sm:$0xff]
      %v152 = vld [vmem:[%s138 + $0x70] sm:$0xff]
      %v153 = vpack.c.bf16 %v146, %v145
      %v154 = vpack.c.bf16 %v148, %v147
      %v155 = vpack.c.bf16 %v150, %v149
      %v156 = vpack.c.bf16 %v152, %v151
      %v157 = vld [vmem:[%s1] sm:$0xf]
      %v158 = vld [vmem:[%s1 + $0x4] sm:$0xf]
      %v159 = vld [vmem:[%s1 + $0x8] sm:$0xf]
      %v160 = vld [vmem:[%s1 + $0xc] sm:$0xf]
      %v161 = vld [vmem:[%s1 + $0x10] sm:$0xf]
      %v162 = vld [vmem:[%s1 + $0x14] sm:$0xf]
      %v163 = vld [vmem:[%s1 + $0x18] sm:$0xf]
      %v164 = vld [vmem:[%s1 + $0x1c] sm:$0xf]
      %v165 = vld [vmem:[%s1 + $0x20] sm:$0xf]
      %v166 = vld [vmem:[%s1 + $0x24] sm:$0xf]
      %v167 = vld [vmem:[%s1 + $0x28] sm:$0xf]
      %v168 = vld [vmem:[%s1 + $0x2c] sm:$0xf]
      %v169 = vld [vmem:[%s1 + $0x30] sm:$0xf]
      %v170 = vld [vmem:[%s1 + $0x34] sm:$0xf]
      %v171 = vld [vmem:[%s1 + $0x38] sm:$0xf]
      %v172 = vld [vmem:[%s1 + $0x3c] sm:$0xf]
      %v173 = vld [vmem:[%s138 + $0x1] sm:$0xff]
      %v174 = vld [vmem:[%s138 + $0x11] sm:$0xff]
      %v175 = vld [vmem:[%s138 + $0x21] sm:$0xff]
      %v176 = vld [vmem:[%s138 + $0x31] sm:$0xff]
      %v177 = vld [vmem:[%s138 + $0x41] sm:$0xff]
      %v178 = vld [vmem:[%s138 + $0x51] sm:$0xff]
      %v179 = vld [vmem:[%s138 + $0x61] sm:$0xff]
      %v180 = vld [vmem:[%s138 + $0x71] sm:$0xff]
      %v181 = vpack.c.bf16 %v174, %v173
      %v182 = vpack.c.bf16 %v176, %v175
      %v183 = vpack.c.bf16 %v178, %v177
      %v184 = vpack.c.bf16 %v180, %v179
      %s185 = scalar_lea.vmem %s1, 64
      %v186 = vld [vmem:[%s185] sm:$0xf]
      %v187 = vld [vmem:[%s185 + $0x4] sm:$0xf]
      %v188 = vld [vmem:[%s185 + $0x8] sm:$0xf]
      %v189 = vld [vmem:[%s185 + $0xc] sm:$0xf]
      %v190 = vld [vmem:[%s185 + $0x10] sm:$0xf]
      %v191 = vld [vmem:[%s185 + $0x14] sm:$0xf]
      %v192 = vld [vmem:[%s185 + $0x18] sm:$0xf]
      %v193 = vld [vmem:[%s185 + $0x1c] sm:$0xf]
      %v194 = vld [vmem:[%s185 + $0x20] sm:$0xf]
      %v195 = vld [vmem:[%s185 + $0x24] sm:$0xf]
      %v196 = vld [vmem:[%s185 + $0x28] sm:$0xf]
      %v197 = vld [vmem:[%s185 + $0x2c] sm:$0xf]
      %v198 = vld [vmem:[%s185 + $0x30] sm:$0xf]
      %v199 = vld [vmem:[%s185 + $0x34] sm:$0xf]
      %v200 = vld [vmem:[%s185 + $0x38] sm:$0xf]
      %v201 = vld [vmem:[%s185 + $0x3c] sm:$0xf]
      %v218 = vunpack.c.l.b16 %v186
      %v219 = vunpack.c.l.b16 %v187
      %v220 = vunpack.c.l.b16 %v188
      %v221 = vunpack.c.l.b16 %v189
      %v222 = vunpack.c.l.b16 %v190
      %v223 = vunpack.c.l.b16 %v191
      %v224 = vunpack.c.l.b16 %v192
      %v225 = vunpack.c.l.b16 %v193
      %v226 = vunpack.c.l.b16 %v194
      %v227 = vunpack.c.l.b16 %v195
      %v228 = vunpack.c.l.b16 %v196
      %v229 = vunpack.c.l.b16 %v197
      %v230 = vunpack.c.l.b16 %v198
      %v231 = vunpack.c.l.b16 %v199
      %v232 = vunpack.c.l.b16 %v200
      %v233 = vunpack.c.l.b16 %v201
      %v234 = vpack.c.b16 %v219, %v218
      %v235 = vpack.c.b16 %v221, %v220
      %v236 = vpack.c.b16 %v223, %v222
      %v237 = vpack.c.b16 %v225, %v224
      %v238 = vpack.c.b16 %v227, %v226
      %v239 = vpack.c.b16 %v229, %v228
      %v240 = vpack.c.b16 %v231, %v230
      %v241 = vpack.c.b16 %v233, %v232
      %250 = vmatprep.subr.bf16.mxu0 0
      %251 = vmatpush1.bf16.msra.mxu0 %v241
      %252 = vmatprep.subr.bf16.mxu0 0
      %253 = vmatpush1.bf16.msra.mxu0 %v240
      %254 = vmatprep.subr.bf16.mxu0 0
      %255 = vmatpush1.bf16.msra.mxu0 %v239
      %256 = vmatprep.subr.bf16.mxu0 0
      %257 = vmatpush1.bf16.msra.mxu0 %v238
      %258 = vmatprep.subr.bf16.mxu0 0
      %259 = vmatpush1.bf16.msra.mxu0 %v237
      %260 = vmatprep.subr.bf16.mxu0 0
      %261 = vmatpush1.bf16.msra.mxu0 %v236
      %262 = vmatprep.subr.bf16.mxu0 0
      %263 = vmatpush1.bf16.msra.mxu0 %v235
      %264 = vmatprep.subr.bf16.mxu0 0
      %265 = vmatpush1.bf16.msra.mxu0 %v234
      %266 = vmatprep.subr.bf16.mxu0 0
      %267 = vmatpush2.bf16.msra.mxu0 0
      %268 = vmatprep.subr.bf16.mxu0 0
      %269 = vmatpush2.bf16.msra.mxu0 0
      %270 = vmatprep.subr.bf16.mxu0 0
      %271 = vmatpush2.bf16.msra.mxu0 0
      %272 = vmatprep.subr.bf16.mxu0 0
      %273 = vmatpush2.bf16.msra.mxu0 0
      %274 = vmatprep.subr.bf16.mxu0 0
      %275 = vmatpush2.bf16.msra.mxu0 0
      %276 = vmatprep.subr.bf16.mxu0 0
      %277 = vmatpush2.bf16.msra.mxu0 0
      %278 = vmatprep.subr.bf16.mxu0 0
      %279 = vmatpush2.bf16.msra.mxu0 0
      %280 = vmatprep.subr.bf16.mxu0 0
      %281 = vmatpush2.bf16.msra.mxu0 0
      %282 = vmatprep.mubr.bf16.mxu0 0
      %283 = vmatmul.mubr.bf16.gmra.mxu0 %v181
      %v284 = vpop.f32.mrf.mxu0
      %v285 = vadd.f32 0.0, %v284
      %v286 = vpop.f32.mrf.mxu0
      %v287 = vpop.f32.mrf.mxu0
      %v288 = vadd.f32 0.0, %v287
      %v289 = vpop.f32.mrf.mxu0
      %290 = vmatprep.mubr.bf16.mxu0 0
      %291 = vmatmul.mubr.bf16.gmra.mxu0 %v182
      %v292 = vpop.f32.mrf.mxu0
      %v293 = vadd.f32 0.0, %v292
      %v294 = vpop.f32.mrf.mxu0
      %v295 = vpop.f32.mrf.mxu0
      %v296 = vadd.f32 0.0, %v295
      %v297 = vpop.f32.mrf.mxu0
      %298 = vmatprep.mubr.bf16.mxu0 0
      %299 = vmatmul.mubr.bf16.gmra.mxu0 %v183
      %v300 = vpop.f32.mrf.mxu0
      %v301 = vadd.f32 0.0, %v300
      %v302 = vpop.f32.mrf.mxu0
      %v303 = vpop.f32.mrf.mxu0
      %v304 = vadd.f32 0.0, %v303
      %v305 = vpop.f32.mrf.mxu0
      %306 = vmatprep.mubr.bf16.mxu0 0
      %307 = vmatmul.mubr.bf16.gmra.mxu0 %v184
      %v308 = vpop.f32.mrf.mxu0
      %v309 = vadd.f32 0.0, %v308
      %v310 = vpop.f32.mrf.mxu0
      %v311 = vpop.f32.mrf.mxu0
      %v312 = vadd.f32 0.0, %v311
      %v313 = vpop.f32.mrf.mxu0
      %314 = vdwg.mxu0
      %v331 = vunpack.c.l.b16 %v157
      %v332 = vunpack.c.l.b16 %v158
      %v333 = vunpack.c.l.b16 %v159
      %v334 = vunpack.c.l.b16 %v160
      %v335 = vunpack.c.l.b16 %v161
      %v336 = vunpack.c.l.b16 %v162
      %v337 = vunpack.c.l.b16 %v163
      %v338 = vunpack.c.l.b16 %v164
      %v339 = vunpack.c.l.b16 %v165
      %v340 = vunpack.c.l.b16 %v166
      %v341 = vunpack.c.l.b16 %v167
      %v342 = vunpack.c.l.b16 %v168
      %v343 = vunpack.c.l.b16 %v169
      %v344 = vunpack.c.l.b16 %v170
      %v345 = vunpack.c.l.b16 %v171
      %v346 = vunpack.c.l.b16 %v172
      %v347 = vpack.c.b16 %v332, %v331
      %v348 = vpack.c.b16 %v334, %v333
      %v349 = vpack.c.b16 %v336, %v335
      %v350 = vpack.c.b16 %v338, %v337
      %v351 = vpack.c.b16 %v340, %v339
      %v352 = vpack.c.b16 %v342, %v341
      %v353 = vpack.c.b16 %v344, %v343
      %v354 = vpack.c.b16 %v346, %v345
      %363 = vmatprep.subr.bf16.mxu0 0
      %364 = vmatpush1.bf16.msra.mxu0 %v354
      %365 = vmatprep.subr.bf16.mxu0 0
      %366 = vmatpush1.bf16.msra.mxu0 %v353
      %367 = vmatprep.subr.bf16.mxu0 0
      %368 = vmatpush1.bf16.msra.mxu0 %v352
      %369 = vmatprep.subr.bf16.mxu0 0
      %370 = vmatpush1.bf16.msra.mxu0 %v351
      %371 = vmatprep.subr.bf16.mxu0 0
      %372 = vmatpush1.bf16.msra.mxu0 %v350
      %373 = vmatprep.subr.bf16.mxu0 0
      %374 = vmatpush1.bf16.msra.mxu0 %v349
      %375 = vmatprep.subr.bf16.mxu0 0
      %376 = vmatpush1.bf16.msra.mxu0 %v348
      %377 = vmatprep.subr.bf16.mxu0 0
      %378 = vmatpush1.bf16.msra.mxu0 %v347
      %379 = vmatprep.subr.bf16.mxu0 0
      %380 = vmatpush2.bf16.msra.mxu0 0
      %381 = vmatprep.subr.bf16.mxu0 0
      %382 = vmatpush2.bf16.msra.mxu0 0
      %383 = vmatprep.subr.bf16.mxu0 0
      %384 = vmatpush2.bf16.msra.mxu0 0
      %385 = vmatprep.subr.bf16.mxu0 0
      %386 = vmatpush2.bf16.msra.mxu0 0
      %387 = vmatprep.subr.bf16.mxu0 0
      %388 = vmatpush2.bf16.msra.mxu0 0
      %389 = vmatprep.subr.bf16.mxu0 0
      %390 = vmatpush2.bf16.msra.mxu0 0
      %391 = vmatprep.subr.bf16.mxu0 0
      %392 = vmatpush2.bf16.msra.mxu0 0
      %393 = vmatprep.subr.bf16.mxu0 0
      %394 = vmatpush2.bf16.msra.mxu0 0
      %395 = vmatprep.mubr.bf16.mxu0 0
      %396 = vmatmul.mubr.bf16.gmra.mxu0 %v153
      %v397 = vpop.f32.mrf.mxu0
      %v398 = vadd.f32 %v285, %v397
      %v399 = vpop.f32.mrf.mxu0
      %v400 = vpop.f32.mrf.mxu0
      %v401 = vadd.f32 %v288, %v400
      %v402 = vpop.f32.mrf.mxu0
      %403 = vmatprep.mubr.bf16.mxu0 0
      %404 = vmatmul.mubr.bf16.gmra.mxu0 %v154
      %v405 = vpop.f32.mrf.mxu0
      %v406 = vadd.f32 %v293, %v405
      %v407 = vpop.f32.mrf.mxu0
      %v408 = vpop.f32.mrf.mxu0
      %v409 = vadd.f32 %v296, %v408
      %v410 = vpop.f32.mrf.mxu0
      %411 = vmatprep.mubr.bf16.mxu0 0
      %412 = vmatmul.mubr.bf16.gmra.mxu0 %v155
      %v413 = vpop.f32.mrf.mxu0
      %v414 = vadd.f32 %v301, %v413
      %v415 = vpop.f32.mrf.mxu0
      %v416 = vpop.f32.mrf.mxu0
      %v417 = vadd.f32 %v304, %v416
      %v418 = vpop.f32.mrf.mxu0
      %419 = vmatprep.mubr.bf16.mxu0 0
      %420 = vmatmul.mubr.bf16.gmra.mxu0 %v156
      %v421 = vpop.f32.mrf.mxu0
      %v422 = vadd.f32 %v309, %v421
      %v423 = vpop.f32.mrf.mxu0
      %v424 = vpop.f32.mrf.mxu0
      %v425 = vadd.f32 %v312, %v424
      %v426 = vpop.f32.mrf.mxu0
      %427 = vdwg.mxu0
      %v428 = vld [vmem:[%s138 + $0x2] sm:$0xff]
      %v429 = vld [vmem:[%s138 + $0x12] sm:$0xff]
      %v430 = vld [vmem:[%s138 + $0x22] sm:$0xff]
      %v431 = vld [vmem:[%s138 + $0x32] sm:$0xff]
      %v432 = vld [vmem:[%s138 + $0x42] sm:$0xff]
      %v433 = vld [vmem:[%s138 + $0x52] sm:$0xff]
      %v434 = vld [vmem:[%s138 + $0x62] sm:$0xff]
      %v435 = vld [vmem:[%s138 + $0x72] sm:$0xff]
      %v436 = vpack.c.bf16 %v429, %v428
      %v437 = vpack.c.bf16 %v431, %v430
      %v438 = vpack.c.bf16 %v433, %v432
      %v439 = vpack.c.bf16 %v435, %v434
      %s440 = scalar_lea.vmem %s1, 128
      %v441 = vld [vmem:[%s440] sm:$0xf]
      %v442 = vld [vmem:[%s440 + $0x4] sm:$0xf]
      %v443 = vld [vmem:[%s440 + $0x8] sm:$0xf]
      %v444 = vld [vmem:[%s440 + $0xc] sm:$0xf]
      %v445 = vld [vmem:[%s440 + $0x10] sm:$0xf]
      %v446 = vld [vmem:[%s440 + $0x14] sm:$0xf]
      %v447 = vld [vmem:[%s440 + $0x18] sm:$0xf]
      %v448 = vld [vmem:[%s440 + $0x1c] sm:$0xf]
      %v449 = vld [vmem:[%s440 + $0x20] sm:$0xf]
      %v450 = vld [vmem:[%s440 + $0x24] sm:$0xf]
      %v451 = vld [vmem:[%s440 + $0x28] sm:$0xf]
      %v452 = vld [vmem:[%s440 + $0x2c] sm:$0xf]
      %v453 = vld [vmem:[%s440 + $0x30] sm:$0xf]
      %v454 = vld [vmem:[%s440 + $0x34] sm:$0xf]
      %v455 = vld [vmem:[%s440 + $0x38] sm:$0xf]
      %v456 = vld [vmem:[%s440 + $0x3c] sm:$0xf]
      %v473 = vunpack.c.l.b16 %v441
      %v474 = vunpack.c.l.b16 %v442
      %v475 = vunpack.c.l.b16 %v443
      %v476 = vunpack.c.l.b16 %v444
      %v477 = vunpack.c.l.b16 %v445
      %v478 = vunpack.c.l.b16 %v446
      %v479 = vunpack.c.l.b16 %v447
      %v480 = vunpack.c.l.b16 %v448
      %v481 = vunpack.c.l.b16 %v449
      %v482 = vunpack.c.l.b16 %v450
      %v483 = vunpack.c.l.b16 %v451
      %v484 = vunpack.c.l.b16 %v452
      %v485 = vunpack.c.l.b16 %v453
      %v486 = vunpack.c.l.b16 %v454
      %v487 = vunpack.c.l.b16 %v455
      %v488 = vunpack.c.l.b16 %v456
      %v489 = vpack.c.b16 %v474, %v473
      %v490 = vpack.c.b16 %v476, %v475
      %v491 = vpack.c.b16 %v478, %v477
      %v492 = vpack.c.b16 %v480, %v479
      %v493 = vpack.c.b16 %v482, %v481
      %v494 = vpack.c.b16 %v484, %v483
      %v495 = vpack.c.b16 %v486, %v485
      %v496 = vpack.c.b16 %v488, %v487
      %505 = vmatprep.subr.bf16.mxu0 0
      %506 = vmatpush1.bf16.msra.mxu0 %v496
      %507 = vmatprep.subr.bf16.mxu0 0
      %508 = vmatpush1.bf16.msra.mxu0 %v495
      %509 = vmatprep.subr.bf16.mxu0 0
      %510 = vmatpush1.bf16.msra.mxu0 %v494
      %511 = vmatprep.subr.bf16.mxu0 0
      %512 = vmatpush1.bf16.msra.mxu0 %v493
      %513 = vmatprep.subr.bf16.mxu0 0
      %514 = vmatpush1.bf16.msra.mxu0 %v492
      %515 = vmatprep.subr.bf16.mxu0 0
      %516 = vmatpush1.bf16.msra.mxu0 %v491
      %517 = vmatprep.subr.bf16.mxu0 0
      %518 = vmatpush1.bf16.msra.mxu0 %v490
      %519 = vmatprep.subr.bf16.mxu0 0
      %520 = vmatpush1.bf16.msra.mxu0 %v489
      %521 = vmatprep.subr.bf16.mxu0 0
      %522 = vmatpush2.bf16.msra.mxu0 0
      %523 = vmatprep.subr.bf16.mxu0 0
      %524 = vmatpush2.bf16.msra.mxu0 0
      %525 = vmatprep.subr.bf16.mxu0 0
      %526 = vmatpush2.bf16.msra.mxu0 0
      %527 = vmatprep.subr.bf16.mxu0 0
      %528 = vmatpush2.bf16.msra.mxu0 0
      %529 = vmatprep.subr.bf16.mxu0 0
      %530 = vmatpush2.bf16.msra.mxu0 0
      %531 = vmatprep.subr.bf16.mxu0 0
      %532 = vmatpush2.bf16.msra.mxu0 0
      %533 = vmatprep.subr.bf16.mxu0 0
      %534 = vmatpush2.bf16.msra.mxu0 0
      %535 = vmatprep.subr.bf16.mxu0 0
      %536 = vmatpush2.bf16.msra.mxu0 0
      %537 = vmatprep.mubr.bf16.mxu0 0
      %538 = vmatmul.mubr.bf16.gmra.mxu0 %v436
      %v539 = vpop.f32.mrf.mxu0
      %v540 = vadd.f32 0.0, %v539
      %v541 = vpop.f32.mrf.mxu0
      %v542 = vpop.f32.mrf.mxu0
      %v543 = vadd.f32 0.0, %v542
      %v544 = vpop.f32.mrf.mxu0
      %545 = vmatprep.mubr.bf16.mxu0 0
      %546 = vmatmul.mubr.bf16.gmra.mxu0 %v437
      %v547 = vpop.f32.mrf.mxu0
      %v548 = vadd.f32 0.0, %v547
      %v549 = vpop.f32.mrf.mxu0
      %v550 = vpop.f32.mrf.mxu0
      %v551 = vadd.f32 0.0, %v550
      %v552 = vpop.f32.mrf.mxu0
      %553 = vmatprep.mubr.bf16.mxu0 0
      %554 = vmatmul.mubr.bf16.gmra.mxu0 %v438
      %v555 = vpop.f32.mrf.mxu0
      %v556 = vadd.f32 0.0, %v555
      %v557 = vpop.f32.mrf.mxu0
      %v558 = vpop.f32.mrf.mxu0
      %v559 = vadd.f32 0.0, %v558
      %v560 = vpop.f32.mrf.mxu0
      %561 = vmatprep.mubr.bf16.mxu0 0
      %562 = vmatmul.mubr.bf16.gmra.mxu0 %v439
      %v563 = vpop.f32.mrf.mxu0
      %v564 = vadd.f32 0.0, %v563
      %v565 = vpop.f32.mrf.mxu0
      %v566 = vpop.f32.mrf.mxu0
      %v567 = vadd.f32 0.0, %v566
      %v568 = vpop.f32.mrf.mxu0
      %569 = vdwg.mxu0
      %v570 = vadd.f32 %v398, %v540
      %v571 = vadd.f32 %v401, %v543
      %v572 = vadd.f32 %v406, %v548
      %v573 = vadd.f32 %v409, %v551
      %v574 = vadd.f32 %v414, %v556
      %v575 = vadd.f32 %v417, %v559
      %v576 = vadd.f32 %v422, %v564
      %v577 = vadd.f32 %v425, %v567
      %s578 = scalar_lea.vmem %s138, 16
      %v579 = vld [vmem:[%s578] sm:$0xff]
      %v580 = vld [vmem:[%s578 + $0x10] sm:$0xff]
      %v581 = vld [vmem:[%s578 + $0x20] sm:$0xff]
      %v582 = vld [vmem:[%s578 + $0x30] sm:$0xff]
      %v583 = vld [vmem:[%s578 + $0x40] sm:$0xff]
      %v584 = vld [vmem:[%s578 + $0x50] sm:$0xff]
      %v585 = vld [vmem:[%s578 + $0x60] sm:$0xff]
      %v586 = vld [vmem:[%s578 + $0x70] sm:$0xff]
      %v587 = vpack.c.bf16 %v580, %v579
      %v588 = vpack.c.bf16 %v582, %v581
      %v589 = vpack.c.bf16 %v584, %v583
      %v590 = vpack.c.bf16 %v586, %v585
      %s591 = scalar_lea.vmem %s1, 192
      %v592 = vld [vmem:[%s591] sm:$0xf]
      %v593 = vld [vmem:[%s591 + $0x4] sm:$0xf]
      %v594 = vld [vmem:[%s591 + $0x8] sm:$0xf]
      %v595 = vld [vmem:[%s591 + $0xc] sm:$0xf]
      %v596 = vld [vmem:[%s591 + $0x10] sm:$0xf]
      %v597 = vld [vmem:[%s591 + $0x14] sm:$0xf]
      %v598 = vld [vmem:[%s591 + $0x18] sm:$0xf]
      %v599 = vld [vmem:[%s591 + $0x1c] sm:$0xf]
      %v600 = vld [vmem:[%s591 + $0x20] sm:$0xf]
      %v601 = vld [vmem:[%s591 + $0x24] sm:$0xf]
      %v602 = vld [vmem:[%s591 + $0x28] sm:$0xf]
      %v603 = vld [vmem:[%s591 + $0x2c] sm:$0xf]
      %v604 = vld [vmem:[%s591 + $0x30] sm:$0xf]
      %v605 = vld [vmem:[%s591 + $0x34] sm:$0xf]
      %v606 = vld [vmem:[%s591 + $0x38] sm:$0xf]
      %v607 = vld [vmem:[%s591 + $0x3c] sm:$0xf]
      %v624 = vunpack.c.l.b16 %v592
      %v625 = vunpack.c.l.b16 %v593
      %v626 = vunpack.c.l.b16 %v594
      %v627 = vunpack.c.l.b16 %v595
      %v628 = vunpack.c.l.b16 %v596
      %v629 = vunpack.c.l.b16 %v597
      %v630 = vunpack.c.l.b16 %v598
      %v631 = vunpack.c.l.b16 %v599
      %v632 = vunpack.c.l.b16 %v600
      %v633 = vunpack.c.l.b16 %v601
      %v634 = vunpack.c.l.b16 %v602
      %v635 = vunpack.c.l.b16 %v603
      %v636 = vunpack.c.l.b16 %v604
      %v637 = vunpack.c.l.b16 %v605
      %v638 = vunpack.c.l.b16 %v606
      %v639 = vunpack.c.l.b16 %v607
      %v640 = vpack.c.b16 %v625, %v624
      %v641 = vpack.c.b16 %v627, %v626
      %v642 = vpack.c.b16 %v629, %v628
      %v643 = vpack.c.b16 %v631, %v630
      %v644 = vpack.c.b16 %v633, %v632
      %v645 = vpack.c.b16 %v635, %v634
      %v646 = vpack.c.b16 %v637, %v636
      %v647 = vpack.c.b16 %v639, %v638
      %656 = vmatprep.subr.bf16.mxu0 0
      %657 = vmatpush1.bf16.msra.mxu0 %v647
      %658 = vmatprep.subr.bf16.mxu0 0
      %659 = vmatpush1.bf16.msra.mxu0 %v646
      %660 = vmatprep.subr.bf16.mxu0 0
      %661 = vmatpush1.bf16.msra.mxu0 %v645
      %662 = vmatprep.subr.bf16.mxu0 0
      %663 = vmatpush1.bf16.msra.mxu0 %v644
      %664 = vmatprep.subr.bf16.mxu0 0
      %665 = vmatpush1.bf16.msra.mxu0 %v643
      %666 = vmatprep.subr.bf16.mxu0 0
      %667 = vmatpush1.bf16.msra.mxu0 %v642
      %668 = vmatprep.subr.bf16.mxu0 0
      %669 = vmatpush1.bf16.msra.mxu0 %v641
      %670 = vmatprep.subr.bf16.mxu0 0
      %671 = vmatpush1.bf16.msra.mxu0 %v640
      %672 = vmatprep.subr.bf16.mxu0 0
      %673 = vmatpush2.bf16.msra.mxu0 0
      %674 = vmatprep.subr.bf16.mxu0 0
      %675 = vmatpush2.bf16.msra.mxu0 0
      %676 = vmatprep.subr.bf16.mxu0 0
      %677 = vmatpush2.bf16.msra.mxu0 0
      %678 = vmatprep.subr.bf16.mxu0 0
      %679 = vmatpush2.bf16.msra.mxu0 0
      %680 = vmatprep.subr.bf16.mxu0 0
      %681 = vmatpush2.bf16.msra.mxu0 0
      %682 = vmatprep.subr.bf16.mxu0 0
      %683 = vmatpush2.bf16.msra.mxu0 0
      %684 = vmatprep.subr.bf16.mxu0 0
      %685 = vmatpush2.bf16.msra.mxu0 0
      %686 = vmatprep.subr.bf16.mxu0 0
      %687 = vmatpush2.bf16.msra.mxu0 0
      %688 = vmatprep.mubr.bf16.mxu0 0
      %689 = vmatmul.mubr.bf16.gmra.mxu0 %v587
      %v690 = vpop.f32.mrf.mxu0
      %v691 = vadd.f32 0.0, %v690
      %v692 = vpop.f32.mrf.mxu0
      %v693 = vpop.f32.mrf.mxu0
      %v694 = vadd.f32 0.0, %v693
      %v695 = vpop.f32.mrf.mxu0
      %696 = vmatprep.mubr.bf16.mxu0 0
      %697 = vmatmul.mubr.bf16.gmra.mxu0 %v588
      %v698 = vpop.f32.mrf.mxu0
      %v699 = vadd.f32 0.0, %v698
      %v700 = vpop.f32.mrf.mxu0
      %v701 = vpop.f32.mrf.mxu0
      %v702 = vadd.f32 0.0, %v701
      %v703 = vpop.f32.mrf.mxu0
      %704 = vmatprep.mubr.bf16.mxu0 0
      %705 = vmatmul.mubr.bf16.gmra.mxu0 %v589
      %v706 = vpop.f32.mrf.mxu0
      %v707 = vadd.f32 0.0, %v706
      %v708 = vpop.f32.mrf.mxu0
      %v709 = vpop.f32.mrf.mxu0
      %v710 = vadd.f32 0.0, %v709
      %v711 = vpop.f32.mrf.mxu0
      %712 = vmatprep.mubr.bf16.mxu0 0
      %713 = vmatmul.mubr.bf16.gmra.mxu0 %v590
      %v714 = vpop.f32.mrf.mxu0
      %v715 = vadd.f32 0.0, %v714
      %v716 = vpop.f32.mrf.mxu0
      %v717 = vpop.f32.mrf.mxu0
      %v718 = vadd.f32 0.0, %v717
      %v719 = vpop.f32.mrf.mxu0
      %720 = vdwg.mxu0
      %v721 = vadd.f32 %v570, %v691
      %v722 = vadd.f32 %v571, %v694
      %v723 = vadd.f32 %v572, %v699
      %v724 = vadd.f32 %v573, %v702
      %v725 = vadd.f32 %v574, %v707
      %v726 = vadd.f32 %v575, %v710
      %v727 = vadd.f32 %v576, %v715
      %v728 = vadd.f32 %v577, %v718
      %v729 = vld [vmem:[%s578 + $0x1] sm:$0xff]
      %v730 = vld [vmem:[%s578 + $0x11] sm:$0xff]
      %v731 = vld [vmem:[%s578 + $0x21] sm:$0xff]
      %v732 = vld [vmem:[%s578 + $0x31] sm:$0xff]
      %v733 = vld [vmem:[%s578 + $0x41] sm:$0xff]
      %v734 = vld [vmem:[%s578 + $0x51] sm:$0xff]
      %v735 = vld [vmem:[%s578 + $0x61] sm:$0xff]
      %v736 = vld [vmem:[%s578 + $0x71] sm:$0xff]
      %v737 = vpack.c.bf16 %v730, %v729
      %v738 = vpack.c.bf16 %v732, %v731
      %v739 = vpack.c.bf16 %v734, %v733
      %v740 = vpack.c.bf16 %v736, %v735
      %s741 = scalar_lea.vmem %s1, 256
      %v742 = vld [vmem:[%s741] sm:$0xf]
      %v743 = vld [vmem:[%s741 + $0x4] sm:$0xf]
      %v744 = vld [vmem:[%s741 + $0x8] sm:$0xf]
      %v745 = vld [vmem:[%s741 + $0xc] sm:$0xf]
      %v746 = vld [vmem:[%s741 + $0x10] sm:$0xf]
      %v747 = vld [vmem:[%s741 + $0x14] sm:$0xf]
      %v748 = vld [vmem:[%s741 + $0x18] sm:$0xf]
      %v749 = vld [vmem:[%s741 + $0x1c] sm:$0xf]
      %v750 = vld [vmem:[%s741 + $0x20] sm:$0xf]
      %v751 = vld [vmem:[%s741 + $0x24] sm:$0xf]
      %v752 = vld [vmem:[%s741 + $0x28] sm:$0xf]
      %v753 = vld [vmem:[%s741 + $0x2c] sm:$0xf]
      %v754 = vld [vmem:[%s741 + $0x30] sm:$0xf]
      %v755 = vld [vmem:[%s741 + $0x34] sm:$0xf]
      %v756 = vld [vmem:[%s741 + $0x38] sm:$0xf]
      %v757 = vld [vmem:[%s741 + $0x3c] sm:$0xf]
      %v774 = vunpack.c.l.b16 %v742
      %v775 = vunpack.c.l.b16 %v743
      %v776 = vunpack.c.l.b16 %v744
      %v777 = vunpack.c.l.b16 %v745
      %v778 = vunpack.c.l.b16 %v746
      %v779 = vunpack.c.l.b16 %v747
      %v780 = vunpack.c.l.b16 %v748
      %v781 = vunpack.c.l.b16 %v749
      %v782 = vunpack.c.l.b16 %v750
      %v783 = vunpack.c.l.b16 %v751
      %v784 = vunpack.c.l.b16 %v752
      %v785 = vunpack.c.l.b16 %v753
      %v786 = vunpack.c.l.b16 %v754
      %v787 = vunpack.c.l.b16 %v755
      %v788 = vunpack.c.l.b16 %v756
      %v789 = vunpack.c.l.b16 %v757
      %v790 = vpack.c.b16 %v775, %v774
      %v791 = vpack.c.b16 %v777, %v776
      %v792 = vpack.c.b16 %v779, %v778
      %v793 = vpack.c.b16 %v781, %v780
      %v794 = vpack.c.b16 %v783, %v782
      %v795 = vpack.c.b16 %v785, %v784
      %v796 = vpack.c.b16 %v787, %v786
      %v797 = vpack.c.b16 %v789, %v788
      %806 = vmatprep.subr.bf16.mxu0 0
      %807 = vmatpush1.bf16.msra.mxu0 %v797
      %808 = vmatprep.subr.bf16.mxu0 0
      %809 = vmatpush1.bf16.msra.mxu0 %v796
      %810 = vmatprep.subr.bf16.mxu0 0
      %811 = vmatpush1.bf16.msra.mxu0 %v795
      %812 = vmatprep.subr.bf16.mxu0 0
      %813 = vmatpush1.bf16.msra.mxu0 %v794
      %814 = vmatprep.subr.bf16.mxu0 0
      %815 = vmatpush1.bf16.msra.mxu0 %v793
      %816 = vmatprep.subr.bf16.mxu0 0
      %817 = vmatpush1.bf16.msra.mxu0 %v792
      %818 = vmatprep.subr.bf16.mxu0 0
      %819 = vmatpush1.bf16.msra.mxu0 %v791
      %820 = vmatprep.subr.bf16.mxu0 0
      %821 = vmatpush1.bf16.msra.mxu0 %v790
      %822 = vmatprep.subr.bf16.mxu0 0
      %823 = vmatpush2.bf16.msra.mxu0 0
      %824 = vmatprep.subr.bf16.mxu0 0
      %825 = vmatpush2.bf16.msra.mxu0 0
      %826 = vmatprep.subr.bf16.mxu0 0
      %827 = vmatpush2.bf16.msra.mxu0 0
      %828 = vmatprep.subr.bf16.mxu0 0
      %829 = vmatpush2.bf16.msra.mxu0 0
      %830 = vmatprep.subr.bf16.mxu0 0
      %831 = vmatpush2.bf16.msra.mxu0 0
      %832 = vmatprep.subr.bf16.mxu0 0
      %833 = vmatpush2.bf16.msra.mxu0 0
      %834 = vmatprep.subr.bf16.mxu0 0
      %835 = vmatpush2.bf16.msra.mxu0 0
      %836 = vmatprep.subr.bf16.mxu0 0
      %837 = vmatpush2.bf16.msra.mxu0 0
      %838 = vmatprep.mubr.bf16.mxu0 0
      %839 = vmatmul.mubr.bf16.gmra.mxu0 %v737
      %v840 = vpop.f32.mrf.mxu0
      %v841 = vadd.f32 0.0, %v840
      %v842 = vpop.f32.mrf.mxu0
      %v843 = vpop.f32.mrf.mxu0
      %v844 = vadd.f32 0.0, %v843
      %v845 = vpop.f32.mrf.mxu0
      %846 = vmatprep.mubr.bf16.mxu0 0
      %847 = vmatmul.mubr.bf16.gmra.mxu0 %v738
      %v848 = vpop.f32.mrf.mxu0
      %v849 = vadd.f32 0.0, %v848
      %v850 = vpop.f32.mrf.mxu0
      %v851 = vpop.f32.mrf.mxu0
      %v852 = vadd.f32 0.0, %v851
      %v853 = vpop.f32.mrf.mxu0
      %854 = vmatprep.mubr.bf16.mxu0 0
      %855 = vmatmul.mubr.bf16.gmra.mxu0 %v739
      %v856 = vpop.f32.mrf.mxu0
      %v857 = vadd.f32 0.0, %v856
      %v858 = vpop.f32.mrf.mxu0
      %v859 = vpop.f32.mrf.mxu0
      %v860 = vadd.f32 0.0, %v859
      %v861 = vpop.f32.mrf.mxu0
      %862 = vmatprep.mubr.bf16.mxu0 0
      %863 = vmatmul.mubr.bf16.gmra.mxu0 %v740
      %v864 = vpop.f32.mrf.mxu0
      %v865 = vadd.f32 0.0, %v864
      %v866 = vpop.f32.mrf.mxu0
      %v867 = vpop.f32.mrf.mxu0
      %v868 = vadd.f32 0.0, %v867
      %v869 = vpop.f32.mrf.mxu0
      %870 = vdwg.mxu0
      %v871 = vadd.f32 %v721, %v841
      %v872 = vadd.f32 %v722, %v844
      %v873 = vadd.f32 %v723, %v849
      %v874 = vadd.f32 %v724, %v852
      %v875 = vadd.f32 %v725, %v857
      %v876 = vadd.f32 %v726, %v860
      %v877 = vadd.f32 %v727, %v865
      %v878 = vadd.f32 %v728, %v868
      %v879 = vld [vmem:[%s578 + $0x2] sm:$0xff]
      %v880 = vld [vmem:[%s578 + $0x12] sm:$0xff]
      %v881 = vld [vmem:[%s578 + $0x22] sm:$0xff]
      %v882 = vld [vmem:[%s578 + $0x32] sm:$0xff]
      %v883 = vld [vmem:[%s578 + $0x42] sm:$0xff]
      %v884 = vld [vmem:[%s578 + $0x52] sm:$0xff]
      %v885 = vld [vmem:[%s578 + $0x62] sm:$0xff]
      %v886 = vld [vmem:[%s578 + $0x72] sm:$0xff]
      %v887 = vpack.c.bf16 %v880, %v879
      %v888 = vpack.c.bf16 %v882, %v881
      %v889 = vpack.c.bf16 %v884, %v883
      %v890 = vpack.c.bf16 %v886, %v885
      %s891 = scalar_lea.vmem %s1, 320
      %v892 = vld [vmem:[%s891] sm:$0xf]
      %v893 = vld [vmem:[%s891 + $0x4] sm:$0xf]
      %v894 = vld [vmem:[%s891 + $0x8] sm:$0xf]
      %v895 = vld [vmem:[%s891 + $0xc] sm:$0xf]
      %v896 = vld [vmem:[%s891 + $0x10] sm:$0xf]
      %v897 = vld [vmem:[%s891 + $0x14] sm:$0xf]
      %v898 = vld [vmem:[%s891 + $0x18] sm:$0xf]
      %v899 = vld [vmem:[%s891 + $0x1c] sm:$0xf]
      %v900 = vld [vmem:[%s891 + $0x20] sm:$0xf]
      %v901 = vld [vmem:[%s891 + $0x24] sm:$0xf]
      %v902 = vld [vmem:[%s891 + $0x28] sm:$0xf]
      %v903 = vld [vmem:[%s891 + $0x2c] sm:$0xf]
      %v904 = vld [vmem:[%s891 + $0x30] sm:$0xf]
      %v905 = vld [vmem:[%s891 + $0x34] sm:$0xf]
      %v906 = vld [vmem:[%s891 + $0x38] sm:$0xf]
      %v907 = vld [vmem:[%s891 + $0x3c] sm:$0xf]
      %v924 = vunpack.c.l.b16 %v892
      %v925 = vunpack.c.l.b16 %v893
      %v926 = vunpack.c.l.b16 %v894
      %v927 = vunpack.c.l.b16 %v895
      %v928 = vunpack.c.l.b16 %v896
      %v929 = vunpack.c.l.b16 %v897
      %v930 = vunpack.c.l.b16 %v898
      %v931 = vunpack.c.l.b16 %v899
      %v932 = vunpack.c.l.b16 %v900
      %v933 = vunpack.c.l.b16 %v901
      %v934 = vunpack.c.l.b16 %v902
      %v935 = vunpack.c.l.b16 %v903
      %v936 = vunpack.c.l.b16 %v904
      %v937 = vunpack.c.l.b16 %v905
      %v938 = vunpack.c.l.b16 %v906
      %v939 = vunpack.c.l.b16 %v907
      %v940 = vpack.c.b16 %v925, %v924
      %v941 = vpack.c.b16 %v927, %v926
      %v942 = vpack.c.b16 %v929, %v928
      %v943 = vpack.c.b16 %v931, %v930
      %v944 = vpack.c.b16 %v933, %v932
      %v945 = vpack.c.b16 %v935, %v934
      %v946 = vpack.c.b16 %v937, %v936
      %v947 = vpack.c.b16 %v939, %v938
      %956 = vmatprep.subr.bf16.mxu0 0
      %957 = vmatpush1.bf16.msra.mxu0 %v947
      %958 = vmatprep.subr.bf16.mxu0 0
      %959 = vmatpush1.bf16.msra.mxu0 %v946
      %960 = vmatprep.subr.bf16.mxu0 0
      %961 = vmatpush1.bf16.msra.mxu0 %v945
      %962 = vmatprep.subr.bf16.mxu0 0
      %963 = vmatpush1.bf16.msra.mxu0 %v944
      %964 = vmatprep.subr.bf16.mxu0 0
      %965 = vmatpush1.bf16.msra.mxu0 %v943
      %966 = vmatprep.subr.bf16.mxu0 0
      %967 = vmatpush1.bf16.msra.mxu0 %v942
      %968 = vmatprep.subr.bf16.mxu0 0
      %969 = vmatpush1.bf16.msra.mxu0 %v941
      %970 = vmatprep.subr.bf16.mxu0 0
      %971 = vmatpush1.bf16.msra.mxu0 %v940
      %972 = vmatprep.subr.bf16.mxu0 0
      %973 = vmatpush2.bf16.msra.mxu0 0
      %974 = vmatprep.subr.bf16.mxu0 0
      %975 = vmatpush2.bf16.msra.mxu0 0
      %976 = vmatprep.subr.bf16.mxu0 0
      %977 = vmatpush2.bf16.msra.mxu0 0
      %978 = vmatprep.subr.bf16.mxu0 0
      %979 = vmatpush2.bf16.msra.mxu0 0
      %980 = vmatprep.subr.bf16.mxu0 0
      %981 = vmatpush2.bf16.msra.mxu0 0
      %982 = vmatprep.subr.bf16.mxu0 0
      %983 = vmatpush2.bf16.msra.mxu0 0
      %984 = vmatprep.subr.bf16.mxu0 0
      %985 = vmatpush2.bf16.msra.mxu0 0
      %986 = vmatprep.subr.bf16.mxu0 0
      %987 = vmatpush2.bf16.msra.mxu0 0
      %988 = vmatprep.mubr.bf16.mxu0 0
      %989 = vmatmul.mubr.bf16.gmra.mxu0 %v887
      %v990 = vpop.f32.mrf.mxu0
      %v991 = vadd.f32 0.0, %v990
      %v992 = vpop.f32.mrf.mxu0
      %v993 = vpop.f32.mrf.mxu0
      %v994 = vadd.f32 0.0, %v993
      %v995 = vpop.f32.mrf.mxu0
      %996 = vmatprep.mubr.bf16.mxu0 0
      %997 = vmatmul.mubr.bf16.gmra.mxu0 %v888
      %v998 = vpop.f32.mrf.mxu0
      %v999 = vadd.f32 0.0, %v998
      %v1000 = vpop.f32.mrf.mxu0
      %v1001 = vpop.f32.mrf.mxu0
      %v1002 = vadd.f32 0.0, %v1001
      %v1003 = vpop.f32.mrf.mxu0
      %1004 = vmatprep.mubr.bf16.mxu0 0
      %1005 = vmatmul.mubr.bf16.gmra.mxu0 %v889
      %v1006 = vpop.f32.mrf.mxu0
      %v1007 = vadd.f32 0.0, %v1006
      %v1008 = vpop.f32.mrf.mxu0
      %v1009 = vpop.f32.mrf.mxu0
      %v1010 = vadd.f32 0.0, %v1009
      %v1011 = vpop.f32.mrf.mxu0
      %1012 = vmatprep.mubr.bf16.mxu0 0
      %1013 = vmatmul.mubr.bf16.gmra.mxu0 %v890
      %v1014 = vpop.f32.mrf.mxu0
      %v1015 = vadd.f32 0.0, %v1014
      %v1016 = vpop.f32.mrf.mxu0
      %v1017 = vpop.f32.mrf.mxu0
      %v1018 = vadd.f32 0.0, %v1017
      %v1019 = vpop.f32.mrf.mxu0
      %1020 = vdwg.mxu0
      %v1021 = vadd.f32 %v871, %v991
      %v1022 = vadd.f32 %v872, %v994
      %v1023 = vadd.f32 %v873, %v999
      %v1024 = vadd.f32 %v874, %v1002
      %v1025 = vadd.f32 %v875, %v1007
      %v1026 = vadd.f32 %v876, %v1010
      %v1027 = vadd.f32 %v877, %v1015
      %v1028 = vadd.f32 %v878, %v1018
      %s1029 = scalar_lea.vmem %s138, 32
      %v1030 = vld [vmem:[%s1029] sm:$0xff]
      %v1031 = vld [vmem:[%s1029 + $0x10] sm:$0xff]
      %v1032 = vld [vmem:[%s1029 + $0x20] sm:$0xff]
      %v1033 = vld [vmem:[%s1029 + $0x30] sm:$0xff]
      %v1034 = vld [vmem:[%s1029 + $0x40] sm:$0xff]
      %v1035 = vld [vmem:[%s1029 + $0x50] sm:$0xff]
      %v1036 = vld [vmem:[%s1029 + $0x60] sm:$0xff]
      %v1037 = vld [vmem:[%s1029 + $0x70] sm:$0xff]
      %v1038 = vpack.c.bf16 %v1031, %v1030
      %v1039 = vpack.c.bf16 %v1033, %v1032
      %v1040 = vpack.c.bf16 %v1035, %v1034
      %v1041 = vpack.c.bf16 %v1037, %v1036
      %s1042 = scalar_lea.vmem %s1, 384
      %v1043 = vld [vmem:[%s1042] sm:$0xf]
      %v1044 = vld [vmem:[%s1042 + $0x4] sm:$0xf]
      %v1045 = vld [vmem:[%s1042 + $0x8] sm:$0xf]
      %v1046 = vld [vmem:[%s1042 + $0xc] sm:$0xf]
      %v1047 = vld [vmem:[%s1042 + $0x10] sm:$0xf]
      %v1048 = vld [vmem:[%s1042 + $0x14] sm:$0xf]
      %v1049 = vld [vmem:[%s1042 + $0x18] sm:$0xf]
      %v1050 = vld [vmem:[%s1042 + $0x1c] sm:$0xf]
      %v1051 = vld [vmem:[%s1042 + $0x20] sm:$0xf]
      %v1052 = vld [vmem:[%s1042 + $0x24] sm:$0xf]
      %v1053 = vld [vmem:[%s1042 + $0x28] sm:$0xf]
      %v1054 = vld [vmem:[%s1042 + $0x2c] sm:$0xf]
      %v1055 = vld [vmem:[%s1042 + $0x30] sm:$0xf]
      %v1056 = vld [vmem:[%s1042 + $0x34] sm:$0xf]
      %v1057 = vld [vmem:[%s1042 + $0x38] sm:$0xf]
      %v1058 = vld [vmem:[%s1042 + $0x3c] sm:$0xf]
      %v1075 = vunpack.c.l.b16 %v1043
      %v1076 = vunpack.c.l.b16 %v1044
      %v1077 = vunpack.c.l.b16 %v1045
      %v1078 = vunpack.c.l.b16 %v1046
      %v1079 = vunpack.c.l.b16 %v1047
      %v1080 = vunpack.c.l.b16 %v1048
      %v1081 = vunpack.c.l.b16 %v1049
      %v1082 = vunpack.c.l.b16 %v1050
      %v1083 = vunpack.c.l.b16 %v1051
      %v1084 = vunpack.c.l.b16 %v1052
      %v1085 = vunpack.c.l.b16 %v1053
      %v1086 = vunpack.c.l.b16 %v1054
      %v1087 = vunpack.c.l.b16 %v1055
      %v1088 = vunpack.c.l.b16 %v1056
      %v1089 = vunpack.c.l.b16 %v1057
      %v1090 = vunpack.c.l.b16 %v1058
      %v1091 = vpack.c.b16 %v1076, %v1075
      %v1092 = vpack.c.b16 %v1078, %v1077
      %v1093 = vpack.c.b16 %v1080, %v1079
      %v1094 = vpack.c.b16 %v1082, %v1081
      %v1095 = vpack.c.b16 %v1084, %v1083
      %v1096 = vpack.c.b16 %v1086, %v1085
      %v1097 = vpack.c.b16 %v1088, %v1087
      %v1098 = vpack.c.b16 %v1090, %v1089
      %1107 = vmatprep.subr.bf16.mxu0 0
      %1108 = vmatpush1.bf16.msra.mxu0 %v1098
      %1109 = vmatprep.subr.bf16.mxu0 0
      %1110 = vmatpush1.bf16.msra.mxu0 %v1097
      %1111 = vmatprep.subr.bf16.mxu0 0
      %1112 = vmatpush1.bf16.msra.mxu0 %v1096
      %1113 = vmatprep.subr.bf16.mxu0 0
      %1114 = vmatpush1.bf16.msra.mxu0 %v1095
      %1115 = vmatprep.subr.bf16.mxu0 0
      %1116 = vmatpush1.bf16.msra.mxu0 %v1094
      %1117 = vmatprep.subr.bf16.mxu0 0
      %1118 = vmatpush1.bf16.msra.mxu0 %v1093
      %1119 = vmatprep.subr.bf16.mxu0 0
      %1120 = vmatpush1.bf16.msra.mxu0 %v1092
      %1121 = vmatprep.subr.bf16.mxu0 0
      %1122 = vmatpush1.bf16.msra.mxu0 %v1091
      %1123 = vmatprep.subr.bf16.mxu0 0
      %1124 = vmatpush2.bf16.msra.mxu0 0
      %1125 = vmatprep.subr.bf16.mxu0 0
      %1126 = vmatpush2.bf16.msra.mxu0 0
      %1127 = vmatprep.subr.bf16.mxu0 0
      %1128 = vmatpush2.bf16.msra.mxu0 0
      %1129 = vmatprep.subr.bf16.mxu0 0
      %1130 = vmatpush2.bf16.msra.mxu0 0
      %1131 = vmatprep.subr.bf16.mxu0 0
      %1132 = vmatpush2.bf16.msra.mxu0 0
      %1133 = vmatprep.subr.bf16.mxu0 0
      %1134 = vmatpush2.bf16.msra.mxu0 0
      %1135 = vmatprep.subr.bf16.mxu0 0
      %1136 = vmatpush2.bf16.msra.mxu0 0
      %1137 = vmatprep.subr.bf16.mxu0 0
      %1138 = vmatpush2.bf16.msra.mxu0 0
      %1139 = vmatprep.mubr.bf16.mxu0 0
      %1140 = vmatmul.mubr.bf16.gmra.mxu0 %v1038
      %v1141 = vpop.f32.mrf.mxu0
      %v1142 = vadd.f32 0.0, %v1141
      %v1143 = vpop.f32.mrf.mxu0
      %v1144 = vpop.f32.mrf.mxu0
      %v1145 = vadd.f32 0.0, %v1144
      %v1146 = vpop.f32.mrf.mxu0
      %1147 = vmatprep.mubr.bf16.mxu0 0
      %1148 = vmatmul.mubr.bf16.gmra.mxu0 %v1039
      %v1149 = vpop.f32.mrf.mxu0
      %v1150 = vadd.f32 0.0, %v1149
      %v1151 = vpop.f32.mrf.mxu0
      %v1152 = vpop.f32.mrf.mxu0
      %v1153 = vadd.f32 0.0, %v1152
      %v1154 = vpop.f32.mrf.mxu0
      %1155 = vmatprep.mubr.bf16.mxu0 0
      %1156 = vmatmul.mubr.bf16.gmra.mxu0 %v1040
      %v1157 = vpop.f32.mrf.mxu0
      %v1158 = vadd.f32 0.0, %v1157
      %v1159 = vpop.f32.mrf.mxu0
      %v1160 = vpop.f32.mrf.mxu0
      %v1161 = vadd.f32 0.0, %v1160
      %v1162 = vpop.f32.mrf.mxu0
      %1163 = vmatprep.mubr.bf16.mxu0 0
      %1164 = vmatmul.mubr.bf16.gmra.mxu0 %v1041
      %v1165 = vpop.f32.mrf.mxu0
      %v1166 = vadd.f32 0.0, %v1165
      %v1167 = vpop.f32.mrf.mxu0
      %v1168 = vpop.f32.mrf.mxu0
      %v1169 = vadd.f32 0.0, %v1168
      %v1170 = vpop.f32.mrf.mxu0
      %1171 = vdwg.mxu0
      %v1172 = vadd.f32 %v1021, %v1142
      %v1173 = vadd.f32 %v1022, %v1145
      %v1174 = vadd.f32 %v1023, %v1150
      %v1175 = vadd.f32 %v1024, %v1153
      %v1176 = vadd.f32 %v1025, %v1158
      %v1177 = vadd.f32 %v1026, %v1161
      %v1178 = vadd.f32 %v1027, %v1166
      %v1179 = vadd.f32 %v1028, %v1169
      %v1180 = vld [vmem:[%s1029 + $0x1] sm:$0xff]
      %v1181 = vld [vmem:[%s1029 + $0x11] sm:$0xff]
      %v1182 = vld [vmem:[%s1029 + $0x21] sm:$0xff]
      %v1183 = vld [vmem:[%s1029 + $0x31] sm:$0xff]
      %v1184 = vld [vmem:[%s1029 + $0x41] sm:$0xff]
      %v1185 = vld [vmem:[%s1029 + $0x51] sm:$0xff]
      %v1186 = vld [vmem:[%s1029 + $0x61] sm:$0xff]
      %v1187 = vld [vmem:[%s1029 + $0x71] sm:$0xff]
      %v1188 = vpack.c.bf16 %v1181, %v1180
      %v1189 = vpack.c.bf16 %v1183, %v1182
      %v1190 = vpack.c.bf16 %v1185, %v1184
      %v1191 = vpack.c.bf16 %v1187, %v1186
      %s1192 = scalar_lea.vmem %s1, 448
      %v1193 = vld [vmem:[%s1192] sm:$0xf]
      %v1194 = vld [vmem:[%s1192 + $0x4] sm:$0xf]
      %v1195 = vld [vmem:[%s1192 + $0x8] sm:$0xf]
      %v1196 = vld [vmem:[%s1192 + $0xc] sm:$0xf]
      %v1197 = vld [vmem:[%s1192 + $0x10] sm:$0xf]
      %v1198 = vld [vmem:[%s1192 + $0x14] sm:$0xf]
      %v1199 = vld [vmem:[%s1192 + $0x18] sm:$0xf]
      %v1200 = vld [vmem:[%s1192 + $0x1c] sm:$0xf]
      %v1201 = vld [vmem:[%s1192 + $0x20] sm:$0xf]
      %v1202 = vld [vmem:[%s1192 + $0x24] sm:$0xf]
      %v1203 = vld [vmem:[%s1192 + $0x28] sm:$0xf]
      %v1204 = vld [vmem:[%s1192 + $0x2c] sm:$0xf]
      %v1205 = vld [vmem:[%s1192 + $0x30] sm:$0xf]
      %v1206 = vld [vmem:[%s1192 + $0x34] sm:$0xf]
      %v1207 = vld [vmem:[%s1192 + $0x38] sm:$0xf]
      %v1208 = vld [vmem:[%s1192 + $0x3c] sm:$0xf]
      %v1225 = vunpack.c.l.b16 %v1193
      %v1226 = vunpack.c.l.b16 %v1194
      %v1227 = vunpack.c.l.b16 %v1195
      %v1228 = vunpack.c.l.b16 %v1196
      %v1229 = vunpack.c.l.b16 %v1197
      %v1230 = vunpack.c.l.b16 %v1198
      %v1231 = vunpack.c.l.b16 %v1199
      %v1232 = vunpack.c.l.b16 %v1200
      %v1233 = vunpack.c.l.b16 %v1201
      %v1234 = vunpack.c.l.b16 %v1202
      %v1235 = vunpack.c.l.b16 %v1203
      %v1236 = vunpack.c.l.b16 %v1204
      %v1237 = vunpack.c.l.b16 %v1205
      %v1238 = vunpack.c.l.b16 %v1206
      %v1239 = vunpack.c.l.b16 %v1207
      %v1240 = vunpack.c.l.b16 %v1208
      %v1241 = vpack.c.b16 %v1226, %v1225
      %v1242 = vpack.c.b16 %v1228, %v1227
      %v1243 = vpack.c.b16 %v1230, %v1229
      %v1244 = vpack.c.b16 %v1232, %v1231
      %v1245 = vpack.c.b16 %v1234, %v1233
      %v1246 = vpack.c.b16 %v1236, %v1235
      %v1247 = vpack.c.b16 %v1238, %v1237
      %v1248 = vpack.c.b16 %v1240, %v1239
      %1257 = vmatprep.subr.bf16.mxu0 0
      %1258 = vmatpush1.bf16.msra.mxu0 %v1248
      %1259 = vmatprep.subr.bf16.mxu0 0
      %1260 = vmatpush1.bf16.msra.mxu0 %v1247
      %1261 = vmatprep.subr.bf16.mxu0 0
      %1262 = vmatpush1.bf16.msra.mxu0 %v1246
      %1263 = vmatprep.subr.bf16.mxu0 0
      %1264 = vmatpush1.bf16.msra.mxu0 %v1245
      %1265 = vmatprep.subr.bf16.mxu0 0
      %1266 = vmatpush1.bf16.msra.mxu0 %v1244
      %1267 = vmatprep.subr.bf16.mxu0 0
      %1268 = vmatpush1.bf16.msra.mxu0 %v1243
      %1269 = vmatprep.subr.bf16.mxu0 0
      %1270 = vmatpush1.bf16.msra.mxu0 %v1242
      %1271 = vmatprep.subr.bf16.mxu0 0
      %1272 = vmatpush1.bf16.msra.mxu0 %v1241
      %1273 = vmatprep.subr.bf16.mxu0 0
      %1274 = vmatpush2.bf16.msra.mxu0 0
      %1275 = vmatprep.subr.bf16.mxu0 0
      %1276 = vmatpush2.bf16.msra.mxu0 0
      %1277 = vmatprep.subr.bf16.mxu0 0
      %1278 = vmatpush2.bf16.msra.mxu0 0
      %1279 = vmatprep.subr.bf16.mxu0 0
      %1280 = vmatpush2.bf16.msra.mxu0 0
      %1281 = vmatprep.subr.bf16.mxu0 0
      %1282 = vmatpush2.bf16.msra.mxu0 0
      %1283 = vmatprep.subr.bf16.mxu0 0
      %1284 = vmatpush2.bf16.msra.mxu0 0
      %1285 = vmatprep.subr.bf16.mxu0 0
      %1286 = vmatpush2.bf16.msra.mxu0 0
      %1287 = vmatprep.subr.bf16.mxu0 0
      %1288 = vmatpush2.bf16.msra.mxu0 0
      %1289 = vmatprep.mubr.bf16.mxu0 0
      %1290 = vmatmul.mubr.bf16.gmra.mxu0 %v1188
      %v1291 = vpop.f32.mrf.mxu0
      %v1292 = vadd.f32 0.0, %v1291
      %v1293 = vpop.f32.mrf.mxu0
      %v1294 = vpop.f32.mrf.mxu0
      %v1295 = vadd.f32 0.0, %v1294
      %v1296 = vpop.f32.mrf.mxu0
      %1297 = vmatprep.mubr.bf16.mxu0 0
      %1298 = vmatmul.mubr.bf16.gmra.mxu0 %v1189
      %v1299 = vpop.f32.mrf.mxu0
      %v1300 = vadd.f32 0.0, %v1299
      %v1301 = vpop.f32.mrf.mxu0
      %v1302 = vpop.f32.mrf.mxu0
      %v1303 = vadd.f32 0.0, %v1302
      %v1304 = vpop.f32.mrf.mxu0
      %1305 = vmatprep.mubr.bf16.mxu0 0
      %1306 = vmatmul.mubr.bf16.gmra.mxu0 %v1190
      %v1307 = vpop.f32.mrf.mxu0
      %v1308 = vadd.f32 0.0, %v1307
      %v1309 = vpop.f32.mrf.mxu0
      %v1310 = vpop.f32.mrf.mxu0
      %v1311 = vadd.f32 0.0, %v1310
      %v1312 = vpop.f32.mrf.mxu0
      %1313 = vmatprep.mubr.bf16.mxu0 0
      %1314 = vmatmul.mubr.bf16.gmra.mxu0 %v1191
      %v1315 = vpop.f32.mrf.mxu0
      %v1316 = vadd.f32 0.0, %v1315
      %v1317 = vpop.f32.mrf.mxu0
      %v1318 = vpop.f32.mrf.mxu0
      %v1319 = vadd.f32 0.0, %v1318
      %v1320 = vpop.f32.mrf.mxu0
      %1321 = vdwg.mxu0
      %v1322 = vadd.f32 %v1172, %v1292
      %v1323 = vadd.f32 %v1173, %v1295
      %v1324 = vadd.f32 %v1174, %v1300
      %v1325 = vadd.f32 %v1175, %v1303
      %v1326 = vadd.f32 %v1176, %v1308
      %v1327 = vadd.f32 %v1177, %v1311
      %v1328 = vadd.f32 %v1178, %v1316
      %v1329 = vadd.f32 %v1179, %v1319
      %v1330 = vld [vmem:[%s1029 + $0x2] sm:$0xff]
      %v1331 = vld [vmem:[%s1029 + $0x12] sm:$0xff]
      %v1332 = vld [vmem:[%s1029 + $0x22] sm:$0xff]
      %v1333 = vld [vmem:[%s1029 + $0x32] sm:$0xff]
      %v1334 = vld [vmem:[%s1029 + $0x42] sm:$0xff]
      %v1335 = vld [vmem:[%s1029 + $0x52] sm:$0xff]
      %v1336 = vld [vmem:[%s1029 + $0x62] sm:$0xff]
      %v1337 = vld [vmem:[%s1029 + $0x72] sm:$0xff]
      %v1338 = vpack.c.bf16 %v1331, %v1330
      %v1339 = vpack.c.bf16 %v1333, %v1332
      %v1340 = vpack.c.bf16 %v1335, %v1334
      %v1341 = vpack.c.bf16 %v1337, %v1336
      %s1342 = scalar_lea.vmem %s1, 512
      %v1343 = vld [vmem:[%s1342] sm:$0xf]
      %v1344 = vld [vmem:[%s1342 + $0x4] sm:$0xf]
      %v1345 = vld [vmem:[%s1342 + $0x8] sm:$0xf]
      %v1346 = vld [vmem:[%s1342 + $0xc] sm:$0xf]
      %v1347 = vld [vmem:[%s1342 + $0x10] sm:$0xf]
      %v1348 = vld [vmem:[%s1342 + $0x14] sm:$0xf]
      %v1349 = vld [vmem:[%s1342 + $0x18] sm:$0xf]
      %v1350 = vld [vmem:[%s1342 + $0x1c] sm:$0xf]
      %v1351 = vld [vmem:[%s1342 + $0x20] sm:$0xf]
      %v1352 = vld [vmem:[%s1342 + $0x24] sm:$0xf]
      %v1353 = vld [vmem:[%s1342 + $0x28] sm:$0xf]
      %v1354 = vld [vmem:[%s1342 + $0x2c] sm:$0xf]
      %v1355 = vld [vmem:[%s1342 + $0x30] sm:$0xf]
      %v1356 = vld [vmem:[%s1342 + $0x34] sm:$0xf]
      %v1357 = vld [vmem:[%s1342 + $0x38] sm:$0xf]
      %v1358 = vld [vmem:[%s1342 + $0x3c] sm:$0xf]
      %v1375 = vunpack.c.l.b16 %v1343
      %v1376 = vunpack.c.l.b16 %v1344
      %v1377 = vunpack.c.l.b16 %v1345
      %v1378 = vunpack.c.l.b16 %v1346
      %v1379 = vunpack.c.l.b16 %v1347
      %v1380 = vunpack.c.l.b16 %v1348
      %v1381 = vunpack.c.l.b16 %v1349
      %v1382 = vunpack.c.l.b16 %v1350
      %v1383 = vunpack.c.l.b16 %v1351
      %v1384 = vunpack.c.l.b16 %v1352
      %v1385 = vunpack.c.l.b16 %v1353
      %v1386 = vunpack.c.l.b16 %v1354
      %v1387 = vunpack.c.l.b16 %v1355
      %v1388 = vunpack.c.l.b16 %v1356
      %v1389 = vunpack.c.l.b16 %v1357
      %v1390 = vunpack.c.l.b16 %v1358
      %v1391 = vpack.c.b16 %v1376, %v1375
      %v1392 = vpack.c.b16 %v1378, %v1377
      %v1393 = vpack.c.b16 %v1380, %v1379
      %v1394 = vpack.c.b16 %v1382, %v1381
      %v1395 = vpack.c.b16 %v1384, %v1383
      %v1396 = vpack.c.b16 %v1386, %v1385
      %v1397 = vpack.c.b16 %v1388, %v1387
      %v1398 = vpack.c.b16 %v1390, %v1389
      %1407 = vmatprep.subr.bf16.mxu0 0
      %1408 = vmatpush1.bf16.msra.mxu0 %v1398
      %1409 = vmatprep.subr.bf16.mxu0 0
      %1410 = vmatpush1.bf16.msra.mxu0 %v1397
      %1411 = vmatprep.subr.bf16.mxu0 0
      %1412 = vmatpush1.bf16.msra.mxu0 %v1396
      %1413 = vmatprep.subr.bf16.mxu0 0
      %1414 = vmatpush1.bf16.msra.mxu0 %v1395
      %1415 = vmatprep.subr.bf16.mxu0 0
      %1416 = vmatpush1.bf16.msra.mxu0 %v1394
      %1417 = vmatprep.subr.bf16.mxu0 0
      %1418 = vmatpush1.bf16.msra.mxu0 %v1393
      %1419 = vmatprep.subr.bf16.mxu0 0
      %1420 = vmatpush1.bf16.msra.mxu0 %v1392
      %1421 = vmatprep.subr.bf16.mxu0 0
      %1422 = vmatpush1.bf16.msra.mxu0 %v1391
      %1423 = vmatprep.subr.bf16.mxu0 0
      %1424 = vmatpush2.bf16.msra.mxu0 0
      %1425 = vmatprep.subr.bf16.mxu0 0
      %1426 = vmatpush2.bf16.msra.mxu0 0
      %1427 = vmatprep.subr.bf16.mxu0 0
      %1428 = vmatpush2.bf16.msra.mxu0 0
      %1429 = vmatprep.subr.bf16.mxu0 0
      %1430 = vmatpush2.bf16.msra.mxu0 0
      %1431 = vmatprep.subr.bf16.mxu0 0
      %1432 = vmatpush2.bf16.msra.mxu0 0
      %1433 = vmatprep.subr.bf16.mxu0 0
      %1434 = vmatpush2.bf16.msra.mxu0 0
      %1435 = vmatprep.subr.bf16.mxu0 0
      %1436 = vmatpush2.bf16.msra.mxu0 0
      %1437 = vmatprep.subr.bf16.mxu0 0
      %1438 = vmatpush2.bf16.msra.mxu0 0
      %1439 = vmatprep.mubr.bf16.mxu0 0
      %1440 = vmatmul.mubr.bf16.gmra.mxu0 %v1338
      %v1441 = vpop.f32.mrf.mxu0
      %v1442 = vadd.f32 0.0, %v1441
      %v1443 = vpop.f32.mrf.mxu0
      %v1444 = vpop.f32.mrf.mxu0
      %v1445 = vadd.f32 0.0, %v1444
      %v1446 = vpop.f32.mrf.mxu0
      %1447 = vmatprep.mubr.bf16.mxu0 0
      %1448 = vmatmul.mubr.bf16.gmra.mxu0 %v1339
      %v1449 = vpop.f32.mrf.mxu0
      %v1450 = vadd.f32 0.0, %v1449
      %v1451 = vpop.f32.mrf.mxu0
      %v1452 = vpop.f32.mrf.mxu0
      %v1453 = vadd.f32 0.0, %v1452
      %v1454 = vpop.f32.mrf.mxu0
      %1455 = vmatprep.mubr.bf16.mxu0 0
      %1456 = vmatmul.mubr.bf16.gmra.mxu0 %v1340
      %v1457 = vpop.f32.mrf.mxu0
      %v1458 = vadd.f32 0.0, %v1457
      %v1459 = vpop.f32.mrf.mxu0
      %v1460 = vpop.f32.mrf.mxu0
      %v1461 = vadd.f32 0.0, %v1460
      %v1462 = vpop.f32.mrf.mxu0
      %1463 = vmatprep.mubr.bf16.mxu0 0
      %1464 = vmatmul.mubr.bf16.gmra.mxu0 %v1341
      %v1465 = vpop.f32.mrf.mxu0
      %v1466 = vadd.f32 0.0, %v1465
      %v1467 = vpop.f32.mrf.mxu0
      %v1468 = vpop.f32.mrf.mxu0
      %v1469 = vadd.f32 0.0, %v1468
      %v1470 = vpop.f32.mrf.mxu0
      %1471 = vdwg.mxu0
      %v1472 = vadd.f32 %v1322, %v1442
      %v1473 = vadd.f32 %v1323, %v1445
      %v1474 = vadd.f32 %v1324, %v1450
      %v1475 = vadd.f32 %v1325, %v1453
      %v1476 = vadd.f32 %v1326, %v1458
      %v1477 = vadd.f32 %v1327, %v1461
      %v1478 = vadd.f32 %v1328, %v1466
      %v1479 = vadd.f32 %v1329, %v1469
      %1480 = vst [vmem:[%s143] sm:$0xff] %v1472
      %1481 = vst [vmem:[%s143 + $0x8] sm:$0xff] %v1473
      %1482 = vst [vmem:[%s143 + $0x10] sm:$0xff] %v1474
      %1483 = vst [vmem:[%s143 + $0x18] sm:$0xff] %v1475
      %1484 = vst [vmem:[%s143 + $0x20] sm:$0xff] %v1476
      %1485 = vst [vmem:[%s143 + $0x28] sm:$0xff] %v1477
      %1486 = vst [vmem:[%s143 + $0x30] sm:$0xff] %v1478
      %1487 = vst [vmem:[%s143 + $0x38] sm:$0xff] %v1479
      %p1488 = scmp.lt.s32.totalorder %s13, 1
      %s1489 = scalar_select %p1488, %s13, 1
      %s1490 = smul.addr %s1489, 8
      %s1491 = smul.addr %s1490, 8
      %s1492 = scalar_lea.vmem %s2, %s1491
      // Predicated region
      $region29: #{simple_block_forward.12} parent=27 // pred_check
        %p1493 = pneg %p78
      $region30: #{simple_block_forward.12} parent=27 // pred_check_branch
        %1495 = sbr.rel (%p1493) target = $region32
      $region31: #{simple_block_forward.12} parent=27 // pred_region
        _
      $region32: #{simple_block_forward.12} parent=27 // pred_fallthru
        _
    $region28: #{simple_block_forward.12} parent=5 // pred_fallthru
      _
    %p1496 = scmp.le.s32.totalorder 2, %s8
    // Predicated region
    $region33: #{simple_block_forward.12} parent=5 // pred_check
      %p1497 = pneg %p1496
    $region34: #{simple_block_forward.12} parent=5 // pred_check_branch
      %1499 = sbr.rel (%p1497) target = $region36
    $region35: #{simple_block_forward.12} parent=5 // pred_region
      %s1500 = ssub.s32 %s8, 2
      // Predicated region
      $region37: #{simple_block_forward.12} parent=35 // pred_check
        %p1501 = pneg %p84
      $region38: #{simple_block_forward.12} parent=35 // pred_check_branch
        %1503 = sbr.rel (%p1501) target = $region40
      $region39: #{simple_block_forward.12} parent=35 // pred_region
        %p1504 = scmp.lt.s32.totalorder %s14, 1
        %s1505 = scalar_select %p1504, %s14, 1
        %s1506 = smul.addr %s1505, 8
        %s1507 = smul.addr %s1506, 8
        %s1508 = scalar_lea.vmem %s2, %s1507
      $region40: #{simple_block_forward.12} parent=35 // pred_fallthru
        _
    $region36: #{simple_block_forward.12} parent=5 // pred_fallthru
      _
  $region6: #{simple_block_forward.12} parent=0 // loop_footer
    %s12 = sadd.s32 1, %s8
  $region7: #{simple_block_forward.12} parent=0 // loop_footer_branch
    %7 = sbr.rel target = $region3
  $region8: #{simple_block_forward.12} parent=0 // loop_exit
    _

</llo_original>
